<compile_context>
chip_gen: v7x
topology: tpu7x:2x2x1
jax: 0.10.0
libtpu: 0.0.40
codegen_flags: <defaults>
</compile_context>

<pallas_src>
import math

import jax
import jax.numpy as jnp
from jax.experimental import pallas as pl
from jax.experimental.pallas import tpu as pltpu


# ----------------------------------------------------------------------------
# Model configuration (scaled-down ViT)
# ----------------------------------------------------------------------------
IMG = 32
PATCH = 8
C_IN = 3
D = 128                    # hidden dim (lane-dense)
HEADS = 4
DH = D // HEADS            # 32
MLP_DIM = 256              # lane-dense
DEPTH = 2
NUM_CLASSES = 18
NUM_CLASSES_PAD = 128      # head padded to full lane width
LN_EPS = 1e-6

NUM_PATCHES = (IMG // PATCH) ** 2        # 16
SEQ = NUM_PATCHES + 1                    # +cls = 17
SEQ_PAD = ((SEQ + 7) // 8) * 8           # 24 (sublane aligned)
PATCH_DIM = PATCH * PATCH * C_IN         # 192
PATCH_DIM_PAD = 256                      # lane-padded K for patch-embed matmul

VMEM_LIMIT_BYTES = 32 * 1024 * 1024      # plenty: whole working set < 1 MiB


# ----------------------------------------------------------------------------
# Fused ViT kernel (one image per grid step)
# ----------------------------------------------------------------------------
def _layernorm(x, g, b):
    mu = jnp.mean(x, axis=-1, keepdims=True)
    xc = x - mu
    var = jnp.mean(xc * xc, axis=-1, keepdims=True)
    return xc * jax.lax.rsqrt(var + LN_EPS) * g + b


def _vit_forward_kernel(patches_ref, patch_w_ref, tok_add_ref,
                        ln1_g_ref, ln1_b_ref, wqkv_ref, bqkv_ref,
                        wo_ref, bo_ref,
                        ln2_g_ref, ln2_b_ref, w1_ref, b1_ref, w2_ref, b2_ref,
                        lnf_g_ref, lnf_b_ref, head_w_ref, head_b_ref,
                        out_ref):
    """Entire (scaled-down) ViT forward for one image, fully resident in VMEM."""
    f32, bf16 = jnp.float32, jnp.bfloat16

    # Patch embedding; cls token / pos embed / patch bias are pre-folded into
    # the additive tok_add tensor (row 0 = cls, rows >= SEQ stay zero).
    x = jnp.dot(patches_ref[0], patch_w_ref[...],
                preferred_element_type=f32) + tok_add_ref[...]   # [SEQ_PAD, D]

    # Additive key mask hiding the padded token columns (cols >= SEQ).
    col = jax.lax.broadcasted_iota(jnp.int32, (SEQ_PAD, SEQ_PAD), 1)
    key_bias = jnp.where(col < SEQ, 0.0, -1e9).astype(f32)

    for d in range(DEPTH):
        # ---- MHSA: LN -> QKV -> per-head softmax(QK^T)V -> out-proj -> +res ----
        xn = _layernorm(x, ln1_g_ref[d], ln1_b_ref[d])
        qkv = jnp.dot(xn.astype(bf16), wqkv_ref[d],
                      preferred_element_type=f32) + bqkv_ref[d]  # [SEQ_PAD, 3D]
        q, k, v = qkv[:, :D], qkv[:, D:2 * D], qkv[:, 2 * D:]
        heads = []
        for h in range(HEADS):
            sl = slice(h * DH, (h + 1) * DH)
            # 1/sqrt(DH) scale is pre-folded into the Q columns of wqkv/bqkv.
            s = jax.lax.dot_general(
                q[:, sl].astype(bf16), k[:, sl].astype(bf16),
                (((1,), (1,)), ((), ())), preferred_element_type=f32)
            s = s + key_bias
            s = s - jnp.max(s, axis=-1, keepdims=True)
            p = jnp.exp(s)
            p = p / jnp.sum(p, axis=-1, keepdims=True)            # exact softmax
            heads.append(jnp.dot(p.astype(bf16), v[:, sl].astype(bf16),
                                 preferred_element_type=f32))
        attn = jnp.concatenate(heads, axis=-1)                    # [SEQ_PAD, D]
        x = x + jnp.dot(attn.astype(bf16), wo_ref[d],
                        preferred_element_type=f32) + bo_ref[d]

        # ---- MLP: LN -> fc1 -> GELU -> fc2 -> +res ----
        xn = _layernorm(x, ln2_g_ref[d], ln2_b_ref[d])
        h1 = jnp.dot(xn.astype(bf16), w1_ref[d],
                     preferred_element_type=f32) + b1_ref[d]
        # TODO(synk): timm ViT uses exact (erf) GELU; tanh approximation kept
        #             here for portable Mosaic lowering.
        h1 = jax.nn.gelu(h1, approximate=True)
        x = x + jnp.dot(h1.astype(bf16), w2_ref[d],
                        preferred_element_type=f32) + b2_ref[d]

    # Final LN + replaced classifier head.  Computed on the first 8 rows so the
    # store stays (8, 128)-tile aligned; only row 0 (cls token) is used outside.
    cls8 = _layernorm(x[0:8, :], lnf_g_ref[...], lnf_b_ref[...])
    logits = jnp.dot(cls8.astype(bf16), head_w_ref[...],
                     preferred_element_type=f32) + head_b_ref[...]
    out_ref[0] = logits.astype(out_ref.dtype)


def _bcast_spec(a):
    """Full-array BlockSpec with a constant index map (no per-step re-fetch)."""
    return pl.BlockSpec(a.shape, lambda b, _nd=a.ndim: (0,) * _nd)


# ----------------------------------------------------------------------------
# Forward pass (one pallas_call; only patchify/pad stays in XLA)
# ----------------------------------------------------------------------------
def forward(params, x_nchw):
    B = x_nchw.shape[0]
    g = IMG // PATCH

    # Non-overlapping patchify (pure reshape).  Row 0 is reserved for the cls
    # token; rows SEQ..SEQ_PAD-1 and cols PATCH_DIM..PATCH_DIM_PAD-1 are zero.
    xh = jnp.transpose(x_nchw, (0, 2, 3, 1))                       # NCHW -> NHWC
    patches = xh.reshape(B, g, PATCH, g, PATCH, C_IN)
    patches = patches.transpose(0, 1, 3, 2, 4, 5).reshape(B, NUM_PATCHES,
                                                          PATCH_DIM)
    patches = jnp.pad(
        patches, ((0, 0), (1, SEQ_PAD - SEQ), (0, PATCH_DIM_PAD - PATCH_DIM))
    ).astype(jnp.bfloat16)

    weight_args = [
        params["patch_w"], params["tok_add"],
        params["ln1_g"], params["ln1_b"], params["wqkv"], params["bqkv"],
        params["wo"], params["bo"],
        params["ln2_g"], params["ln2_b"], params["w1"], params["b1"],
        params["w2"], params["b2"],
        params["lnf_g"], params["lnf_b"], params["head_w"], params["head_b"],
    ]
    in_specs = [pl.BlockSpec((1, SEQ_PAD, PATCH_DIM_PAD), lambda b: (b, 0, 0))]
    in_specs += [_bcast_spec(a) for a in weight_args]

    out = pl.pallas_call(
        _vit_forward_kernel,
        out_shape=jax.ShapeDtypeStruct((B, 8, NUM_CLASSES_PAD), jnp.float32),
        grid_spec=pltpu.PrefetchScalarGridSpec(
            num_scalar_prefetch=0,
            grid=(B,),
            in_specs=in_specs,
            out_specs=pl.BlockSpec((1, 8, NUM_CLASSES_PAD), lambda b: (b, 0, 0)),
        ),
        compiler_params=pltpu.CompilerParams(
            dimension_semantics=("parallel",),        # B>=2 -> both v7x TCs busy
            vmem_limit_bytes=VMEM_LIMIT_BYTES),
    )(patches, *weight_args)

    return out[:, 0, :NUM_CLASSES]                                 # [B, 18]


# ----------------------------------------------------------------------------
# Parameters (deterministic init; kernel-ready layout)
# ----------------------------------------------------------------------------
def init_params(key):
    keys = iter(jax.random.split(key, 32))

    def nrm(shape, std=0.02):
        return jax.random.normal(next(keys), shape, jnp.float32) * std

    patch_w = nrm((PATCH_DIM, D))
    patch_b = jnp.zeros((D,), jnp.float32)
    cls = nrm((D,))
    pos = nrm((SEQ, D))

    # cls token / positional embedding / patch bias folded into one additive
    # [SEQ_PAD, D] tensor applied right after the patch-embed matmul.
    tok_add = jnp.zeros((SEQ_PAD, D), jnp.float32)
    tok_add = tok_add.at[0].set(cls + pos[0])
    tok_add = tok_add.at[1:SEQ].set(pos[1:] + patch_b[None, :])

    scale = 1.0 / math.sqrt(DH)
    blocks = {k: [] for k in ("ln1_g", "ln1_b", "wqkv", "bqkv", "wo", "bo",
                              "ln2_g", "ln2_b", "w1", "b1", "w2", "b2")}
    for _ in range(DEPTH):
        # 1/sqrt(DH) attention scale pre-folded into the Q columns (W and b).
        wqkv = nrm((D, 3 * D)).at[:, :D].multiply(scale)
        bqkv = jnp.zeros((1, 3 * D), jnp.float32).at[:, :D].multiply(scale)
        blocks["ln1_g"].append(jnp.ones((1, D), jnp.float32))
        blocks["ln1_b"].append(jnp.zeros((1, D), jnp.float32))
        blocks["wqkv"].append(wqkv.astype(jnp.bfloat16))
        blocks["bqkv"].append(bqkv)
        blocks["wo"].append(nrm((D, D)).astype(jnp.bfloat16))
        blocks["bo"].append(jnp.zeros((1, D), jnp.float32))
        blocks["ln2_g"].append(jnp.ones((1, D), jnp.float32))
        blocks["ln2_b"].append(jnp.zeros((1, D), jnp.float32))
        blocks["w1"].append(nrm((D, MLP_DIM)).astype(jnp.bfloat16))
        blocks["b1"].append(jnp.zeros((1, MLP_DIM), jnp.float32))
        blocks["w2"].append(nrm((MLP_DIM, D)).astype(jnp.bfloat16))
        blocks["b2"].append(jnp.zeros((1, D), jnp.float32))

    p = {k: jnp.stack(v, axis=0) for k, v in blocks.items()}

    p["patch_w"] = (jnp.zeros((PATCH_DIM_PAD, D), jnp.bfloat16)
                    .at[:PATCH_DIM].set(patch_w.astype(jnp.bfloat16)))
    p["tok_add"] = tok_add
    p["lnf_g"] = jnp.ones((1, D), jnp.float32)
    p["lnf_b"] = jnp.zeros((1, D), jnp.float32)

    # Replaced head (per the PyTorch module): xavier_uniform weight,
    # uniform(-1/sqrt(num_classes), +1/sqrt(num_classes)) bias; padded to 128
    # output lanes (zero columns, sliced off outside the kernel).
    limit = math.sqrt(6.0 / (D + NUM_CLASSES))
    w_head = jax.random.uniform(next(keys), (D, NUM_CLASSES), jnp.float32,
                                -limit, limit)
    stdv = 1.0 / math.sqrt(NUM_CLASSES)
    b_head = jax.random.uniform(next(keys), (NUM_CLASSES,), jnp.float32,
                                -stdv, stdv)
    p["head_w"] = (jnp.zeros((D, NUM_CLASSES_PAD), jnp.bfloat16)
                   .at[:, :NUM_CLASSES].set(w_head.astype(jnp.bfloat16)))
    p["head_b"] = (jnp.zeros((1, NUM_CLASSES_PAD), jnp.float32)
                   .at[0, :NUM_CLASSES].set(b_head))
    return p


if __name__ == "__main__":
    x = jax.random.normal(jax.random.PRNGKey(0), (2, C_IN, IMG, IMG),
                          jnp.float32)
    params = init_params(jax.random.PRNGKey(42))

    logits = jax.jit(forward)(params, x)
    jax.block_until_ready(logits)
    assert logits.shape == (2, NUM_CLASSES)
    assert bool(jnp.all(jnp.isfinite(logits)))
    print("KERNEL_OK")
</pallas_src>

<mosaic_0001>
module attributes {stable_mosaic.version = 11 : i64} {
  func.func @_vit_forward_kernel(%arg0: i32, %arg1: memref<1x24x256xbf16, #tpu.memory_space<vmem>>, %arg2: memref<256x128xbf16, #tpu.memory_space<vmem>>, %arg3: memref<24x128xf32, #tpu.memory_space<vmem>>, %arg4: memref<2x1x128xf32, #tpu.memory_space<vmem>>, %arg5: memref<2x1x128xf32, #tpu.memory_space<vmem>>, %arg6: memref<2x128x384xbf16, #tpu.memory_space<vmem>>, %arg7: memref<2x1x384xf32, #tpu.memory_space<vmem>>, %arg8: memref<2x128x128xbf16, #tpu.memory_space<vmem>>, %arg9: memref<2x1x128xf32, #tpu.memory_space<vmem>>, %arg10: memref<2x1x128xf32, #tpu.memory_space<vmem>>, %arg11: memref<2x1x128xf32, #tpu.memory_space<vmem>>, %arg12: memref<2x128x256xbf16, #tpu.memory_space<vmem>>, %arg13: memref<2x1x256xf32, #tpu.memory_space<vmem>>, %arg14: memref<2x256x128xbf16, #tpu.memory_space<vmem>>, %arg15: memref<2x1x128xf32, #tpu.memory_space<vmem>>, %arg16: memref<1x128xf32, #tpu.memory_space<vmem>>, %arg17: memref<1x128xf32, #tpu.memory_space<vmem>>, %arg18: memref<128x128xbf16, #tpu.memory_space<vmem>>, %arg19: memref<1x128xf32, #tpu.memory_space<vmem>>, %arg20: memref<1x8x128xf32, #tpu.memory_space<vmem>>) attributes {dimension_semantics = [#tpu.dimension_semantics<parallel>], iteration_bounds = array<i64: 2>, scalar_prefetch = 0 : i64, scratch_operands = 0 : i64, tpu.core_type = #tpu.core_type<tc>, window_params = [{transform_indices = @transform_0, window_bounds = array<i64: 1, 24, 256>}, {pipeline_mode = #tpu.pipeline_mode<synchronous>, transform_indices = @transform_1, window_bounds = array<i64: 256, 128>}, {pipeline_mode = #tpu.pipeline_mode<synchronous>, transform_indices = @transform_2, window_bounds = array<i64: 24, 128>}, {pipeline_mode = #tpu.pipeline_mode<synchronous>, transform_indices = @transform_3, window_bounds = array<i64: 2, 1, 128>}, {pipeline_mode = #tpu.pipeline_mode<synchronous>, transform_indices = @transform_4, window_bounds = array<i64: 2, 1, 128>}, {pipeline_mode = #tpu.pipeline_mode<synchronous>, transform_indices = @transform_5, window_bounds = array<i64: 2, 128, 384>}, {pipeline_mode = #tpu.pipeline_mode<synchronous>, transform_indices = @transform_6, window_bounds = array<i64: 2, 1, 384>}, {pipeline_mode = #tpu.pipeline_mode<synchronous>, transform_indices = @transform_7, window_bounds = array<i64: 2, 128, 128>}, {pipeline_mode = #tpu.pipeline_mode<synchronous>, transform_indices = @transform_8, window_bounds = array<i64: 2, 1, 128>}, {pipeline_mode = #tpu.pipeline_mode<synchronous>, transform_indices = @transform_9, window_bounds = array<i64: 2, 1, 128>}, {pipeline_mode = #tpu.pipeline_mode<synchronous>, transform_indices = @transform_10, window_bounds = array<i64: 2, 1, 128>}, {pipeline_mode = #tpu.pipeline_mode<synchronous>, transform_indices = @transform_11, window_bounds = array<i64: 2, 128, 256>}, {pipeline_mode = #tpu.pipeline_mode<synchronous>, transform_indices = @transform_12, window_bounds = array<i64: 2, 1, 256>}, {pipeline_mode = #tpu.pipeline_mode<synchronous>, transform_indices = @transform_13, window_bounds = array<i64: 2, 256, 128>}, {pipeline_mode = #tpu.pipeline_mode<synchronous>, transform_indices = @transform_14, window_bounds = array<i64: 2, 1, 128>}, {pipeline_mode = #tpu.pipeline_mode<synchronous>, transform_indices = @transform_15, window_bounds = array<i64: 1, 128>}, {pipeline_mode = #tpu.pipeline_mode<synchronous>, transform_indices = @transform_16, window_bounds = array<i64: 1, 128>}, {pipeline_mode = #tpu.pipeline_mode<synchronous>, transform_indices = @transform_17, window_bounds = array<i64: 128, 128>}, {pipeline_mode = #tpu.pipeline_mode<synchronous>, transform_indices = @transform_18, window_bounds = array<i64: 1, 128>}, {transform_indices = @transform_19, window_bounds = array<i64: 1, 8, 128>}]} {
    %c0 = arith.constant 0 : index
    %c0_0 = arith.constant 0 : index
    %c0_1 = arith.constant 0 : index
    %0 = vector.load %arg1[%c0, %c0_0, %c0_1] : memref<1x24x256xbf16, #tpu.memory_space<vmem>>, vector<1x24x256xbf16>
    %1 = vector.shape_cast %0 : vector<1x24x256xbf16> to vector<24x256xbf16>
    %c0_2 = arith.constant 0 : index
    %c0_3 = arith.constant 0 : index
    %2 = vector.load %arg2[%c0_2, %c0_3] : memref<256x128xbf16, #tpu.memory_space<vmem>>, vector<256x128xbf16>
    %cst = arith.constant dense<0.000000e+00> : vector<24x128xf32>
    %3 = tpu.matmul %1, %2, %cst {dimension_numbers = #tpu.dot_dimension_numbers<[1], [0], [0], [1], [0, 0, 1, 1], [], []>} : vector<24x256xbf16>, vector<256x128xbf16>, vector<24x128xf32> -> vector<24x128xf32>
    %c0_4 = arith.constant 0 : index
    %c0_5 = arith.constant 0 : index
    %4 = vector.load %arg3[%c0_4, %c0_5] : memref<24x128xf32, #tpu.memory_space<vmem>>, vector<24x128xf32>
    %5 = arith.addf %3, %4 : vector<24x128xf32>
    %6 = tpu.iota {dimensions = array<i32: 1>} : vector<24x24xi32>
    %c17_i32 = arith.constant 17 : i32
    %7 = vector.broadcast %c17_i32 : i32 to vector<24x24xi32>
    %8 = arith.cmpi slt, %6, %7 : vector<24x24xi32>
    %cst_6 = arith.constant 0.000000e+00 : f32
    %cst_7 = arith.constant -1.000000e+09 : f32
    %9 = vector.broadcast %cst_6 : f32 to vector<24x24xf32>
    %10 = vector.broadcast %cst_7 : f32 to vector<24x24xf32>
    %11 = arith.select %8, %9, %10 : vector<24x24xi1>, vector<24x24xf32>
    %c0_8 = arith.constant 0 : index
    %c0_9 = arith.constant 0 : index
    %c0_10 = arith.constant 0 : index
    %12 = vector.load %arg4[%c0_8, %c0_9, %c0_10] : memref<2x1x128xf32, #tpu.memory_space<vmem>>, vector<1x1x128xf32>
    %13 = vector.shape_cast %12 : vector<1x1x128xf32> to vector<1x128xf32>
    %c0_11 = arith.constant 0 : index
    %c0_12 = arith.constant 0 : index
    %c0_13 = arith.constant 0 : index
    %14 = vector.load %arg5[%c0_11, %c0_12, %c0_13] : memref<2x1x128xf32, #tpu.memory_space<vmem>>, vector<1x1x128xf32>
    %15 = vector.shape_cast %14 : vector<1x1x128xf32> to vector<1x128xf32>
    %cst_14 = arith.constant dense<0.000000e+00> : vector<24xf32>
    %16 = vector.multi_reduction <add>, %5, %cst_14 [1] : vector<24x128xf32> to vector<24xf32>
    %17 = vector.shape_cast %16 : vector<24xf32> to vector<24x1xf32>
    %cst_15 = arith.constant 1.280000e+02 : f32
    %18 = vector.broadcast %cst_15 : f32 to vector<24x1xf32>
    %19 = arith.divf %17, %18 : vector<24x1xf32>
    %20 = vector.broadcast %19 : vector<24x1xf32> to vector<24x128xf32>
    %21 = arith.subf %5, %20 : vector<24x128xf32>
    %22 = arith.mulf %21, %21 : vector<24x128xf32>
    %cst_16 = arith.constant dense<0.000000e+00> : vector<24xf32>
    %23 = vector.multi_reduction <add>, %22, %cst_16 [1] : vector<24x128xf32> to vector<24xf32>
    %24 = vector.shape_cast %23 : vector<24xf32> to vector<24x1xf32>
    %cst_17 = arith.constant 1.280000e+02 : f32
    %25 = vector.broadcast %cst_17 : f32 to vector<24x1xf32>
    %26 = arith.divf %24, %25 : vector<24x1xf32>
    %cst_18 = arith.constant 9.99999997E-7 : f32
    %27 = vector.broadcast %cst_18 : f32 to vector<24x1xf32>
    %28 = arith.addf %26, %27 : vector<24x1xf32>
    %29 = math.rsqrt %28 : vector<24x1xf32>
    %30 = vector.broadcast %29 : vector<24x1xf32> to vector<24x128xf32>
    %31 = arith.mulf %21, %30 : vector<24x128xf32>
    %32 = vector.broadcast %13 : vector<1x128xf32> to vector<24x128xf32>
    %33 = arith.mulf %31, %32 : vector<24x128xf32>
    %34 = vector.broadcast %15 : vector<1x128xf32> to vector<24x128xf32>
    %35 = arith.addf %33, %34 : vector<24x128xf32>
    %36 = arith.truncf %35 : vector<24x128xf32> to vector<24x128xbf16>
    %c0_19 = arith.constant 0 : index
    %c0_20 = arith.constant 0 : index
    %c0_21 = arith.constant 0 : index
    %37 = vector.load %arg6[%c0_19, %c0_20, %c0_21] : memref<2x128x384xbf16, #tpu.memory_space<vmem>>, vector<1x128x384xbf16>
    %38 = vector.shape_cast %37 : vector<1x128x384xbf16> to vector<128x384xbf16>
    %cst_22 = arith.constant dense<0.000000e+00> : vector<24x384xf32>
    %39 = tpu.matmul %36, %38, %cst_22 {dimension_numbers = #tpu.dot_dimension_numbers<[1], [0], [0], [1], [0, 0, 1, 1], [], []>} : vector<24x128xbf16>, vector<128x384xbf16>, vector<24x384xf32> -> vector<24x384xf32>
    %c0_23 = arith.constant 0 : index
    %c0_24 = arith.constant 0 : index
    %c0_25 = arith.constant 0 : index
    %40 = vector.load %arg7[%c0_23, %c0_24, %c0_25] : memref<2x1x384xf32, #tpu.memory_space<vmem>>, vector<1x1x384xf32>
    %41 = vector.shape_cast %40 : vector<1x1x384xf32> to vector<1x384xf32>
    %42 = vector.broadcast %41 : vector<1x384xf32> to vector<24x384xf32>
    %43 = arith.addf %39, %42 : vector<24x384xf32>
    %44 = vector.extract_strided_slice %43 {offsets = [0, 0], sizes = [24, 128], strides = [1, 1]} : vector<24x384xf32> to vector<24x128xf32>
    %45 = vector.extract_strided_slice %43 {offsets = [0, 128], sizes = [24, 128], strides = [1, 1]} : vector<24x384xf32> to vector<24x128xf32>
    %46 = vector.extract_strided_slice %43 {offsets = [0, 256], sizes = [24, 128], strides = [1, 1]} : vector<24x384xf32> to vector<24x128xf32>
    %47 = vector.extract_strided_slice %44 {offsets = [0, 0], sizes = [24, 32], strides = [1, 1]} : vector<24x128xf32> to vector<24x32xf32>
    %48 = arith.truncf %47 : vector<24x32xf32> to vector<24x32xbf16>
    %49 = vector.extract_strided_slice %45 {offsets = [0, 0], sizes = [24, 32], strides = [1, 1]} : vector<24x128xf32> to vector<24x32xf32>
    %50 = arith.truncf %49 : vector<24x32xf32> to vector<24x32xbf16>
    %cst_26 = arith.constant dense<0.000000e+00> : vector<24x24xf32>
    %51 = tpu.matmul %48, %50, %cst_26 {dimension_numbers = #tpu.dot_dimension_numbers<[1], [1], [0], [0], [0, 0, 1, 0], [], []>} : vector<24x32xbf16>, vector<24x32xbf16>, vector<24x24xf32> -> vector<24x24xf32>
    %52 = arith.addf %51, %11 : vector<24x24xf32>
    %cst_27 = arith.constant dense<0xFF800000> : vector<24xf32>
    %53 = vector.multi_reduction <maximumf>, %52, %cst_27 [1] : vector<24x24xf32> to vector<24xf32>
    %54 = vector.shape_cast %53 : vector<24xf32> to vector<24x1xf32>
    %55 = vector.broadcast %54 : vector<24x1xf32> to vector<24x24xf32>
    %56 = arith.subf %52, %55 : vector<24x24xf32>
    %57 = math.exp %56 : vector<24x24xf32>
    %cst_28 = arith.constant dense<0.000000e+00> : vector<24xf32>
    %58 = vector.multi_reduction <add>, %57, %cst_28 [1] : vector<24x24xf32> to vector<24xf32>
    %59 = vector.shape_cast %58 : vector<24xf32> to vector<24x1xf32>
    %60 = vector.broadcast %59 : vector<24x1xf32> to vector<24x24xf32>
    %61 = arith.divf %57, %60 : vector<24x24xf32>
    %62 = arith.truncf %61 : vector<24x24xf32> to vector<24x24xbf16>
    %63 = vector.extract_strided_slice %46 {offsets = [0, 0], sizes = [24, 32], strides = [1, 1]} : vector<24x128xf32> to vector<24x32xf32>
    %64 = arith.truncf %63 : vector<24x32xf32> to vector<24x32xbf16>
    %cst_29 = arith.constant dense<0.000000e+00> : vector<24x32xf32>
    %65 = tpu.matmul %62, %64, %cst_29 {dimension_numbers = #tpu.dot_dimension_numbers<[1], [0], [0], [1], [0, 0, 1, 1], [], []>} : vector<24x24xbf16>, vector<24x32xbf16>, vector<24x32xf32> -> vector<24x32xf32>
    %66 = vector.extract_strided_slice %44 {offsets = [0, 32], sizes = [24, 32], strides = [1, 1]} : vector<24x128xf32> to vector<24x32xf32>
    %67 = arith.truncf %66 : vector<24x32xf32> to vector<24x32xbf16>
    %68 = vector.extract_strided_slice %45 {offsets = [0, 32], sizes = [24, 32], strides = [1, 1]} : vector<24x128xf32> to vector<24x32xf32>
    %69 = arith.truncf %68 : vector<24x32xf32> to vector<24x32xbf16>
    %cst_30 = arith.constant dense<0.000000e+00> : vector<24x24xf32>
    %70 = tpu.matmul %67, %69, %cst_30 {dimension_numbers = #tpu.dot_dimension_numbers<[1], [1], [0], [0], [0, 0, 1, 0], [], []>} : vector<24x32xbf16>, vector<24x32xbf16>, vector<24x24xf32> -> vector<24x24xf32>
    %71 = arith.addf %70, %11 : vector<24x24xf32>
    %cst_31 = arith.constant dense<0xFF800000> : vector<24xf32>
    %72 = vector.multi_reduction <maximumf>, %71, %cst_31 [1] : vector<24x24xf32> to vector<24xf32>
    %73 = vector.shape_cast %72 : vector<24xf32> to vector<24x1xf32>
    %74 = vector.broadcast %73 : vector<24x1xf32> to vector<24x24xf32>
    %75 = arith.subf %71, %74 : vector<24x24xf32>
    %76 = math.exp %75 : vector<24x24xf32>
    %cst_32 = arith.constant dense<0.000000e+00> : vector<24xf32>
    %77 = vector.multi_reduction <add>, %76, %cst_32 [1] : vector<24x24xf32> to vector<24xf32>
    %78 = vector.shape_cast %77 : vector<24xf32> to vector<24x1xf32>
    %79 = vector.broadcast %78 : vector<24x1xf32> to vector<24x24xf32>
    %80 = arith.divf %76, %79 : vector<24x24xf32>
    %81 = arith.truncf %80 : vector<24x24xf32> to vector<24x24xbf16>
    %82 = vector.extract_strided_slice %46 {offsets = [0, 32], sizes = [24, 32], strides = [1, 1]} : vector<24x128xf32> to vector<24x32xf32>
    %83 = arith.truncf %82 : vector<24x32xf32> to vector<24x32xbf16>
    %cst_33 = arith.constant dense<0.000000e+00> : vector<24x32xf32>
    %84 = tpu.matmul %81, %83, %cst_33 {dimension_numbers = #tpu.dot_dimension_numbers<[1], [0], [0], [1], [0, 0, 1, 1], [], []>} : vector<24x24xbf16>, vector<24x32xbf16>, vector<24x32xf32> -> vector<24x32xf32>
    %85 = vector.extract_strided_slice %44 {offsets = [0, 64], sizes = [24, 32], strides = [1, 1]} : vector<24x128xf32> to vector<24x32xf32>
    %86 = arith.truncf %85 : vector<24x32xf32> to vector<24x32xbf16>
    %87 = vector.extract_strided_slice %45 {offsets = [0, 64], sizes = [24, 32], strides = [1, 1]} : vector<24x128xf32> to vector<24x32xf32>
    %88 = arith.truncf %87 : vector<24x32xf32> to vector<24x32xbf16>
    %cst_34 = arith.constant dense<0.000000e+00> : vector<24x24xf32>
    %89 = tpu.matmul %86, %88, %cst_34 {dimension_numbers = #tpu.dot_dimension_numbers<[1], [1], [0], [0], [0, 0, 1, 0], [], []>} : vector<24x32xbf16>, vector<24x32xbf16>, vector<24x24xf32> -> vector<24x24xf32>
    %90 = arith.addf %89, %11 : vector<24x24xf32>
    %cst_35 = arith.constant dense<0xFF800000> : vector<24xf32>
    %91 = vector.multi_reduction <maximumf>, %90, %cst_35 [1] : vector<24x24xf32> to vector<24xf32>
    %92 = vector.shape_cast %91 : vector<24xf32> to vector<24x1xf32>
    %93 = vector.broadcast %92 : vector<24x1xf32> to vector<24x24xf32>
    %94 = arith.subf %90, %93 : vector<24x24xf32>
    %95 = math.exp %94 : vector<24x24xf32>
    %cst_36 = arith.constant dense<0.000000e+00> : vector<24xf32>
    %96 = vector.multi_reduction <add>, %95, %cst_36 [1] : vector<24x24xf32> to vector<24xf32>
    %97 = vector.shape_cast %96 : vector<24xf32> to vector<24x1xf32>
    %98 = vector.broadcast %97 : vector<24x1xf32> to vector<24x24xf32>
    %99 = arith.divf %95, %98 : vector<24x24xf32>
    %100 = arith.truncf %99 : vector<24x24xf32> to vector<24x24xbf16>
    %101 = vector.extract_strided_slice %46 {offsets = [0, 64], sizes = [24, 32], strides = [1, 1]} : vector<24x128xf32> to vector<24x32xf32>
    %102 = arith.truncf %101 : vector<24x32xf32> to vector<24x32xbf16>
    %cst_37 = arith.constant dense<0.000000e+00> : vector<24x32xf32>
    %103 = tpu.matmul %100, %102, %cst_37 {dimension_numbers = #tpu.dot_dimension_numbers<[1], [0], [0], [1], [0, 0, 1, 1], [], []>} : vector<24x24xbf16>, vector<24x32xbf16>, vector<24x32xf32> -> vector<24x32xf32>
    %104 = vector.extract_strided_slice %44 {offsets = [0, 96], sizes = [24, 32], strides = [1, 1]} : vector<24x128xf32> to vector<24x32xf32>
    %105 = arith.truncf %104 : vector<24x32xf32> to vector<24x32xbf16>
    %106 = vector.extract_strided_slice %45 {offsets = [0, 96], sizes = [24, 32], strides = [1, 1]} : vector<24x128xf32> to vector<24x32xf32>
    %107 = arith.truncf %106 : vector<24x32xf32> to vector<24x32xbf16>
    %cst_38 = arith.constant dense<0.000000e+00> : vector<24x24xf32>
    %108 = tpu.matmul %105, %107, %cst_38 {dimension_numbers = #tpu.dot_dimension_numbers<[1], [1], [0], [0], [0, 0, 1, 0], [], []>} : vector<24x32xbf16>, vector<24x32xbf16>, vector<24x24xf32> -> vector<24x24xf32>
    %109 = arith.addf %108, %11 : vector<24x24xf32>
    %cst_39 = arith.constant dense<0xFF800000> : vector<24xf32>
    %110 = vector.multi_reduction <maximumf>, %109, %cst_39 [1] : vector<24x24xf32> to vector<24xf32>
    %111 = vector.shape_cast %110 : vector<24xf32> to vector<24x1xf32>
    %112 = vector.broadcast %111 : vector<24x1xf32> to vector<24x24xf32>
    %113 = arith.subf %109, %112 : vector<24x24xf32>
    %114 = math.exp %113 : vector<24x24xf32>
    %cst_40 = arith.constant dense<0.000000e+00> : vector<24xf32>
    %115 = vector.multi_reduction <add>, %114, %cst_40 [1] : vector<24x24xf32> to vector<24xf32>
    %116 = vector.shape_cast %115 : vector<24xf32> to vector<24x1xf32>
    %117 = vector.broadcast %116 : vector<24x1xf32> to vector<24x24xf32>
    %118 = arith.divf %114, %117 : vector<24x24xf32>
    %119 = arith.truncf %118 : vector<24x24xf32> to vector<24x24xbf16>
    %120 = vector.extract_strided_slice %46 {offsets = [0, 96], sizes = [24, 32], strides = [1, 1]} : vector<24x128xf32> to vector<24x32xf32>
    %121 = arith.truncf %120 : vector<24x32xf32> to vector<24x32xbf16>
    %cst_41 = arith.constant dense<0.000000e+00> : vector<24x32xf32>
    %122 = tpu.matmul %119, %121, %cst_41 {dimension_numbers = #tpu.dot_dimension_numbers<[1], [0], [0], [1], [0, 0, 1, 1], [], []>} : vector<24x24xbf16>, vector<24x32xbf16>, vector<24x32xf32> -> vector<24x32xf32>
    %123 = tpu.concatenate %65, %84, %103, %122 in 1 : vector<24x32xf32>, vector<24x32xf32>, vector<24x32xf32>, vector<24x32xf32> -> vector<24x128xf32>
    %124 = arith.truncf %123 : vector<24x128xf32> to vector<24x128xbf16>
    %c0_42 = arith.constant 0 : index
    %c0_43 = arith.constant 0 : index
    %c0_44 = arith.constant 0 : index
    %125 = vector.load %arg8[%c0_42, %c0_43, %c0_44] : memref<2x128x128xbf16, #tpu.memory_space<vmem>>, vector<1x128x128xbf16>
    %126 = vector.shape_cast %125 : vector<1x128x128xbf16> to vector<128x128xbf16>
    %cst_45 = arith.constant dense<0.000000e+00> : vector<24x128xf32>
    %127 = tpu.matmul %124, %126, %cst_45 {dimension_numbers = #tpu.dot_dimension_numbers<[1], [0], [0], [1], [0, 0, 1, 1], [], []>} : vector<24x128xbf16>, vector<128x128xbf16>, vector<24x128xf32> -> vector<24x128xf32>
    %128 = arith.addf %5, %127 : vector<24x128xf32>
    %c0_46 = arith.constant 0 : index
    %c0_47 = arith.constant 0 : index
    %c0_48 = arith.constant 0 : index
    %129 = vector.load %arg9[%c0_46, %c0_47, %c0_48] : memref<2x1x128xf32, #tpu.memory_space<vmem>>, vector<1x1x128xf32>
    %130 = vector.shape_cast %129 : vector<1x1x128xf32> to vector<1x128xf32>
    %131 = vector.broadcast %130 : vector<1x128xf32> to vector<24x128xf32>
    %132 = arith.addf %128, %131 : vector<24x128xf32>
    %c0_49 = arith.constant 0 : index
    %c0_50 = arith.constant 0 : index
    %c0_51 = arith.constant 0 : index
    %133 = vector.load %arg10[%c0_49, %c0_50, %c0_51] : memref<2x1x128xf32, #tpu.memory_space<vmem>>, vector<1x1x128xf32>
    %134 = vector.shape_cast %133 : vector<1x1x128xf32> to vector<1x128xf32>
    %c0_52 = arith.constant 0 : index
    %c0_53 = arith.constant 0 : index
    %c0_54 = arith.constant 0 : index
    %135 = vector.load %arg11[%c0_52, %c0_53, %c0_54] : memref<2x1x128xf32, #tpu.memory_space<vmem>>, vector<1x1x128xf32>
    %136 = vector.shape_cast %135 : vector<1x1x128xf32> to vector<1x128xf32>
    %cst_55 = arith.constant dense<0.000000e+00> : vector<24xf32>
    %137 = vector.multi_reduction <add>, %132, %cst_55 [1] : vector<24x128xf32> to vector<24xf32>
    %138 = vector.shape_cast %137 : vector<24xf32> to vector<24x1xf32>
    %cst_56 = arith.constant 1.280000e+02 : f32
    %139 = vector.broadcast %cst_56 : f32 to vector<24x1xf32>
    %140 = arith.divf %138, %139 : vector<24x1xf32>
    %141 = vector.broadcast %140 : vector<24x1xf32> to vector<24x128xf32>
    %142 = arith.subf %132, %141 : vector<24x128xf32>
    %143 = arith.mulf %142, %142 : vector<24x128xf32>
    %cst_57 = arith.constant dense<0.000000e+00> : vector<24xf32>
    %144 = vector.multi_reduction <add>, %143, %cst_57 [1] : vector<24x128xf32> to vector<24xf32>
    %145 = vector.shape_cast %144 : vector<24xf32> to vector<24x1xf32>
    %cst_58 = arith.constant 1.280000e+02 : f32
    %146 = vector.broadcast %cst_58 : f32 to vector<24x1xf32>
    %147 = arith.divf %145, %146 : vector<24x1xf32>
    %cst_59 = arith.constant 9.99999997E-7 : f32
    %148 = vector.broadcast %cst_59 : f32 to vector<24x1xf32>
    %149 = arith.addf %147, %148 : vector<24x1xf32>
    %150 = math.rsqrt %149 : vector<24x1xf32>
    %151 = vector.broadcast %150 : vector<24x1xf32> to vector<24x128xf32>
    %152 = arith.mulf %142, %151 : vector<24x128xf32>
    %153 = vector.broadcast %134 : vector<1x128xf32> to vector<24x128xf32>
    %154 = arith.mulf %152, %153 : vector<24x128xf32>
    %155 = vector.broadcast %136 : vector<1x128xf32> to vector<24x128xf32>
    %156 = arith.addf %154, %155 : vector<24x128xf32>
    %157 = arith.truncf %156 : vector<24x128xf32> to vector<24x128xbf16>
    %c0_60 = arith.constant 0 : index
    %c0_61 = arith.constant 0 : index
    %c0_62 = arith.constant 0 : index
    %158 = vector.load %arg12[%c0_60, %c0_61, %c0_62] : memref<2x128x256xbf16, #tpu.memory_space<vmem>>, vector<1x128x256xbf16>
    %159 = vector.shape_cast %158 : vector<1x128x256xbf16> to vector<128x256xbf16>
    %cst_63 = arith.constant dense<0.000000e+00> : vector<24x256xf32>
    %160 = tpu.matmul %157, %159, %cst_63 {dimension_numbers = #tpu.dot_dimension_numbers<[1], [0], [0], [1], [0, 0, 1, 1], [], []>} : vector<24x128xbf16>, vector<128x256xbf16>, vector<24x256xf32> -> vector<24x256xf32>
    %c0_64 = arith.constant 0 : index
    %c0_65 = arith.constant 0 : index
    %c0_66 = arith.constant 0 : index
    %161 = vector.load %arg13[%c0_64, %c0_65, %c0_66] : memref<2x1x256xf32, #tpu.memory_space<vmem>>, vector<1x1x256xf32>
    %162 = vector.shape_cast %161 : vector<1x1x256xf32> to vector<1x256xf32>
    %163 = vector.broadcast %162 : vector<1x256xf32> to vector<24x256xf32>
    %164 = arith.addf %160, %163 : vector<24x256xf32>
    %165 = arith.mulf %164, %164 : vector<24x256xf32>
    %166 = arith.mulf %164, %165 : vector<24x256xf32>
    %cst_67 = arith.constant 4.471500e-02 : f32
    %167 = vector.broadcast %cst_67 : f32 to vector<24x256xf32>
    %168 = arith.mulf %167, %166 : vector<24x256xf32>
    %169 = arith.addf %164, %168 : vector<24x256xf32>
    %cst_68 = arith.constant 0.797884583 : f32
    %170 = vector.broadcast %cst_68 : f32 to vector<24x256xf32>
    %171 = arith.mulf %170, %169 : vector<24x256xf32>
    %172 = math.tanh %171 : vector<24x256xf32>
    %cst_69 = arith.constant 1.000000e+00 : f32
    %173 = vector.broadcast %cst_69 : f32 to vector<24x256xf32>
    %174 = arith.addf %173, %172 : vector<24x256xf32>
    %cst_70 = arith.constant 5.000000e-01 : f32
    %175 = vector.broadcast %cst_70 : f32 to vector<24x256xf32>
    %176 = arith.mulf %175, %174 : vector<24x256xf32>
    %177 = arith.mulf %164, %176 : vector<24x256xf32>
    %178 = arith.truncf %177 : vector<24x256xf32> to vector<24x256xbf16>
    %c0_71 = arith.constant 0 : index
    %c0_72 = arith.constant 0 : index
    %c0_73 = arith.constant 0 : index
    %179 = vector.load %arg14[%c0_71, %c0_72, %c0_73] : memref<2x256x128xbf16, #tpu.memory_space<vmem>>, vector<1x256x128xbf16>
    %180 = vector.shape_cast %179 : vector<1x256x128xbf16> to vector<256x128xbf16>
    %cst_74 = arith.constant dense<0.000000e+00> : vector<24x128xf32>
    %181 = tpu.matmul %178, %180, %cst_74 {dimension_numbers = #tpu.dot_dimension_numbers<[1], [0], [0], [1], [0, 0, 1, 1], [], []>} : vector<24x256xbf16>, vector<256x128xbf16>, vector<24x128xf32> -> vector<24x128xf32>
    %182 = arith.addf %132, %181 : vector<24x128xf32>
    %c0_75 = arith.constant 0 : index
    %c0_76 = arith.constant 0 : index
    %c0_77 = arith.constant 0 : index
    %183 = vector.load %arg15[%c0_75, %c0_76, %c0_77] : memref<2x1x128xf32, #tpu.memory_space<vmem>>, vector<1x1x128xf32>
    %184 = vector.shape_cast %183 : vector<1x1x128xf32> to vector<1x128xf32>
    %185 = vector.broadcast %184 : vector<1x128xf32> to vector<24x128xf32>
    %186 = arith.addf %182, %185 : vector<24x128xf32>
    %c1 = arith.constant 1 : index
    %c0_78 = arith.constant 0 : index
    %c0_79 = arith.constant 0 : index
    %187 = vector.load %arg4[%c1, %c0_78, %c0_79] : memref<2x1x128xf32, #tpu.memory_space<vmem>>, vector<1x1x128xf32>
    %188 = vector.shape_cast %187 : vector<1x1x128xf32> to vector<1x128xf32>
    %c1_80 = arith.constant 1 : index
    %c0_81 = arith.constant 0 : index
    %c0_82 = arith.constant 0 : index
    %189 = vector.load %arg5[%c1_80, %c0_81, %c0_82] : memref<2x1x128xf32, #tpu.memory_space<vmem>>, vector<1x1x128xf32>
    %190 = vector.shape_cast %189 : vector<1x1x128xf32> to vector<1x128xf32>
    %cst_83 = arith.constant dense<0.000000e+00> : vector<24xf32>
    %191 = vector.multi_reduction <add>, %186, %cst_83 [1] : vector<24x128xf32> to vector<24xf32>
    %192 = vector.shape_cast %191 : vector<24xf32> to vector<24x1xf32>
    %cst_84 = arith.constant 1.280000e+02 : f32
    %193 = vector.broadcast %cst_84 : f32 to vector<24x1xf32>
    %194 = arith.divf %192, %193 : vector<24x1xf32>
    %195 = vector.broadcast %194 : vector<24x1xf32> to vector<24x128xf32>
    %196 = arith.subf %186, %195 : vector<24x128xf32>
    %197 = arith.mulf %196, %196 : vector<24x128xf32>
    %cst_85 = arith.constant dense<0.000000e+00> : vector<24xf32>
    %198 = vector.multi_reduction <add>, %197, %cst_85 [1] : vector<24x128xf32> to vector<24xf32>
    %199 = vector.shape_cast %198 : vector<24xf32> to vector<24x1xf32>
    %cst_86 = arith.constant 1.280000e+02 : f32
    %200 = vector.broadcast %cst_86 : f32 to vector<24x1xf32>
    %201 = arith.divf %199, %200 : vector<24x1xf32>
    %cst_87 = arith.constant 9.99999997E-7 : f32
    %202 = vector.broadcast %cst_87 : f32 to vector<24x1xf32>
    %203 = arith.addf %201, %202 : vector<24x1xf32>
    %204 = math.rsqrt %203 : vector<24x1xf32>
    %205 = vector.broadcast %204 : vector<24x1xf32> to vector<24x128xf32>
    %206 = arith.mulf %196, %205 : vector<24x128xf32>
    %207 = vector.broadcast %188 : vector<1x128xf32> to vector<24x128xf32>
    %208 = arith.mulf %206, %207 : vector<24x128xf32>
    %209 = vector.broadcast %190 : vector<1x128xf32> to vector<24x128xf32>
    %210 = arith.addf %208, %209 : vector<24x128xf32>
    %211 = arith.truncf %210 : vector<24x128xf32> to vector<24x128xbf16>
    %c1_88 = arith.constant 1 : index
    %c0_89 = arith.constant 0 : index
    %c0_90 = arith.constant 0 : index
    %212 = vector.load %arg6[%c1_88, %c0_89, %c0_90] : memref<2x128x384xbf16, #tpu.memory_space<vmem>>, vector<1x128x384xbf16>
    %213 = vector.shape_cast %212 : vector<1x128x384xbf16> to vector<128x384xbf16>
    %cst_91 = arith.constant dense<0.000000e+00> : vector<24x384xf32>
    %214 = tpu.matmul %211, %213, %cst_91 {dimension_numbers = #tpu.dot_dimension_numbers<[1], [0], [0], [1], [0, 0, 1, 1], [], []>} : vector<24x128xbf16>, vector<128x384xbf16>, vector<24x384xf32> -> vector<24x384xf32>
    %c1_92 = arith.constant 1 : index
    %c0_93 = arith.constant 0 : index
    %c0_94 = arith.constant 0 : index
    %215 = vector.load %arg7[%c1_92, %c0_93, %c0_94] : memref<2x1x384xf32, #tpu.memory_space<vmem>>, vector<1x1x384xf32>
    %216 = vector.shape_cast %215 : vector<1x1x384xf32> to vector<1x384xf32>
    %217 = vector.broadcast %216 : vector<1x384xf32> to vector<24x384xf32>
    %218 = arith.addf %214, %217 : vector<24x384xf32>
    %219 = vector.extract_strided_slice %218 {offsets = [0, 0], sizes = [24, 128], strides = [1, 1]} : vector<24x384xf32> to vector<24x128xf32>
    %220 = vector.extract_strided_slice %218 {offsets = [0, 128], sizes = [24, 128], strides = [1, 1]} : vector<24x384xf32> to vector<24x128xf32>
    %221 = vector.extract_strided_slice %218 {offsets = [0, 256], sizes = [24, 128], strides = [1, 1]} : vector<24x384xf32> to vector<24x128xf32>
    %222 = vector.extract_strided_slice %219 {offsets = [0, 0], sizes = [24, 32], strides = [1, 1]} : vector<24x128xf32> to vector<24x32xf32>
    %223 = arith.truncf %222 : vector<24x32xf32> to vector<24x32xbf16>
    %224 = vector.extract_strided_slice %220 {offsets = [0, 0], sizes = [24, 32], strides = [1, 1]} : vector<24x128xf32> to vector<24x32xf32>
    %225 = arith.truncf %224 : vector<24x32xf32> to vector<24x32xbf16>
    %cst_95 = arith.constant dense<0.000000e+00> : vector<24x24xf32>
    %226 = tpu.matmul %223, %225, %cst_95 {dimension_numbers = #tpu.dot_dimension_numbers<[1], [1], [0], [0], [0, 0, 1, 0], [], []>} : vector<24x32xbf16>, vector<24x32xbf16>, vector<24x24xf32> -> vector<24x24xf32>
    %227 = arith.addf %226, %11 : vector<24x24xf32>
    %cst_96 = arith.constant dense<0xFF800000> : vector<24xf32>
    %228 = vector.multi_reduction <maximumf>, %227, %cst_96 [1] : vector<24x24xf32> to vector<24xf32>
    %229 = vector.shape_cast %228 : vector<24xf32> to vector<24x1xf32>
    %230 = vector.broadcast %229 : vector<24x1xf32> to vector<24x24xf32>
    %231 = arith.subf %227, %230 : vector<24x24xf32>
    %232 = math.exp %231 : vector<24x24xf32>
    %cst_97 = arith.constant dense<0.000000e+00> : vector<24xf32>
    %233 = vector.multi_reduction <add>, %232, %cst_97 [1] : vector<24x24xf32> to vector<24xf32>
    %234 = vector.shape_cast %233 : vector<24xf32> to vector<24x1xf32>
    %235 = vector.broadcast %234 : vector<24x1xf32> to vector<24x24xf32>
    %236 = arith.divf %232, %235 : vector<24x24xf32>
    %237 = arith.truncf %236 : vector<24x24xf32> to vector<24x24xbf16>
    %238 = vector.extract_strided_slice %221 {offsets = [0, 0], sizes = [24, 32], strides = [1, 1]} : vector<24x128xf32> to vector<24x32xf32>
    %239 = arith.truncf %238 : vector<24x32xf32> to vector<24x32xbf16>
    %cst_98 = arith.constant dense<0.000000e+00> : vector<24x32xf32>
    %240 = tpu.matmul %237, %239, %cst_98 {dimension_numbers = #tpu.dot_dimension_numbers<[1], [0], [0], [1], [0, 0, 1, 1], [], []>} : vector<24x24xbf16>, vector<24x32xbf16>, vector<24x32xf32> -> vector<24x32xf32>
    %241 = vector.extract_strided_slice %219 {offsets = [0, 32], sizes = [24, 32], strides = [1, 1]} : vector<24x128xf32> to vector<24x32xf32>
    %242 = arith.truncf %241 : vector<24x32xf32> to vector<24x32xbf16>
    %243 = vector.extract_strided_slice %220 {offsets = [0, 32], sizes = [24, 32], strides = [1, 1]} : vector<24x128xf32> to vector<24x32xf32>
    %244 = arith.truncf %243 : vector<24x32xf32> to vector<24x32xbf16>
    %cst_99 = arith.constant dense<0.000000e+00> : vector<24x24xf32>
    %245 = tpu.matmul %242, %244, %cst_99 {dimension_numbers = #tpu.dot_dimension_numbers<[1], [1], [0], [0], [0, 0, 1, 0], [], []>} : vector<24x32xbf16>, vector<24x32xbf16>, vector<24x24xf32> -> vector<24x24xf32>
    %246 = arith.addf %245, %11 : vector<24x24xf32>
    %cst_100 = arith.constant dense<0xFF800000> : vector<24xf32>
    %247 = vector.multi_reduction <maximumf>, %246, %cst_100 [1] : vector<24x24xf32> to vector<24xf32>
    %248 = vector.shape_cast %247 : vector<24xf32> to vector<24x1xf32>
    %249 = vector.broadcast %248 : vector<24x1xf32> to vector<24x24xf32>
    %250 = arith.subf %246, %249 : vector<24x24xf32>
    %251 = math.exp %250 : vector<24x24xf32>
    %cst_101 = arith.constant dense<0.000000e+00> : vector<24xf32>
    %252 = vector.multi_reduction <add>, %251, %cst_101 [1] : vector<24x24xf32> to vector<24xf32>
    %253 = vector.shape_cast %252 : vector<24xf32> to vector<24x1xf32>
    %254 = vector.broadcast %253 : vector<24x1xf32> to vector<24x24xf32>
    %255 = arith.divf %251, %254 : vector<24x24xf32>
    %256 = arith.truncf %255 : vector<24x24xf32> to vector<24x24xbf16>
    %257 = vector.extract_strided_slice %221 {offsets = [0, 32], sizes = [24, 32], strides = [1, 1]} : vector<24x128xf32> to vector<24x32xf32>
    %258 = arith.truncf %257 : vector<24x32xf32> to vector<24x32xbf16>
    %cst_102 = arith.constant dense<0.000000e+00> : vector<24x32xf32>
    %259 = tpu.matmul %256, %258, %cst_102 {dimension_numbers = #tpu.dot_dimension_numbers<[1], [0], [0], [1], [0, 0, 1, 1], [], []>} : vector<24x24xbf16>, vector<24x32xbf16>, vector<24x32xf32> -> vector<24x32xf32>
    %260 = vector.extract_strided_slice %219 {offsets = [0, 64], sizes = [24, 32], strides = [1, 1]} : vector<24x128xf32> to vector<24x32xf32>
    %261 = arith.truncf %260 : vector<24x32xf32> to vector<24x32xbf16>
    %262 = vector.extract_strided_slice %220 {offsets = [0, 64], sizes = [24, 32], strides = [1, 1]} : vector<24x128xf32> to vector<24x32xf32>
    %263 = arith.truncf %262 : vector<24x32xf32> to vector<24x32xbf16>
    %cst_103 = arith.constant dense<0.000000e+00> : vector<24x24xf32>
    %264 = tpu.matmul %261, %263, %cst_103 {dimension_numbers = #tpu.dot_dimension_numbers<[1], [1], [0], [0], [0, 0, 1, 0], [], []>} : vector<24x32xbf16>, vector<24x32xbf16>, vector<24x24xf32> -> vector<24x24xf32>
    %265 = arith.addf %264, %11 : vector<24x24xf32>
    %cst_104 = arith.constant dense<0xFF800000> : vector<24xf32>
    %266 = vector.multi_reduction <maximumf>, %265, %cst_104 [1] : vector<24x24xf32> to vector<24xf32>
    %267 = vector.shape_cast %266 : vector<24xf32> to vector<24x1xf32>
    %268 = vector.broadcast %267 : vector<24x1xf32> to vector<24x24xf32>
    %269 = arith.subf %265, %268 : vector<24x24xf32>
    %270 = math.exp %269 : vector<24x24xf32>
    %cst_105 = arith.constant dense<0.000000e+00> : vector<24xf32>
    %271 = vector.multi_reduction <add>, %270, %cst_105 [1] : vector<24x24xf32> to vector<24xf32>
    %272 = vector.shape_cast %271 : vector<24xf32> to vector<24x1xf32>
    %273 = vector.broadcast %272 : vector<24x1xf32> to vector<24x24xf32>
    %274 = arith.divf %270, %273 : vector<24x24xf32>
    %275 = arith.truncf %274 : vector<24x24xf32> to vector<24x24xbf16>
    %276 = vector.extract_strided_slice %221 {offsets = [0, 64], sizes = [24, 32], strides = [1, 1]} : vector<24x128xf32> to vector<24x32xf32>
    %277 = arith.truncf %276 : vector<24x32xf32> to vector<24x32xbf16>
    %cst_106 = arith.constant dense<0.000000e+00> : vector<24x32xf32>
    %278 = tpu.matmul %275, %277, %cst_106 {dimension_numbers = #tpu.dot_dimension_numbers<[1], [0], [0], [1], [0, 0, 1, 1], [], []>} : vector<24x24xbf16>, vector<24x32xbf16>, vector<24x32xf32> -> vector<24x32xf32>
    %279 = vector.extract_strided_slice %219 {offsets = [0, 96], sizes = [24, 32], strides = [1, 1]} : vector<24x128xf32> to vector<24x32xf32>
    %280 = arith.truncf %279 : vector<24x32xf32> to vector<24x32xbf16>
    %281 = vector.extract_strided_slice %220 {offsets = [0, 96], sizes = [24, 32], strides = [1, 1]} : vector<24x128xf32> to vector<24x32xf32>
    %282 = arith.truncf %281 : vector<24x32xf32> to vector<24x32xbf16>
    %cst_107 = arith.constant dense<0.000000e+00> : vector<24x24xf32>
    %283 = tpu.matmul %280, %282, %cst_107 {dimension_numbers = #tpu.dot_dimension_numbers<[1], [1], [0], [0], [0, 0, 1, 0], [], []>} : vector<24x32xbf16>, vector<24x32xbf16>, vector<24x24xf32> -> vector<24x24xf32>
    %284 = arith.addf %283, %11 : vector<24x24xf32>
    %cst_108 = arith.constant dense<0xFF800000> : vector<24xf32>
    %285 = vector.multi_reduction <maximumf>, %284, %cst_108 [1] : vector<24x24xf32> to vector<24xf32>
    %286 = vector.shape_cast %285 : vector<24xf32> to vector<24x1xf32>
    %287 = vector.broadcast %286 : vector<24x1xf32> to vector<24x24xf32>
    %288 = arith.subf %284, %287 : vector<24x24xf32>
    %289 = math.exp %288 : vector<24x24xf32>
    %cst_109 = arith.constant dense<0.000000e+00> : vector<24xf32>
    %290 = vector.multi_reduction <add>, %289, %cst_109 [1] : vector<24x24xf32> to vector<24xf32>
    %291 = vector.shape_cast %290 : vector<24xf32> to vector<24x1xf32>
    %292 = vector.broadcast %291 : vector<24x1xf32> to vector<24x24xf32>
    %293 = arith.divf %289, %292 : vector<24x24xf32>
    %294 = arith.truncf %293 : vector<24x24xf32> to vector<24x24xbf16>
    %295 = vector.extract_strided_slice %221 {offsets = [0, 96], sizes = [24, 32], strides = [1, 1]} : vector<24x128xf32> to vector<24x32xf32>
    %296 = arith.truncf %295 : vector<24x32xf32> to vector<24x32xbf16>
    %cst_110 = arith.constant dense<0.000000e+00> : vector<24x32xf32>
    %297 = tpu.matmul %294, %296, %cst_110 {dimension_numbers = #tpu.dot_dimension_numbers<[1], [0], [0], [1], [0, 0, 1, 1], [], []>} : vector<24x24xbf16>, vector<24x32xbf16>, vector<24x32xf32> -> vector<24x32xf32>
    %298 = tpu.concatenate %240, %259, %278, %297 in 1 : vector<24x32xf32>, vector<24x32xf32>, vector<24x32xf32>, vector<24x32xf32> -> vector<24x128xf32>
    %299 = arith.truncf %298 : vector<24x128xf32> to vector<24x128xbf16>
    %c1_111 = arith.constant 1 : index
    %c0_112 = arith.constant 0 : index
    %c0_113 = arith.constant 0 : index
    %300 = vector.load %arg8[%c1_111, %c0_112, %c0_113] : memref<2x128x128xbf16, #tpu.memory_space<vmem>>, vector<1x128x128xbf16>
    %301 = vector.shape_cast %300 : vector<1x128x128xbf16> to vector<128x128xbf16>
    %cst_114 = arith.constant dense<0.000000e+00> : vector<24x128xf32>
    %302 = tpu.matmul %299, %301, %cst_114 {dimension_numbers = #tpu.dot_dimension_numbers<[1], [0], [0], [1], [0, 0, 1, 1], [], []>} : vector<24x128xbf16>, vector<128x128xbf16>, vector<24x128xf32> -> vector<24x128xf32>
    %303 = arith.addf %186, %302 : vector<24x128xf32>
    %c1_115 = arith.constant 1 : index
    %c0_116 = arith.constant 0 : index
    %c0_117 = arith.constant 0 : index
    %304 = vector.load %arg9[%c1_115, %c0_116, %c0_117] : memref<2x1x128xf32, #tpu.memory_space<vmem>>, vector<1x1x128xf32>
    %305 = vector.shape_cast %304 : vector<1x1x128xf32> to vector<1x128xf32>
    %306 = vector.broadcast %305 : vector<1x128xf32> to vector<24x128xf32>
    %307 = arith.addf %303, %306 : vector<24x128xf32>
    %c1_118 = arith.constant 1 : index
    %c0_119 = arith.constant 0 : index
    %c0_120 = arith.constant 0 : index
    %308 = vector.load %arg10[%c1_118, %c0_119, %c0_120] : memref<2x1x128xf32, #tpu.memory_space<vmem>>, vector<1x1x128xf32>
    %309 = vector.shape_cast %308 : vector<1x1x128xf32> to vector<1x128xf32>
    %c1_121 = arith.constant 1 : index
    %c0_122 = arith.constant 0 : index
    %c0_123 = arith.constant 0 : index
    %310 = vector.load %arg11[%c1_121, %c0_122, %c0_123] : memref<2x1x128xf32, #tpu.memory_space<vmem>>, vector<1x1x128xf32>
    %311 = vector.shape_cast %310 : vector<1x1x128xf32> to vector<1x128xf32>
    %cst_124 = arith.constant dense<0.000000e+00> : vector<24xf32>
    %312 = vector.multi_reduction <add>, %307, %cst_124 [1] : vector<24x128xf32> to vector<24xf32>
    %313 = vector.shape_cast %312 : vector<24xf32> to vector<24x1xf32>
    %cst_125 = arith.constant 1.280000e+02 : f32
    %314 = vector.broadcast %cst_125 : f32 to vector<24x1xf32>
    %315 = arith.divf %313, %314 : vector<24x1xf32>
    %316 = vector.broadcast %315 : vector<24x1xf32> to vector<24x128xf32>
    %317 = arith.subf %307, %316 : vector<24x128xf32>
    %318 = arith.mulf %317, %317 : vector<24x128xf32>
    %cst_126 = arith.constant dense<0.000000e+00> : vector<24xf32>
    %319 = vector.multi_reduction <add>, %318, %cst_126 [1] : vector<24x128xf32> to vector<24xf32>
    %320 = vector.shape_cast %319 : vector<24xf32> to vector<24x1xf32>
    %cst_127 = arith.constant 1.280000e+02 : f32
    %321 = vector.broadcast %cst_127 : f32 to vector<24x1xf32>
    %322 = arith.divf %320, %321 : vector<24x1xf32>
    %cst_128 = arith.constant 9.99999997E-7 : f32
    %323 = vector.broadcast %cst_128 : f32 to vector<24x1xf32>
    %324 = arith.addf %322, %323 : vector<24x1xf32>
    %325 = math.rsqrt %324 : vector<24x1xf32>
    %326 = vector.broadcast %325 : vector<24x1xf32> to vector<24x128xf32>
    %327 = arith.mulf %317, %326 : vector<24x128xf32>
    %328 = vector.broadcast %309 : vector<1x128xf32> to vector<24x128xf32>
    %329 = arith.mulf %327, %328 : vector<24x128xf32>
    %330 = vector.broadcast %311 : vector<1x128xf32> to vector<24x128xf32>
    %331 = arith.addf %329, %330 : vector<24x128xf32>
    %332 = arith.truncf %331 : vector<24x128xf32> to vector<24x128xbf16>
    %c1_129 = arith.constant 1 : index
    %c0_130 = arith.constant 0 : index
    %c0_131 = arith.constant 0 : index
    %333 = vector.load %arg12[%c1_129, %c0_130, %c0_131] : memref<2x128x256xbf16, #tpu.memory_space<vmem>>, vector<1x128x256xbf16>
    %334 = vector.shape_cast %333 : vector<1x128x256xbf16> to vector<128x256xbf16>
    %cst_132 = arith.constant dense<0.000000e+00> : vector<24x256xf32>
    %335 = tpu.matmul %332, %334, %cst_132 {dimension_numbers = #tpu.dot_dimension_numbers<[1], [0], [0], [1], [0, 0, 1, 1], [], []>} : vector<24x128xbf16>, vector<128x256xbf16>, vector<24x256xf32> -> vector<24x256xf32>
    %c1_133 = arith.constant 1 : index
    %c0_134 = arith.constant 0 : index
    %c0_135 = arith.constant 0 : index
    %336 = vector.load %arg13[%c1_133, %c0_134, %c0_135] : memref<2x1x256xf32, #tpu.memory_space<vmem>>, vector<1x1x256xf32>
    %337 = vector.shape_cast %336 : vector<1x1x256xf32> to vector<1x256xf32>
    %338 = vector.broadcast %337 : vector<1x256xf32> to vector<24x256xf32>
    %339 = arith.addf %335, %338 : vector<24x256xf32>
    %340 = arith.mulf %339, %339 : vector<24x256xf32>
    %341 = arith.mulf %339, %340 : vector<24x256xf32>
    %cst_136 = arith.constant 4.471500e-02 : f32
    %342 = vector.broadcast %cst_136 : f32 to vector<24x256xf32>
    %343 = arith.mulf %342, %341 : vector<24x256xf32>
    %344 = arith.addf %339, %343 : vector<24x256xf32>
    %cst_137 = arith.constant 0.797884583 : f32
    %345 = vector.broadcast %cst_137 : f32 to vector<24x256xf32>
    %346 = arith.mulf %345, %344 : vector<24x256xf32>
    %347 = math.tanh %346 : vector<24x256xf32>
    %cst_138 = arith.constant 1.000000e+00 : f32
    %348 = vector.broadcast %cst_138 : f32 to vector<24x256xf32>
    %349 = arith.addf %348, %347 : vector<24x256xf32>
    %cst_139 = arith.constant 5.000000e-01 : f32
    %350 = vector.broadcast %cst_139 : f32 to vector<24x256xf32>
    %351 = arith.mulf %350, %349 : vector<24x256xf32>
    %352 = arith.mulf %339, %351 : vector<24x256xf32>
    %353 = arith.truncf %352 : vector<24x256xf32> to vector<24x256xbf16>
    %c1_140 = arith.constant 1 : index
    %c0_141 = arith.constant 0 : index
    %c0_142 = arith.constant 0 : index
    %354 = vector.load %arg14[%c1_140, %c0_141, %c0_142] : memref<2x256x128xbf16, #tpu.memory_space<vmem>>, vector<1x256x128xbf16>
    %355 = vector.shape_cast %354 : vector<1x256x128xbf16> to vector<256x128xbf16>
    %cst_143 = arith.constant dense<0.000000e+00> : vector<24x128xf32>
    %356 = tpu.matmul %353, %355, %cst_143 {dimension_numbers = #tpu.dot_dimension_numbers<[1], [0], [0], [1], [0, 0, 1, 1], [], []>} : vector<24x256xbf16>, vector<256x128xbf16>, vector<24x128xf32> -> vector<24x128xf32>
    %357 = arith.addf %307, %356 : vector<24x128xf32>
    %c1_144 = arith.constant 1 : index
    %c0_145 = arith.constant 0 : index
    %c0_146 = arith.constant 0 : index
    %358 = vector.load %arg15[%c1_144, %c0_145, %c0_146] : memref<2x1x128xf32, #tpu.memory_space<vmem>>, vector<1x1x128xf32>
    %359 = vector.shape_cast %358 : vector<1x1x128xf32> to vector<1x128xf32>
    %360 = vector.broadcast %359 : vector<1x128xf32> to vector<24x128xf32>
    %361 = arith.addf %357, %360 : vector<24x128xf32>
    %362 = vector.extract_strided_slice %361 {offsets = [0, 0], sizes = [8, 128], strides = [1, 1]} : vector<24x128xf32> to vector<8x128xf32>
    %c0_147 = arith.constant 0 : index
    %c0_148 = arith.constant 0 : index
    %363 = vector.load %arg16[%c0_147, %c0_148] : memref<1x128xf32, #tpu.memory_space<vmem>>, vector<1x128xf32>
    %c0_149 = arith.constant 0 : index
    %c0_150 = arith.constant 0 : index
    %364 = vector.load %arg17[%c0_149, %c0_150] : memref<1x128xf32, #tpu.memory_space<vmem>>, vector<1x128xf32>
    %cst_151 = arith.constant dense<0.000000e+00> : vector<8xf32>
    %365 = vector.multi_reduction <add>, %362, %cst_151 [1] : vector<8x128xf32> to vector<8xf32>
    %366 = vector.shape_cast %365 : vector<8xf32> to vector<8x1xf32>
    %cst_152 = arith.constant 1.280000e+02 : f32
    %367 = vector.broadcast %cst_152 : f32 to vector<8x1xf32>
    %368 = arith.divf %366, %367 : vector<8x1xf32>
    %369 = vector.broadcast %368 : vector<8x1xf32> to vector<8x128xf32>
    %370 = arith.subf %362, %369 : vector<8x128xf32>
    %371 = arith.mulf %370, %370 : vector<8x128xf32>
    %cst_153 = arith.constant dense<0.000000e+00> : vector<8xf32>
    %372 = vector.multi_reduction <add>, %371, %cst_153 [1] : vector<8x128xf32> to vector<8xf32>
    %373 = vector.shape_cast %372 : vector<8xf32> to vector<8x1xf32>
    %cst_154 = arith.constant 1.280000e+02 : f32
    %374 = vector.broadcast %cst_154 : f32 to vector<8x1xf32>
    %375 = arith.divf %373, %374 : vector<8x1xf32>
    %cst_155 = arith.constant 9.99999997E-7 : f32
    %376 = vector.broadcast %cst_155 : f32 to vector<8x1xf32>
    %377 = arith.addf %375, %376 : vector<8x1xf32>
    %378 = math.rsqrt %377 : vector<8x1xf32>
    %379 = vector.broadcast %378 : vector<8x1xf32> to vector<8x128xf32>
    %380 = arith.mulf %370, %379 : vector<8x128xf32>
    %381 = vector.broadcast %363 : vector<1x128xf32> to vector<8x128xf32>
    %382 = arith.mulf %380, %381 : vector<8x128xf32>
    %383 = vector.broadcast %364 : vector<1x128xf32> to vector<8x128xf32>
    %384 = arith.addf %382, %383 : vector<8x128xf32>
    %385 = arith.truncf %384 : vector<8x128xf32> to vector<8x128xbf16>
    %c0_156 = arith.constant 0 : index
    %c0_157 = arith.constant 0 : index
    %386 = vector.load %arg18[%c0_156, %c0_157] : memref<128x128xbf16, #tpu.memory_space<vmem>>, vector<128x128xbf16>
    %cst_158 = arith.constant dense<0.000000e+00> : vector<8x128xf32>
    %387 = tpu.matmul %385, %386, %cst_158 {dimension_numbers = #tpu.dot_dimension_numbers<[1], [0], [0], [1], [0, 0, 1, 1], [], []>} : vector<8x128xbf16>, vector<128x128xbf16>, vector<8x128xf32> -> vector<8x128xf32>
    %c0_159 = arith.constant 0 : index
    %c0_160 = arith.constant 0 : index
    %388 = vector.load %arg19[%c0_159, %c0_160] : memref<1x128xf32, #tpu.memory_space<vmem>>, vector<1x128xf32>
    %389 = vector.broadcast %388 : vector<1x128xf32> to vector<8x128xf32>
    %390 = arith.addf %387, %389 : vector<8x128xf32>
    %c0_161 = arith.constant 0 : index
    %c0_162 = arith.constant 0 : index
    %c0_163 = arith.constant 0 : index
    %391 = vector.load %arg20[%c0_161, %c0_162, %c0_163] : memref<1x8x128xf32, #tpu.memory_space<vmem>>, vector<1x8x128xf32>
    %392 = vector.shape_cast %391 : vector<1x8x128xf32> to vector<8x128xf32>
    %393 = vector.shape_cast %390 : vector<8x128xf32> to vector<1x8x128xf32>
    tpu.vector_store %arg20[%c0_161, %c0_162, %c0_163], %393 {strides = array<i32>} : memref<1x8x128xf32, #tpu.memory_space<vmem>>, vector<1x8x128xf32>,
    return
  }
  func.func @transform_0(%arg0: i32) -> (i32, i32, i32) {
    %c0_i32 = arith.constant 0 : i32
    %c0_i32_0 = arith.constant 0 : i32
    %c0_i32_1 = arith.constant 0 : i32
    return %arg0, %c0_i32, %c0_i32_0 : i32, i32, i32
  }
  func.func @transform_1(%arg0: i32) -> (i32, i32) {
    %c0_i32 = arith.constant 0 : i32
    %c0_i32_0 = arith.constant 0 : i32
    %c0_i32_1 = arith.constant 0 : i32
    return %c0_i32, %c0_i32_0 : i32, i32
  }
  func.func @transform_2(%arg0: i32) -> (i32, i32) {
    %c0_i32 = arith.constant 0 : i32
    %c0_i32_0 = arith.constant 0 : i32
    %c0_i32_1 = arith.constant 0 : i32
    return %c0_i32, %c0_i32_0 : i32, i32
  }
  func.func @transform_3(%arg0: i32) -> (i32, i32, i32) {
    %c0_i32 = arith.constant 0 : i32
    %c0_i32_0 = arith.constant 0 : i32
    %c0_i32_1 = arith.constant 0 : i32
    %c0_i32_2 = arith.constant 0 : i32
    return %c0_i32, %c0_i32_0, %c0_i32_1 : i32, i32, i32
  }
  func.func @transform_4(%arg0: i32) -> (i32, i32, i32) {
    %c0_i32 = arith.constant 0 : i32
    %c0_i32_0 = arith.constant 0 : i32
    %c0_i32_1 = arith.constant 0 : i32
    %c0_i32_2 = arith.constant 0 : i32
    return %c0_i32, %c0_i32_0, %c0_i32_1 : i32, i32, i32
  }
  func.func @transform_5(%arg0: i32) -> (i32, i32, i32) {
    %c0_i32 = arith.constant 0 : i32
    %c0_i32_0 = arith.constant 0 : i32
    %c0_i32_1 = arith.constant 0 : i32
    %c0_i32_2 = arith.constant 0 : i32
    return %c0_i32, %c0_i32_0, %c0_i32_1 : i32, i32, i32
  }
  func.func @transform_6(%arg0: i32) -> (i32, i32, i32) {
    %c0_i32 = arith.constant 0 : i32
    %c0_i32_0 = arith.constant 0 : i32
    %c0_i32_1 = arith.constant 0 : i32
    %c0_i32_2 = arith.constant 0 : i32
    return %c0_i32, %c0_i32_0, %c0_i32_1 : i32, i32, i32
  }
  func.func @transform_7(%arg0: i32) -> (i32, i32, i32) {
    %c0_i32 = arith.constant 0 : i32
    %c0_i32_0 = arith.constant 0 : i32
    %c0_i32_1 = arith.constant 0 : i32
    %c0_i32_2 = arith.constant 0 : i32
    return %c0_i32, %c0_i32_0, %c0_i32_1 : i32, i32, i32
  }
  func.func @transform_8(%arg0: i32) -> (i32, i32, i32) {
    %c0_i32 = arith.constant 0 : i32
    %c0_i32_0 = arith.constant 0 : i32
    %c0_i32_1 = arith.constant 0 : i32
    %c0_i32_2 = arith.constant 0 : i32
    return %c0_i32, %c0_i32_0, %c0_i32_1 : i32, i32, i32
  }
  func.func @transform_9(%arg0: i32) -> (i32, i32, i32) {
    %c0_i32 = arith.constant 0 : i32
    %c0_i32_0 = arith.constant 0 : i32
    %c0_i32_1 = arith.constant 0 : i32
    %c0_i32_2 = arith.constant 0 : i32
    return %c0_i32, %c0_i32_0, %c0_i32_1 : i32, i32, i32
  }
  func.func @transform_10(%arg0: i32) -> (i32, i32, i32) {
    %c0_i32 = arith.constant 0 : i32
    %c0_i32_0 = arith.constant 0 : i32
    %c0_i32_1 = arith.constant 0 : i32
    %c0_i32_2 = arith.constant 0 : i32
    return %c0_i32, %c0_i32_0, %c0_i32_1 : i32, i32, i32
  }
  func.func @transform_11(%arg0: i32) -> (i32, i32, i32) {
    %c0_i32 = arith.constant 0 : i32
    %c0_i32_0 = arith.constant 0 : i32
    %c0_i32_1 = arith.constant 0 : i32
    %c0_i32_2 = arith.constant 0 : i32
    return %c0_i32, %c0_i32_0, %c0_i32_1 : i32, i32, i32
  }
  func.func @transform_12(%arg0: i32) -> (i32, i32, i32) {
    %c0_i32 = arith.constant 0 : i32
    %c0_i32_0 = arith.constant 0 : i32
    %c0_i32_1 = arith.constant 0 : i32
    %c0_i32_2 = arith.constant 0 : i32
    return %c0_i32, %c0_i32_0, %c0_i32_1 : i32, i32, i32
  }
  func.func @transform_13(%arg0: i32) -> (i32, i32, i32) {
    %c0_i32 = arith.constant 0 : i32
    %c0_i32_0 = arith.constant 0 : i32
    %c0_i32_1 = arith.constant 0 : i32
    %c0_i32_2 = arith.constant 0 : i32
    return %c0_i32, %c0_i32_0, %c0_i32_1 : i32, i32, i32
  }
  func.func @transform_14(%arg0: i32) -> (i32, i32, i32) {
    %c0_i32 = arith.constant 0 : i32
    %c0_i32_0 = arith.constant 0 : i32
    %c0_i32_1 = arith.constant 0 : i32
    %c0_i32_2 = arith.constant 0 : i32
    return %c0_i32, %c0_i32_0, %c0_i32_1 : i32, i32, i32
  }
  func.func @transform_15(%arg0: i32) -> (i32, i32) {
    %c0_i32 = arith.constant 0 : i32
    %c0_i32_0 = arith.constant 0 : i32
    %c0_i32_1 = arith.constant 0 : i32
    return %c0_i32, %c0_i32_0 : i32, i32
  }
  func.func @transform_16(%arg0: i32) -> (i32, i32) {
    %c0_i32 = arith.constant 0 : i32
    %c0_i32_0 = arith.constant 0 : i32
    %c0_i32_1 = arith.constant 0 : i32
    return %c0_i32, %c0_i32_0 : i32, i32
  }
  func.func @transform_17(%arg0: i32) -> (i32, i32) {
    %c0_i32 = arith.constant 0 : i32
    %c0_i32_0 = arith.constant 0 : i32
    %c0_i32_1 = arith.constant 0 : i32
    return %c0_i32, %c0_i32_0 : i32, i32
  }
  func.func @transform_18(%arg0: i32) -> (i32, i32) {
    %c0_i32 = arith.constant 0 : i32
    %c0_i32_0 = arith.constant 0 : i32
    %c0_i32_1 = arith.constant 0 : i32
    return %c0_i32, %c0_i32_0 : i32, i32
  }
  func.func @transform_19(%arg0: i32) -> (i32, i32, i32) {
    %c0_i32 = arith.constant 0 : i32
    %c0_i32_0 = arith.constant 0 : i32
    %c0_i32_1 = arith.constant 0 : i32
    return %arg0, %c0_i32, %c0_i32_0 : i32, i32, i32
  }
}

</mosaic_0001>

<llo_original>
// kernel: forward.1
$region0: #{forward.1}
  #allocation0 [shape = 'u32[]', space=smem, size = 0x4, offset = 0x4, fixed_abs, tag = 'smem constant byte address 0x4 - core index']
  #allocation1 [shape = 'u32[144,128]{1,0:T(1,128)}', space=vmem, size = 0x12000, scoped, tag = 'internal scratch']
  %s0 = inlined_call_operand.vmem [shape: bf16[2,24,256], index: 0, kind: input, shape index: {}]
  %s1 = inlined_call_operand.vmem [shape: bf16[256,128], index: 1, kind: input, shape index: {}]
  %s2 = inlined_call_operand.vmem [shape: f32[24,128], index: 2, kind: input, shape index: {}]
  %s3 = inlined_call_operand.vmem [shape: f32[2,1,128], index: 3, kind: input, shape index: {}]
  %s4 = inlined_call_operand.vmem [shape: f32[2,1,128], index: 4, kind: input, shape index: {}]
  %s5 = inlined_call_operand.vmem [shape: bf16[2,128,384], index: 5, kind: input, shape index: {}]
  %s6 = inlined_call_operand.vmem [shape: f32[2,1,384], index: 6, kind: input, shape index: {}]
  %s7 = inlined_call_operand.vmem [shape: bf16[2,128,128], index: 7, kind: input, shape index: {}]
  %s8 = inlined_call_operand.vmem [shape: f32[2,1,128], index: 8, kind: input, shape index: {}]
  %s9 = inlined_call_operand.vmem [shape: f32[2,1,128], index: 9, kind: input, shape index: {}]
  %s10 = inlined_call_operand.vmem [shape: f32[2,1,128], index: 10, kind: input, shape index: {}]
  %s11 = inlined_call_operand.vmem [shape: bf16[2,128,256], index: 11, kind: input, shape index: {}]
  %s12 = inlined_call_operand.vmem [shape: f32[2,1,256], index: 12, kind: input, shape index: {}]
  %s13 = inlined_call_operand.vmem [shape: bf16[2,256,128], index: 13, kind: input, shape index: {}]
  %s14 = inlined_call_operand.vmem [shape: f32[2,1,128], index: 14, kind: input, shape index: {}]
  %s15 = inlined_call_operand.vmem [shape: f32[1,128], index: 15, kind: input, shape index: {}]
  %s16 = inlined_call_operand.vmem [shape: f32[1,128], index: 16, kind: input, shape index: {}]
  %s17 = inlined_call_operand.vmem [shape: bf16[128,128], index: 17, kind: input, shape index: {}]
  %s18 = inlined_call_operand.vmem [shape: f32[1,128], index: 18, kind: input, shape index: {}]
  %s19 = inlined_call_operand.vmem [shape: f32[2,8,128], index: 19, kind: output, shape index: {}]
  %s20 = sld [smem:[#allocation0]]
  $region109: #{forward.1} parent=0
    _
  %s22 = ssub.s32 1, %s20
  %s23 = scalar_select 0, %s22, %s20
  loop: start=0, step=1, limit=4
  $region2: #{forward.1} parent=0 // loop_pre_header
    _
  $region3: #{forward.1} parent=0 // loop_header
    %s25 = sphi 0, %s29
    %p26 = scmp.ge.s32.totalorder %s25, 4
    %s35 = sphi 0, %s37
    %s38 = sphi 0, %s35
    %s39 = sphi 0, %s38
    %s55 = sphi 0, %s39
    %s59 = sphi 0, %s59
    %s61 = sphi 0, %s59
    %s62 = sphi 0, %s61
    %s76 = sphi 0, %s62
    %s80 = sphi 0, %s80
    %s82 = sphi 0, %s80
    %s83 = sphi 0, %s82
    %s97 = sphi 0, %s83
    %s101 = sphi 0, %s101
    %s103 = sphi 0, %s101
    %s104 = sphi 0, %s103
    %s118 = sphi 0, %s104
    %s122 = sphi 0, %s122
    %s124 = sphi 0, %s122
    %s125 = sphi 0, %s124
    %s139 = sphi 0, %s125
    %s143 = sphi 0, %s143
    %s145 = sphi 0, %s143
    %s146 = sphi 0, %s145
    %s160 = sphi 0, %s146
    %s164 = sphi 0, %s164
    %s166 = sphi 0, %s164
    %s167 = sphi 0, %s166
    %s181 = sphi 0, %s167
    %s185 = sphi 0, %s185
    %s187 = sphi 0, %s185
    %s188 = sphi 0, %s187
    %s202 = sphi 0, %s188
    %s206 = sphi 0, %s206
    %s208 = sphi 0, %s206
    %s209 = sphi 0, %s208
    %s223 = sphi 0, %s209
    %s227 = sphi 0, %s227
    %s229 = sphi 0, %s227
    %s230 = sphi 0, %s229
    %s244 = sphi 0, %s230
    %s248 = sphi 0, %s248
    %s250 = sphi 0, %s248
    %s251 = sphi 0, %s250
    %s265 = sphi 0, %s251
    %s269 = sphi 0, %s269
    %s271 = sphi 0, %s269
    %s272 = sphi 0, %s271
    %s286 = sphi 0, %s272
    %s290 = sphi 0, %s290
    %s292 = sphi 0, %s290
    %s293 = sphi 0, %s292
    %s307 = sphi 0, %s293
    %s311 = sphi 0, %s311
    %s313 = sphi 0, %s311
    %s314 = sphi 0, %s313
    %s328 = sphi 0, %s314
    %s332 = sphi 0, %s332
    %s334 = sphi 0, %s332
    %s335 = sphi 0, %s334
    %s349 = sphi 0, %s335
    %s353 = sphi 0, %s353
    %s355 = sphi 0, %s353
    %s356 = sphi 0, %s355
    %s370 = sphi 0, %s356
    %s374 = sphi 0, %s374
    %s376 = sphi 0, %s374
    %s377 = sphi 0, %s376
    %s391 = sphi 0, %s377
    %s395 = sphi 0, %s395
    %s397 = sphi 0, %s395
    %s398 = sphi 0, %s397
    %s412 = sphi 0, %s398
    %s416 = sphi 0, %s416
    %s418 = sphi 0, %s416
    %s419 = sphi 0, %s418
    %s433 = sphi 0, %s419
    %s439 = sphi 0, %s441
    %s442 = sphi 0, %s439
    %s443 = sphi 0, %s442
    %s459 = sphi 0, %s443
  $region4: #{forward.1} parent=0 // loop_header_branch
    %28 = sbr.rel (%p26) target = $region8
  $region5: #{forward.1} parent=0 // loop_body
    %s30 = ssub.s32 %s25, 1
    %s31 = ssub.s32 %s25, 2
    %s32 = sadd.s32 %s25, 1
    %s33 = ssub.s32 %s25, %s32
    %p34 = scmp.eq.s32.totalorder %s33, 0
    %s36 = sadd.s32 %s35, 1
    %s37 = scalar_select %p34, %s35, %s36
    %p40 = pneg %p34
    %p41 = scmp.eq.s32.totalorder %s25, 1
    %p42 = por %p40, %p41
    %p43 = scmp.ne.s32.totalorder %s35, %s38
    %p44 = scmp.eq.s32.totalorder %s25, 0
    %p45 = por %p43, %p44
    %p46 = scmp.ne.s32.totalorder %s35, %s38
    %p47 = scmp.eq.s32.totalorder %s30, 1
    %p48 = por %p46, %p47
    %p49 = scmp.ne.s32.totalorder %s38, %s39
    %p50 = scmp.eq.s32.totalorder %s30, 0
    %p51 = por %p49, %p50
    %p52 = scmp.ne.s32.totalorder %s38, %s39
    %p53 = scmp.eq.s32.totalorder %s31, 1
    %p54 = por %p52, %p53
    %p56 = scmp.ne.s32.totalorder %s39, %s55
    %p57 = scmp.eq.s32.totalorder %s31, 0
    %p58 = por %p56, %p57
    %s60 = sadd.s32 %s59, 1
    %p63 = scmp.eq.s32.totalorder %s25, 1
    %p64 = scmp.ne.s32.totalorder %s59, %s61
    %p65 = scmp.eq.s32.totalorder %s25, 0
    %p66 = por %p64, %p65
    %p67 = scmp.ne.s32.totalorder %s59, %s61
    %p68 = scmp.eq.s32.totalorder %s30, 1
    %p69 = por %p67, %p68
    %p70 = scmp.ne.s32.totalorder %s61, %s62
    %p71 = scmp.eq.s32.totalorder %s30, 0
    %p72 = por %p70, %p71
    %p73 = scmp.ne.s32.totalorder %s61, %s62
    %p74 = scmp.eq.s32.totalorder %s31, 1
    %p75 = por %p73, %p74
    %p77 = scmp.ne.s32.totalorder %s62, %s76
    %p78 = scmp.eq.s32.totalorder %s31, 0
    %p79 = por %p77, %p78
    %s81 = sadd.s32 %s80, 1
    %p84 = scmp.eq.s32.totalorder %s25, 1
    %p85 = scmp.ne.s32.totalorder %s80, %s82
    %p86 = scmp.eq.s32.totalorder %s25, 0
    %p87 = por %p85, %p86
    %p88 = scmp.ne.s32.totalorder %s80, %s82
    %p89 = scmp.eq.s32.totalorder %s30, 1
    %p90 = por %p88, %p89
    %p91 = scmp.ne.s32.totalorder %s82, %s83
    %p92 = scmp.eq.s32.totalorder %s30, 0
    %p93 = por %p91, %p92
    %p94 = scmp.ne.s32.totalorder %s82, %s83
    %p95 = scmp.eq.s32.totalorder %s31, 1
    %p96 = por %p94, %p95
    %p98 = scmp.ne.s32.totalorder %s83, %s97
    %p99 = scmp.eq.s32.totalorder %s31, 0
    %p100 = por %p98, %p99
    %s102 = sadd.s32 %s101, 1
    %p105 = scmp.eq.s32.totalorder %s25, 1
    %p106 = scmp.ne.s32.totalorder %s101, %s103
    %p107 = scmp.eq.s32.totalorder %s25, 0
    %p108 = por %p106, %p107
    %p109 = scmp.ne.s32.totalorder %s101, %s103
    %p110 = scmp.eq.s32.totalorder %s30, 1
    %p111 = por %p109, %p110
    %p112 = scmp.ne.s32.totalorder %s103, %s104
    %p113 = scmp.eq.s32.totalorder %s30, 0
    %p114 = por %p112, %p113
    %p115 = scmp.ne.s32.totalorder %s103, %s104
    %p116 = scmp.eq.s32.totalorder %s31, 1
    %p117 = por %p115, %p116
    %p119 = scmp.ne.s32.totalorder %s104, %s118
    %p120 = scmp.eq.s32.totalorder %s31, 0
    %p121 = por %p119, %p120
    %s123 = sadd.s32 %s122, 1
    %p126 = scmp.eq.s32.totalorder %s25, 1
    %p127 = scmp.ne.s32.totalorder %s122, %s124
    %p128 = scmp.eq.s32.totalorder %s25, 0
    %p129 = por %p127, %p128
    %p130 = scmp.ne.s32.totalorder %s122, %s124
    %p131 = scmp.eq.s32.totalorder %s30, 1
    %p132 = por %p130, %p131
    %p133 = scmp.ne.s32.totalorder %s124, %s125
    %p134 = scmp.eq.s32.totalorder %s30, 0
    %p135 = por %p133, %p134
    %p136 = scmp.ne.s32.totalorder %s124, %s125
    %p137 = scmp.eq.s32.totalorder %s31, 1
    %p138 = por %p136, %p137
    %p140 = scmp.ne.s32.totalorder %s125, %s139
    %p141 = scmp.eq.s32.totalorder %s31, 0
    %p142 = por %p140, %p141
    %s144 = sadd.s32 %s143, 1
    %p147 = scmp.eq.s32.totalorder %s25, 1
    %p148 = scmp.ne.s32.totalorder %s143, %s145
    %p149 = scmp.eq.s32.totalorder %s25, 0
    %p150 = por %p148, %p149
    %p151 = scmp.ne.s32.totalorder %s143, %s145
    %p152 = scmp.eq.s32.totalorder %s30, 1
    %p153 = por %p151, %p152
    %p154 = scmp.ne.s32.totalorder %s145, %s146
    %p155 = scmp.eq.s32.totalorder %s30, 0
    %p156 = por %p154, %p155
    %p157 = scmp.ne.s32.totalorder %s145, %s146
    %p158 = scmp.eq.s32.totalorder %s31, 1
    %p159 = por %p157, %p158
    %p161 = scmp.ne.s32.totalorder %s146, %s160
    %p162 = scmp.eq.s32.totalorder %s31, 0
    %p163 = por %p161, %p162
    %s165 = sadd.s32 %s164, 1
    %p168 = scmp.eq.s32.totalorder %s25, 1
    %p169 = scmp.ne.s32.totalorder %s164, %s166
    %p170 = scmp.eq.s32.totalorder %s25, 0
    %p171 = por %p169, %p170
    %p172 = scmp.ne.s32.totalorder %s164, %s166
    %p173 = scmp.eq.s32.totalorder %s30, 1
    %p174 = por %p172, %p173
    %p175 = scmp.ne.s32.totalorder %s166, %s167
    %p176 = scmp.eq.s32.totalorder %s30, 0
    %p177 = por %p175, %p176
    %p178 = scmp.ne.s32.totalorder %s166, %s167
    %p179 = scmp.eq.s32.totalorder %s31, 1
    %p180 = por %p178, %p179
    %p182 = scmp.ne.s32.totalorder %s167, %s181
    %p183 = scmp.eq.s32.totalorder %s31, 0
    %p184 = por %p182, %p183
    %s186 = sadd.s32 %s185, 1
    %p189 = scmp.eq.s32.totalorder %s25, 1
    %p190 = scmp.ne.s32.totalorder %s185, %s187
    %p191 = scmp.eq.s32.totalorder %s25, 0
    %p192 = por %p190, %p191
    %p193 = scmp.ne.s32.totalorder %s185, %s187
    %p194 = scmp.eq.s32.totalorder %s30, 1
    %p195 = por %p193, %p194
    %p196 = scmp.ne.s32.totalorder %s187, %s188
    %p197 = scmp.eq.s32.totalorder %s30, 0
    %p198 = por %p196, %p197
    %p199 = scmp.ne.s32.totalorder %s187, %s188
    %p200 = scmp.eq.s32.totalorder %s31, 1
    %p201 = por %p199, %p200
    %p203 = scmp.ne.s32.totalorder %s188, %s202
    %p204 = scmp.eq.s32.totalorder %s31, 0
    %p205 = por %p203, %p204
    %s207 = sadd.s32 %s206, 1
    %p210 = scmp.eq.s32.totalorder %s25, 1
    %p211 = scmp.ne.s32.totalorder %s206, %s208
    %p212 = scmp.eq.s32.totalorder %s25, 0
    %p213 = por %p211, %p212
    %p214 = scmp.ne.s32.totalorder %s206, %s208
    %p215 = scmp.eq.s32.totalorder %s30, 1
    %p216 = por %p214, %p215
    %p217 = scmp.ne.s32.totalorder %s208, %s209
    %p218 = scmp.eq.s32.totalorder %s30, 0
    %p219 = por %p217, %p218
    %p220 = scmp.ne.s32.totalorder %s208, %s209
    %p221 = scmp.eq.s32.totalorder %s31, 1
    %p222 = por %p220, %p221
    %p224 = scmp.ne.s32.totalorder %s209, %s223
    %p225 = scmp.eq.s32.totalorder %s31, 0
    %p226 = por %p224, %p225
    %s228 = sadd.s32 %s227, 1
    %p231 = scmp.eq.s32.totalorder %s25, 1
    %p232 = scmp.ne.s32.totalorder %s227, %s229
    %p233 = scmp.eq.s32.totalorder %s25, 0
    %p234 = por %p232, %p233
    %p235 = scmp.ne.s32.totalorder %s227, %s229
    %p236 = scmp.eq.s32.totalorder %s30, 1
    %p237 = por %p235, %p236
    %p238 = scmp.ne.s32.totalorder %s229, %s230
    %p239 = scmp.eq.s32.totalorder %s30, 0
    %p240 = por %p238, %p239
    %p241 = scmp.ne.s32.totalorder %s229, %s230
    %p242 = scmp.eq.s32.totalorder %s31, 1
    %p243 = por %p241, %p242
    %p245 = scmp.ne.s32.totalorder %s230, %s244
    %p246 = scmp.eq.s32.totalorder %s31, 0
    %p247 = por %p245, %p246
    %s249 = sadd.s32 %s248, 1
    %p252 = scmp.eq.s32.totalorder %s25, 1
    %p253 = scmp.ne.s32.totalorder %s248, %s250
    %p254 = scmp.eq.s32.totalorder %s25, 0
    %p255 = por %p253, %p254
    %p256 = scmp.ne.s32.totalorder %s248, %s250
    %p257 = scmp.eq.s32.totalorder %s30, 1
    %p258 = por %p256, %p257
    %p259 = scmp.ne.s32.totalorder %s250, %s251
    %p260 = scmp.eq.s32.totalorder %s30, 0
    %p261 = por %p259, %p260
    %p262 = scmp.ne.s32.totalorder %s250, %s251
    %p263 = scmp.eq.s32.totalorder %s31, 1
    %p264 = por %p262, %p263
    %p266 = scmp.ne.s32.totalorder %s251, %s265
    %p267 = scmp.eq.s32.totalorder %s31, 0
    %p268 = por %p266, %p267
    %s270 = sadd.s32 %s269, 1
    %p273 = scmp.eq.s32.totalorder %s25, 1
    %p274 = scmp.ne.s32.totalorder %s269, %s271
    %p275 = scmp.eq.s32.totalorder %s25, 0
    %p276 = por %p274, %p275
    %p277 = scmp.ne.s32.totalorder %s269, %s271
    %p278 = scmp.eq.s32.totalorder %s30, 1
    %p279 = por %p277, %p278
    %p280 = scmp.ne.s32.totalorder %s271, %s272
    %p281 = scmp.eq.s32.totalorder %s30, 0
    %p282 = por %p280, %p281
    %p283 = scmp.ne.s32.totalorder %s271, %s272
    %p284 = scmp.eq.s32.totalorder %s31, 1
    %p285 = por %p283, %p284
    %p287 = scmp.ne.s32.totalorder %s272, %s286
    %p288 = scmp.eq.s32.totalorder %s31, 0
    %p289 = por %p287, %p288
    %s291 = sadd.s32 %s290, 1
    %p294 = scmp.eq.s32.totalorder %s25, 1
    %p295 = scmp.ne.s32.totalorder %s290, %s292
    %p296 = scmp.eq.s32.totalorder %s25, 0
    %p297 = por %p295, %p296
    %p298 = scmp.ne.s32.totalorder %s290, %s292
    %p299 = scmp.eq.s32.totalorder %s30, 1
    %p300 = por %p298, %p299
    %p301 = scmp.ne.s32.totalorder %s292, %s293
    %p302 = scmp.eq.s32.totalorder %s30, 0
    %p303 = por %p301, %p302
    %p304 = scmp.ne.s32.totalorder %s292, %s293
    %p305 = scmp.eq.s32.totalorder %s31, 1
    %p306 = por %p304, %p305
    %p308 = scmp.ne.s32.totalorder %s293, %s307
    %p309 = scmp.eq.s32.totalorder %s31, 0
    %p310 = por %p308, %p309
    %s312 = sadd.s32 %s311, 1
    %p315 = scmp.eq.s32.totalorder %s25, 1
    %p316 = scmp.ne.s32.totalorder %s311, %s313
    %p317 = scmp.eq.s32.totalorder %s25, 0
    %p318 = por %p316, %p317
    %p319 = scmp.ne.s32.totalorder %s311, %s313
    %p320 = scmp.eq.s32.totalorder %s30, 1
    %p321 = por %p319, %p320
    %p322 = scmp.ne.s32.totalorder %s313, %s314
    %p323 = scmp.eq.s32.totalorder %s30, 0
    %p324 = por %p322, %p323
    %p325 = scmp.ne.s32.totalorder %s313, %s314
    %p326 = scmp.eq.s32.totalorder %s31, 1
    %p327 = por %p325, %p326
    %p329 = scmp.ne.s32.totalorder %s314, %s328
    %p330 = scmp.eq.s32.totalorder %s31, 0
    %p331 = por %p329, %p330
    %s333 = sadd.s32 %s332, 1
    %p336 = scmp.eq.s32.totalorder %s25, 1
    %p337 = scmp.ne.s32.totalorder %s332, %s334
    %p338 = scmp.eq.s32.totalorder %s25, 0
    %p339 = por %p337, %p338
    %p340 = scmp.ne.s32.totalorder %s332, %s334
    %p341 = scmp.eq.s32.totalorder %s30, 1
    %p342 = por %p340, %p341
    %p343 = scmp.ne.s32.totalorder %s334, %s335
    %p344 = scmp.eq.s32.totalorder %s30, 0
    %p345 = por %p343, %p344
    %p346 = scmp.ne.s32.totalorder %s334, %s335
    %p347 = scmp.eq.s32.totalorder %s31, 1
    %p348 = por %p346, %p347
    %p350 = scmp.ne.s32.totalorder %s335, %s349
    %p351 = scmp.eq.s32.totalorder %s31, 0
    %p352 = por %p350, %p351
    %s354 = sadd.s32 %s353, 1
    %p357 = scmp.eq.s32.totalorder %s25, 1
    %p358 = scmp.ne.s32.totalorder %s353, %s355
    %p359 = scmp.eq.s32.totalorder %s25, 0
    %p360 = por %p358, %p359
    %p361 = scmp.ne.s32.totalorder %s353, %s355
    %p362 = scmp.eq.s32.totalorder %s30, 1
    %p363 = por %p361, %p362
    %p364 = scmp.ne.s32.totalorder %s355, %s356
    %p365 = scmp.eq.s32.totalorder %s30, 0
    %p366 = por %p364, %p365
    %p367 = scmp.ne.s32.totalorder %s355, %s356
    %p368 = scmp.eq.s32.totalorder %s31, 1
    %p369 = por %p367, %p368
    %p371 = scmp.ne.s32.totalorder %s356, %s370
    %p372 = scmp.eq.s32.totalorder %s31, 0
    %p373 = por %p371, %p372
    %s375 = sadd.s32 %s374, 1
    %p378 = scmp.eq.s32.totalorder %s25, 1
    %p379 = scmp.ne.s32.totalorder %s374, %s376
    %p380 = scmp.eq.s32.totalorder %s25, 0
    %p381 = por %p379, %p380
    %p382 = scmp.ne.s32.totalorder %s374, %s376
    %p383 = scmp.eq.s32.totalorder %s30, 1
    %p384 = por %p382, %p383
    %p385 = scmp.ne.s32.totalorder %s376, %s377
    %p386 = scmp.eq.s32.totalorder %s30, 0
    %p387 = por %p385, %p386
    %p388 = scmp.ne.s32.totalorder %s376, %s377
    %p389 = scmp.eq.s32.totalorder %s31, 1
    %p390 = por %p388, %p389
    %p392 = scmp.ne.s32.totalorder %s377, %s391
    %p393 = scmp.eq.s32.totalorder %s31, 0
    %p394 = por %p392, %p393
    %s396 = sadd.s32 %s395, 1
    %p399 = scmp.eq.s32.totalorder %s25, 1
    %p400 = scmp.ne.s32.totalorder %s395, %s397
    %p401 = scmp.eq.s32.totalorder %s25, 0
    %p402 = por %p400, %p401
    %p403 = scmp.ne.s32.totalorder %s395, %s397
    %p404 = scmp.eq.s32.totalorder %s30, 1
    %p405 = por %p403, %p404
    %p406 = scmp.ne.s32.totalorder %s397, %s398
    %p407 = scmp.eq.s32.totalorder %s30, 0
    %p408 = por %p406, %p407
    %p409 = scmp.ne.s32.totalorder %s397, %s398
    %p410 = scmp.eq.s32.totalorder %s31, 1
    %p411 = por %p409, %p410
    %p413 = scmp.ne.s32.totalorder %s398, %s412
    %p414 = scmp.eq.s32.totalorder %s31, 0
    %p415 = por %p413, %p414
    %s417 = sadd.s32 %s416, 1
    %p420 = scmp.eq.s32.totalorder %s25, 1
    %p421 = scmp.ne.s32.totalorder %s416, %s418
    %p422 = scmp.eq.s32.totalorder %s25, 0
    %p423 = por %p421, %p422
    %p424 = scmp.ne.s32.totalorder %s416, %s418
    %p425 = scmp.eq.s32.totalorder %s30, 1
    %p426 = por %p424, %p425
    %p427 = scmp.ne.s32.totalorder %s418, %s419
    %p428 = scmp.eq.s32.totalorder %s30, 0
    %p429 = por %p427, %p428
    %p430 = scmp.ne.s32.totalorder %s418, %s419
    %p431 = scmp.eq.s32.totalorder %s31, 1
    %p432 = por %p430, %p431
    %p434 = scmp.ne.s32.totalorder %s419, %s433
    %p435 = scmp.eq.s32.totalorder %s31, 0
    %p436 = por %p434, %p435
    %s437 = ssub.s32 %s25, %s32
    %p438 = scmp.eq.s32.totalorder %s437, 0
    %s440 = sadd.s32 %s439, 1
    %s441 = scalar_select %p438, %s439, %s440
    %p444 = pneg %p438
    %p445 = scmp.eq.s32.totalorder %s25, 1
    %p446 = por %p444, %p445
    %p447 = scmp.ne.s32.totalorder %s439, %s442
    %p448 = scmp.eq.s32.totalorder %s25, 0
    %p449 = por %p447, %p448
    %p450 = scmp.ne.s32.totalorder %s439, %s442
    %p451 = scmp.eq.s32.totalorder %s30, 1
    %p452 = por %p450, %p451
    %p453 = scmp.ne.s32.totalorder %s442, %s443
    %p454 = scmp.eq.s32.totalorder %s30, 0
    %p455 = por %p453, %p454
    %p456 = scmp.ne.s32.totalorder %s442, %s443
    %p457 = scmp.eq.s32.totalorder %s31, 1
    %p458 = por %p456, %p457
    %p460 = scmp.ne.s32.totalorder %s443, %s459
    %p461 = scmp.eq.s32.totalorder %s31, 0
    %p462 = por %p460, %p461
    %p463 = scmp.le.s32.totalorder 1, %s25
    %p464 = scmp.lt.s32.totalorder %s25, 3
    %p465 = pnand %p463, %p464
    %p466 = pneg %p465
    // Predicated region
    $region9: #{forward.1} parent=5 // pred_check
      _
    $region10: #{forward.1} parent=5 // pred_check_branch
      %468 = sbr.rel (%p465) target = $region12
    $region11: #{forward.1} parent=5 // pred_region
      %s469 = ssub.s32 %s25, 1
      // Predicated region
      $region13: #{forward.1} parent=11 // pred_check
        %p470 = pneg %p72
      $region14: #{forward.1} parent=11 // pred_check_branch
        %472 = sbr.rel (%p470) target = $region16
      $region15: #{forward.1} parent=11 // pred_region
        _
      $region16: #{forward.1} parent=11 // pred_fallthru
        _
      // Predicated region
      $region17: #{forward.1} parent=11 // pred_check
        %p473 = pneg %p93
      $region18: #{forward.1} parent=11 // pred_check_branch
        %475 = sbr.rel (%p473) target = $region20
      $region19: #{forward.1} parent=11 // pred_region
        _
      $region20: #{forward.1} parent=11 // pred_fallthru
        _
      // Predicated region
      $region21: #{forward.1} parent=11 // pred_check
        %p476 = pneg %p114
      $region22: #{forward.1} parent=11 // pred_check_branch
        %478 = sbr.rel (%p476) target = $region24
      $region23: #{forward.1} parent=11 // pred_region
        _
      $region24: #{forward.1} parent=11 // pred_fallthru
        _
      // Predicated region
      $region25: #{forward.1} parent=11 // pred_check
        %p479 = pneg %p135
      $region26: #{forward.1} parent=11 // pred_check_branch
        %481 = sbr.rel (%p479) target = $region28
      $region27: #{forward.1} parent=11 // pred_region
        _
      $region28: #{forward.1} parent=11 // pred_fallthru
        _
      // Predicated region
      $region29: #{forward.1} parent=11 // pred_check
        %p482 = pneg %p156
      $region30: #{forward.1} parent=11 // pred_check_branch
        %484 = sbr.rel (%p482) target = $region32
      $region31: #{forward.1} parent=11 // pred_region
        _
      $region32: #{forward.1} parent=11 // pred_fallthru
        _
      // Predicated region
      $region33: #{forward.1} parent=11 // pred_check
        %p485 = pneg %p177
      $region34: #{forward.1} parent=11 // pred_check_branch
        %487 = sbr.rel (%p485) target = $region36
      $region35: #{forward.1} parent=11 // pred_region
        _
      $region36: #{forward.1} parent=11 // pred_fallthru
        _
      // Predicated region
      $region37: #{forward.1} parent=11 // pred_check
        %p488 = pneg %p198
      $region38: #{forward.1} parent=11 // pred_check_branch
        %490 = sbr.rel (%p488) target = $region40
      $region39: #{forward.1} parent=11 // pred_region
        _
      $region40: #{forward.1} parent=11 // pred_fallthru
        _
      // Predicated region
      $region41: #{forward.1} parent=11 // pred_check
        %p491 = pneg %p219
      $region42: #{forward.1} parent=11 // pred_check_branch
        %493 = sbr.rel (%p491) target = $region44
      $region43: #{forward.1} parent=11 // pred_region
        _
      $region44: #{forward.1} parent=11 // pred_fallthru
        _
      // Predicated region
      $region45: #{forward.1} parent=11 // pred_check
        %p494 = pneg %p240
      $region46: #{forward.1} parent=11 // pred_check_branch
        %496 = sbr.rel (%p494) target = $region48
      $region47: #{forward.1} parent=11 // pred_region
        _
      $region48: #{forward.1} parent=11 // pred_fallthru
        _
      // Predicated region
      $region49: #{forward.1} parent=11 // pred_check
        %p497 = pneg %p261
      $region50: #{forward.1} parent=11 // pred_check_branch
        %499 = sbr.rel (%p497) target = $region52
      $region51: #{forward.1} parent=11 // pred_region
        _
      $region52: #{forward.1} parent=11 // pred_fallthru
        _
      // Predicated region
      $region53: #{forward.1} parent=11 // pred_check
        %p500 = pneg %p282
      $region54: #{forward.1} parent=11 // pred_check_branch
        %502 = sbr.rel (%p500) target = $region56
      $region55: #{forward.1} parent=11 // pred_region
        _
      $region56: #{forward.1} parent=11 // pred_fallthru
        _
      // Predicated region
      $region57: #{forward.1} parent=11 // pred_check
        %p503 = pneg %p303
      $region58: #{forward.1} parent=11 // pred_check_branch
        %505 = sbr.rel (%p503) target = $region60
      $region59: #{forward.1} parent=11 // pred_region
        _
      $region60: #{forward.1} parent=11 // pred_fallthru
        _
      // Predicated region
      $region61: #{forward.1} parent=11 // pred_check
        %p506 = pneg %p324
      $region62: #{forward.1} parent=11 // pred_check_branch
        %508 = sbr.rel (%p506) target = $region64
      $region63: #{forward.1} parent=11 // pred_region
        _
      $region64: #{forward.1} parent=11 // pred_fallthru
        _
      // Predicated region
      $region65: #{forward.1} parent=11 // pred_check
        %p509 = pneg %p345
      $region66: #{forward.1} parent=11 // pred_check_branch
        %511 = sbr.rel (%p509) target = $region68
      $region67: #{forward.1} parent=11 // pred_region
        _
      $region68: #{forward.1} parent=11 // pred_fallthru
        _
      // Predicated region
      $region69: #{forward.1} parent=11 // pred_check
        %p512 = pneg %p366
      $region70: #{forward.1} parent=11 // pred_check_branch
        %514 = sbr.rel (%p512) target = $region72
      $region71: #{forward.1} parent=11 // pred_region
        _
      $region72: #{forward.1} parent=11 // pred_fallthru
        _
      // Predicated region
      $region73: #{forward.1} parent=11 // pred_check
        %p515 = pneg %p387
      $region74: #{forward.1} parent=11 // pred_check_branch
        %517 = sbr.rel (%p515) target = $region76
      $region75: #{forward.1} parent=11 // pred_region
        _
      $region76: #{forward.1} parent=11 // pred_fallthru
        _
      // Predicated region
      $region77: #{forward.1} parent=11 // pred_check
        %p518 = pneg %p408
      $region78: #{forward.1} parent=11 // pred_check_branch
        %520 = sbr.rel (%p518) target = $region80
      $region79: #{forward.1} parent=11 // pred_region
        _
      $region80: #{forward.1} parent=11 // pred_fallthru
        _
      // Predicated region
      $region81: #{forward.1} parent=11 // pred_check
        %p521 = pneg %p429
      $region82: #{forward.1} parent=11 // pred_check_branch
        %523 = sbr.rel (%p521) target = $region84
      $region83: #{forward.1} parent=11 // pred_region
        _
      $region84: #{forward.1} parent=11 // pred_fallthru
        _
    $region12: #{forward.1} parent=5 // pred_fallthru
      _
    %p524 = scmp.lt.s32.totalorder %s25, 2
    // Predicated region
    $region85: #{forward.1} parent=5 // pred_check
      %p525 = pneg %p524
    $region86: #{forward.1} parent=5 // pred_check_branch
      %527 = sbr.rel (%p525) target = $region88
    $region87: #{forward.1} parent=5 // pred_region
      // Predicated region
      $region89: #{forward.1} parent=87 // pred_check
        %p528 = pneg %p45
      $region90: #{forward.1} parent=87 // pred_check_branch
        %530 = sbr.rel (%p528) target = $region92
      $region91: #{forward.1} parent=87 // pred_region
        %p531 = scmp.lt.s32.totalorder %s25, 1
        %s532 = scalar_select %p531, %s25, 1
        %s533 = smul.addr %s532, 6
        %s534 = smul.addr %s533, 4
        %s535 = scalar_lea.vmem %s0, %s534
      $region92: #{forward.1} parent=87 // pred_fallthru
        _
    $region88: #{forward.1} parent=5 // pred_fallthru
      _
    %p536 = scmp.le.s32.totalorder 1, %s25
    %p537 = scmp.lt.s32.totalorder %s25, 3
    %p538 = pnand %p536, %p537
    %p539 = pneg %p538
    // Predicated region
    $region93: #{forward.1} parent=5 // pred_check
      _
    $region94: #{forward.1} parent=5 // pred_check_branch
      %541 = sbr.rel (%p538) target = $region96
    $region95: #{forward.1} parent=5 // pred_region
      %s542 = ssub.s32 %s25, 1
      %p543 = scmp.lt.s32.totalorder %s30, 1
      %s544 = scalar_select %p543, %s30, 1
      %s545 = smul.addr %s544, 6
      %s546 = smul.addr %s545, 4
      %s547 = scalar_lea.vmem %s0, %s546
      %p548 = pneg %p51
      %p549 = pneg %p48
      %p550 = pneg %p72
      %p551 = pneg %p69
      %p552 = pneg %p93
      %p553 = pneg %p90
      %p554 = pneg %p114
      %p555 = pneg %p111
      %p556 = pneg %p135
      %p557 = pneg %p132
      %p558 = pneg %p156
      %p559 = pneg %p153
      %p560 = pneg %p177
      %p561 = pneg %p174
      %p562 = pneg %p198
      %p563 = pneg %p195
      %p564 = pneg %p219
      %p565 = pneg %p216
      %p566 = pneg %p240
      %p567 = pneg %p237
      %p568 = pneg %p261
      %p569 = pneg %p258
      %p570 = pneg %p282
      %p571 = pneg %p279
      %p572 = pneg %p303
      %p573 = pneg %p300
      %p574 = pneg %p324
      %p575 = pneg %p321
      %p576 = pneg %p345
      %p577 = pneg %p342
      %p578 = pneg %p366
      %p579 = pneg %p363
      %p580 = pneg %p387
      %p581 = pneg %p384
      %p582 = pneg %p408
      %p583 = pneg %p405
      %p584 = pneg %p429
      %p585 = pneg %p426
      %p586 = pneg %p455
      %p587 = pneg %p452
      %p588 = scmp.lt.s32.totalorder %s30, 1
      %s589 = scalar_select %p588, %s30, 1
      %s590 = smul.addr %s589, 8
      %s591 = scalar_lea.vmem %s19, %s590
      %p592 = scmp.lt.s32.totalorder %s30, 1
      %s593 = scalar_select %p592, %s30, 1
      %s594 = smul.addr %s593, 6
      %s595 = smul.addr %s594, 4
      %s596 = scalar_lea.vmem %s0, %s595
      %p597 = scmp.lt.s32.totalorder %s30, 1
      %s598 = scalar_select %p597, %s30, 1
      %s599 = smul.addr %s598, 8
      %s600 = scalar_lea.vmem %s19, %s599
      %v602 = vld [vmem:[%s596] sm:$0xff]
      %v603 = vld [vmem:[%s596 + $0x8] sm:$0xff]
      %v604 = vld [vmem:[%s596 + $0x10] sm:$0xff]
      %v605 = vld [vmem:[%s1] sm:$0xf]
      %v606 = vld [vmem:[%s1 + $0x4] sm:$0xf]
      %v607 = vld [vmem:[%s1 + $0x8] sm:$0xf]
      %v608 = vld [vmem:[%s1 + $0xc] sm:$0xf]
      %v609 = vld [vmem:[%s1 + $0x10] sm:$0xf]
      %v610 = vld [vmem:[%s1 + $0x14] sm:$0xf]
      %v611 = vld [vmem:[%s1 + $0x18] sm:$0xf]
      %v612 = vld [vmem:[%s1 + $0x1c] sm:$0xf]
      %v613 = vld [vmem:[%s1 + $0x20] sm:$0xf]
      %v614 = vld [vmem:[%s1 + $0x24] sm:$0xf]
      %v615 = vld [vmem:[%s1 + $0x28] sm:$0xf]
      %v616 = vld [vmem:[%s1 + $0x2c] sm:$0xf]
      %v617 = vld [vmem:[%s1 + $0x30] sm:$0xf]
      %v618 = vld [vmem:[%s1 + $0x34] sm:$0xf]
      %v619 = vld [vmem:[%s1 + $0x38] sm:$0xf]
      %v620 = vld [vmem:[%s1 + $0x3c] sm:$0xf]
      %v621 = vld [vmem:[%s1 + $0x40] sm:$0xf]
      %v622 = vld [vmem:[%s1 + $0x44] sm:$0xf]
      %v623 = vld [vmem:[%s1 + $0x48] sm:$0xf]
      %v624 = vld [vmem:[%s1 + $0x4c] sm:$0xf]
      %v625 = vld [vmem:[%s1 + $0x50] sm:$0xf]
      %v626 = vld [vmem:[%s1 + $0x54] sm:$0xf]
      %v627 = vld [vmem:[%s1 + $0x58] sm:$0xf]
      %v628 = vld [vmem:[%s1 + $0x5c] sm:$0xf]
      %v629 = vld [vmem:[%s1 + $0x60] sm:$0xf]
      %v630 = vld [vmem:[%s1 + $0x64] sm:$0xf]
      %v631 = vld [vmem:[%s1 + $0x68] sm:$0xf]
      %v632 = vld [vmem:[%s1 + $0x6c] sm:$0xf]
      %v633 = vld [vmem:[%s1 + $0x70] sm:$0xf]
      %v634 = vld [vmem:[%s1 + $0x74] sm:$0xf]
      %v635 = vld [vmem:[%s1 + $0x78] sm:$0xf]
      %v636 = vld [vmem:[%s1 + $0x7c] sm:$0xf]
      %v637 = vld [vmem:[%s2] sm:$0xff]
      %v638 = vld [vmem:[%s2 + $0x8] sm:$0xff]
      %v639 = vld [vmem:[%s2 + $0x10] sm:$0xff]
      %v643 = vunpack.c.l.b16 %v602
      %v644 = vunpack.c.h.b16 %v602
      %v645 = vunpack.c.l.b16 %v603
      %v646 = vunpack.c.h.b16 %v603
      %v647 = vunpack.c.l.b16 %v604
      %v648 = vunpack.c.h.b16 %v604
      %v649 = vpack.c.b16 %v645, %v643
      %v650 = vpack.c.b16 %v646, %v644
      %v651 = vpack.c.b16 %v647, %v647
      %v652 = vpack.c.b16 %v648, %v648
      %v689 = vunpack.c.l.b16 %v605
      %v690 = vunpack.c.l.b16 %v606
      %v691 = vunpack.c.l.b16 %v607
      %v692 = vunpack.c.l.b16 %v608
      %v693 = vunpack.c.l.b16 %v609
      %v694 = vunpack.c.l.b16 %v610
      %v695 = vunpack.c.l.b16 %v611
      %v696 = vunpack.c.l.b16 %v612
      %v697 = vunpack.c.l.b16 %v613
      %v698 = vunpack.c.l.b16 %v614
      %v699 = vunpack.c.l.b16 %v615
      %v700 = vunpack.c.l.b16 %v616
      %v701 = vunpack.c.l.b16 %v617
      %v702 = vunpack.c.l.b16 %v618
      %v703 = vunpack.c.l.b16 %v619
      %v704 = vunpack.c.l.b16 %v620
      %v705 = vunpack.c.l.b16 %v621
      %v706 = vunpack.c.l.b16 %v622
      %v707 = vunpack.c.l.b16 %v623
      %v708 = vunpack.c.l.b16 %v624
      %v709 = vunpack.c.l.b16 %v625
      %v710 = vunpack.c.l.b16 %v626
      %v711 = vunpack.c.l.b16 %v627
      %v712 = vunpack.c.l.b16 %v628
      %v713 = vunpack.c.l.b16 %v629
      %v714 = vunpack.c.l.b16 %v630
      %v715 = vunpack.c.l.b16 %v631
      %v716 = vunpack.c.l.b16 %v632
      %v717 = vunpack.c.l.b16 %v633
      %v718 = vunpack.c.l.b16 %v634
      %v719 = vunpack.c.l.b16 %v635
      %v720 = vunpack.c.l.b16 %v636
      %v721 = vpack.c.b16 %v690, %v689
      %v722 = vpack.c.b16 %v692, %v691
      %v723 = vpack.c.b16 %v694, %v693
      %v724 = vpack.c.b16 %v696, %v695
      %v725 = vpack.c.b16 %v698, %v697
      %v726 = vpack.c.b16 %v700, %v699
      %v727 = vpack.c.b16 %v702, %v701
      %v728 = vpack.c.b16 %v704, %v703
      %v729 = vpack.c.b16 %v706, %v705
      %v730 = vpack.c.b16 %v708, %v707
      %v731 = vpack.c.b16 %v710, %v709
      %v732 = vpack.c.b16 %v712, %v711
      %v733 = vpack.c.b16 %v714, %v713
      %v734 = vpack.c.b16 %v716, %v715
      %v735 = vpack.c.b16 %v718, %v717
      %v736 = vpack.c.b16 %v720, %v719
      %753 = vmatprep.subr.bf16.mxu0 0
      %754 = vmatpush1.bf16.msra.mxu0 %v721
      %755 = vmatprep.subr.bf16.mxu0 0
      %756 = vmatpush1.bf16.msra.mxu0 %v722
      %757 = vmatprep.subr.bf16.mxu0 0
      %758 = vmatpush1.bf16.msra.mxu0 %v723
      %759 = vmatprep.subr.bf16.mxu0 0
      %760 = vmatpush1.bf16.msra.mxu0 %v724
      %761 = vmatprep.subr.bf16.mxu0 0
      %762 = vmatpush1.bf16.msra.mxu0 %v725
      %763 = vmatprep.subr.bf16.mxu0 0
      %764 = vmatpush1.bf16.msra.mxu0 %v726
      %765 = vmatprep.subr.bf16.mxu0 0
      %766 = vmatpush1.bf16.msra.mxu0 %v727
      %767 = vmatprep.subr.bf16.mxu0 0
      %768 = vmatpush1.bf16.msra.mxu0 %v728
      %769 = vmatprep.subr.bf16.mxu0 0
      %770 = vmatpush1.bf16.msra.mxu0 %v729
      %771 = vmatprep.subr.bf16.mxu0 0
      %772 = vmatpush1.bf16.msra.mxu0 %v730
      %773 = vmatprep.subr.bf16.mxu0 0
      %774 = vmatpush1.bf16.msra.mxu0 %v731
      %775 = vmatprep.subr.bf16.mxu0 0
      %776 = vmatpush1.bf16.msra.mxu0 %v732
      %777 = vmatprep.subr.bf16.mxu0 0
      %778 = vmatpush1.bf16.msra.mxu0 %v733
      %779 = vmatprep.subr.bf16.mxu0 0
      %780 = vmatpush1.bf16.msra.mxu0 %v734
      %781 = vmatprep.subr.bf16.mxu0 0
      %782 = vmatpush1.bf16.msra.mxu0 %v735
      %783 = vmatprep.subr.bf16.mxu0 0
      %784 = vmatpush1.bf16.msra.mxu0 %v736
      %785 = vmatprep.mubr.bf16.mxu0 %v650
      %786 = vmatmul.mubr.bf16.gmra.mrb[0].mxu0 %v649
      %v787 = vpop.f32.mrb[0].mxu0
      %v788 = vadd.f32 %v637, %v787
      %v789 = vpop.f32.mrb[0].mxu0
      %v790 = vpop.f32.mrb[0].mxu0
      %v791 = vadd.f32 %v638, %v790
      %v792 = vpop.f32.mrb[0].mxu0
      %793 = vmatprep.mubr.bf16.mxu0 %v652
      %794 = vmatmul.mubr.bf16.gmra.mrb[0].mxu0 %v651
      %v795 = vpop.f32.mrb[0].mxu0
      %v796 = vadd.f32 %v639, %v795
      %v797 = vpop.f32.mrb[0].mxu0
      %v798 = vpop.f32.mrb[0].mxu0
      %v799 = vpop.f32.mrb[0].mxu0
      %800 = vdwg.mxu0
      %v801 = vlaneseq
      %v802 = vand.u32 %v801, 127
      %vm803 = vcmp.lt.s32.totalorder %v802, 17
      %v804 = vsel %vm803, 0.0, -1e+09
      %v805 = vld [vmem:[%s3] sm:$0x1]
      %v806 = vld [vmem:[%s4] sm:$0x1]
      %807 = vadd.xlane.f32.xlu0 %v788
      %v808 = vpop.xlane.xlu0 %807
      %809 = vadd.xlane.f32.xlu0 %v791
      %v810 = vpop.xlane.xlu0 %809
      %811 = vadd.xlane.f32.xlu0 %v796
      %v812 = vpop.xlane.xlu0 %811
      %v813 = vrcp.pop 128.0
      %v814 = vmul.f32 %v808, %v813
      %v815 = vmul.f32 %v810, %v813
      %v816 = vmul.f32 %v812, %v813
      %v817 = vsub.f32 %v788, %v814
      %v818 = vsub.f32 %v791, %v815
      %v819 = vsub.f32 %v796, %v816
      %v820 = vmul.f32 %v817, %v817
      %v821 = vmul.f32 %v818, %v818
      %v822 = vmul.f32 %v819, %v819
      %823 = vadd.xlane.f32.xlu0 %v820
      %v824 = vpop.xlane.xlu0 %823
      %825 = vadd.xlane.f32.xlu0 %v821
      %v826 = vpop.xlane.xlu0 %825
      %827 = vadd.xlane.f32.xlu0 %v822
      %v828 = vpop.xlane.xlu0 %827
      %v829 = vmul.f32 %v824, %v813
      %v830 = vmul.f32 %v826, %v813
      %v831 = vmul.f32 %v828, %v813
      %v832 = vadd.f32 %v829, 1e-06
      %v833 = vadd.f32 %v830, 1e-06
      %v834 = vadd.f32 %v831, 1e-06
      %v835 = vrsqrt.pop %v832
      %v836 = vrsqrt.pop %v833
      %v837 = vrsqrt.pop %v834
      %v838 = vmul.f32 %v817, %v835
      %v839 = vmul.f32 %v818, %v836
      %v840 = vmul.f32 %v819, %v837
      %v842 = vlaneseq
      %v843 = vshrl.u32 %v842, 7
      %v844 = vsub.s32 0, %v843
      %v845 = vrot.slane %v805, %v844
      %v847 = vmul.f32 %v838, %v845
      %v848 = vmul.f32 %v839, %v845
      %v849 = vmul.f32 %v840, %v845
      %v851 = vlaneseq
      %v852 = vshrl.u32 %v851, 7
      %v853 = vsub.s32 0, %v852
      %v854 = vrot.slane %v806, %v853
      %v856 = vadd.f32 %v847, %v854
      %v857 = vadd.f32 %v848, %v854
      %v858 = vadd.f32 %v849, %v854
      %v859 = vpack.c.bf16 %v857, %v856
      %v860 = vpack.c.bf16 %v858, %v858
      %v861 = vld [vmem:[%s5] sm:$0xff]
      %v862 = vld [vmem:[%s5 + $0x8] sm:$0xf]
      %v863 = vld [vmem:[%s5 + $0xc] sm:$0xff]
      %v864 = vld [vmem:[%s5 + $0x14] sm:$0xf]
      %v865 = vld [vmem:[%s5 + $0x18] sm:$0xff]
      %v866 = vld [vmem:[%s5 + $0x20] sm:$0xf]
      %v867 = vld [vmem:[%s5 + $0x24] sm:$0xff]
      %v868 = vld [vmem:[%s5 + $0x2c] sm:$0xf]
      %v869 = vld [vmem:[%s5 + $0x30] sm:$0xff]
      %v870 = vld [vmem:[%s5 + $0x38] sm:$0xf]
      %v871 = vld [vmem:[%s5 + $0x3c] sm:$0xff]
      %v872 = vld [vmem:[%s5 + $0x44] sm:$0xf]
      %v873 = vld [vmem:[%s5 + $0x48] sm:$0xff]
      %v874 = vld [vmem:[%s5 + $0x50] sm:$0xf]
      %v875 = vld [vmem:[%s5 + $0x54] sm:$0xff]
      %v876 = vld [vmem:[%s5 + $0x5c] sm:$0xf]
      %v877 = vld [vmem:[%s5 + $0x60] sm:$0xff]
      %v878 = vld [vmem:[%s5 + $0x68] sm:$0xf]
      %v879 = vld [vmem:[%s5 + $0x6c] sm:$0xff]
      %v880 = vld [vmem:[%s5 + $0x74] sm:$0xf]
      %v881 = vld [vmem:[%s5 + $0x78] sm:$0xff]
      %v882 = vld [vmem:[%s5 + $0x80] sm:$0xf]
      %v883 = vld [vmem:[%s5 + $0x84] sm:$0xff]
      %v884 = vld [vmem:[%s5 + $0x8c] sm:$0xf]
      %v885 = vld [vmem:[%s5 + $0x90] sm:$0xff]
      %v886 = vld [vmem:[%s5 + $0x98] sm:$0xf]
      %v887 = vld [vmem:[%s5 + $0x9c] sm:$0xff]
      %v888 = vld [vmem:[%s5 + $0xa4] sm:$0xf]
      %v889 = vld [vmem:[%s5 + $0xa8] sm:$0xff]
      %v890 = vld [vmem:[%s5 + $0xb0] sm:$0xf]
      %v891 = vld [vmem:[%s5 + $0xb4] sm:$0xff]
      %v892 = vld [vmem:[%s5 + $0xbc] sm:$0xf]
      %v893 = vld [vmem:[%s6] sm:$0x7]
      %v895 = vlaneseq
      %v896 = vshrl.u32 %v895, 7
      %v897 = vsub.s32 0, %v896
      %v898 = vrot.slane %v893, %v897
      %v899 = vlaneseq
      %v900 = vshrl.u32 %v899, 7
      %v901 = vsub.s32 1, %v900
      %v902 = vrot.slane %v893, %v901
      %v903 = vlaneseq
      %v904 = vshrl.u32 %v903, 7
      %v905 = vsub.s32 2, %v904
      %v906 = vrot.slane %v893, %v905
      %v942 = vunpack.c.l.b16 %v861
      %v943 = vunpack.c.h.b16 %v861
      %v944 = vunpack.c.l.b16 %v862
      %v945 = vunpack.c.l.b16 %v863
      %v946 = vunpack.c.h.b16 %v863
      %v947 = vunpack.c.l.b16 %v864
      %v948 = vunpack.c.l.b16 %v865
      %v949 = vunpack.c.h.b16 %v865
      %v950 = vunpack.c.l.b16 %v866
      %v951 = vunpack.c.l.b16 %v867
      %v952 = vunpack.c.h.b16 %v867
      %v953 = vunpack.c.l.b16 %v868
      %v954 = vunpack.c.l.b16 %v869
      %v955 = vunpack.c.h.b16 %v869
      %v956 = vunpack.c.l.b16 %v870
      %v957 = vunpack.c.l.b16 %v871
      %v958 = vunpack.c.h.b16 %v871
      %v959 = vunpack.c.l.b16 %v872
      %v960 = vunpack.c.l.b16 %v873
      %v961 = vunpack.c.h.b16 %v873
      %v962 = vunpack.c.l.b16 %v874
      %v963 = vunpack.c.l.b16 %v875
      %v964 = vunpack.c.h.b16 %v875
      %v965 = vunpack.c.l.b16 %v876
      %v966 = vunpack.c.l.b16 %v877
      %v967 = vunpack.c.h.b16 %v877
      %v968 = vunpack.c.l.b16 %v878
      %v969 = vunpack.c.l.b16 %v879
      %v970 = vunpack.c.h.b16 %v879
      %v971 = vunpack.c.l.b16 %v880
      %v972 = vunpack.c.l.b16 %v881
      %v973 = vunpack.c.h.b16 %v881
      %v974 = vunpack.c.l.b16 %v882
      %v975 = vunpack.c.l.b16 %v883
      %v976 = vunpack.c.h.b16 %v883
      %v977 = vunpack.c.l.b16 %v884
      %v978 = vunpack.c.l.b16 %v885
      %v979 = vunpack.c.h.b16 %v885
      %v980 = vunpack.c.l.b16 %v886
      %v981 = vunpack.c.l.b16 %v887
      %v982 = vunpack.c.h.b16 %v887
      %v983 = vunpack.c.l.b16 %v888
      %v984 = vunpack.c.l.b16 %v889
      %v985 = vunpack.c.h.b16 %v889
      %v986 = vunpack.c.l.b16 %v890
      %v987 = vunpack.c.l.b16 %v891
      %v988 = vunpack.c.h.b16 %v891
      %v989 = vunpack.c.l.b16 %v892
      %v990 = vpack.c.b16 %v945, %v942
      %v991 = vpack.c.b16 %v946, %v943
      %v992 = vpack.c.b16 %v947, %v944
      %v993 = vpack.c.b16 %v951, %v948
      %v994 = vpack.c.b16 %v952, %v949
      %v995 = vpack.c.b16 %v953, %v950
      %v996 = vpack.c.b16 %v957, %v954
      %v997 = vpack.c.b16 %v958, %v955
      %v998 = vpack.c.b16 %v959, %v956
      %v999 = vpack.c.b16 %v963, %v960
      %v1000 = vpack.c.b16 %v964, %v961
      %v1001 = vpack.c.b16 %v965, %v962
      %v1002 = vpack.c.b16 %v969, %v966
      %v1003 = vpack.c.b16 %v970, %v967
      %v1004 = vpack.c.b16 %v971, %v968
      %v1005 = vpack.c.b16 %v975, %v972
      %v1006 = vpack.c.b16 %v976, %v973
      %v1007 = vpack.c.b16 %v977, %v974
      %v1008 = vpack.c.b16 %v981, %v978
      %v1009 = vpack.c.b16 %v982, %v979
      %v1010 = vpack.c.b16 %v983, %v980
      %v1011 = vpack.c.b16 %v987, %v984
      %v1012 = vpack.c.b16 %v988, %v985
      %v1013 = vpack.c.b16 %v989, %v986
      %1038 = vmatprep.subr.bf16.mxu0 %v991
      %1039 = vmatpush1.bf16.msra.mxu0 %v990
      %1040 = vmatprep.subr.bf16.mxu0 %v994
      %1041 = vmatpush1.bf16.msra.mxu0 %v993
      %1042 = vmatprep.subr.bf16.mxu0 %v997
      %1043 = vmatpush1.bf16.msra.mxu0 %v996
      %1044 = vmatprep.subr.bf16.mxu0 %v1000
      %1045 = vmatpush1.bf16.msra.mxu0 %v999
      %1046 = vmatprep.subr.bf16.mxu0 %v1003
      %1047 = vmatpush1.bf16.msra.mxu0 %v1002
      %1048 = vmatprep.subr.bf16.mxu0 %v1006
      %1049 = vmatpush1.bf16.msra.mxu0 %v1005
      %1050 = vmatprep.subr.bf16.mxu0 %v1009
      %1051 = vmatpush1.bf16.msra.mxu0 %v1008
      %1052 = vmatprep.subr.bf16.mxu0 %v1012
      %1053 = vmatpush1.bf16.msra.mxu0 %v1011
      %1054 = vmatprep.subr.bf16.mxu0 0
      %1055 = vmatpush1.bf16.msra.mxu0 0
      %1056 = vmatprep.subr.bf16.mxu0 0
      %1057 = vmatpush1.bf16.msra.mxu0 0
      %1058 = vmatprep.subr.bf16.mxu0 0
      %1059 = vmatpush1.bf16.msra.mxu0 0
      %1060 = vmatprep.subr.bf16.mxu0 0
      %1061 = vmatpush1.bf16.msra.mxu0 0
      %1062 = vmatprep.subr.bf16.mxu0 0
      %1063 = vmatpush1.bf16.msra.mxu0 0
      %1064 = vmatprep.subr.bf16.mxu0 0
      %1065 = vmatpush1.bf16.msra.mxu0 0
      %1066 = vmatprep.subr.bf16.mxu0 0
      %1067 = vmatpush1.bf16.msra.mxu0 0
      %1068 = vmatprep.subr.bf16.mxu0 0
      %1069 = vmatpush1.bf16.msra.mxu0 0
      %1070 = vmatprep.mubr.bf16.mxu0 0
      %1071 = vmatmul.mubr.bf16.gmra.mrb[0].mxu0 %v859
      %v1072 = vpop.f32.mrb[0].mxu0
      %v1073 = vadd.f32 %v898, %v1072
      %v1074 = vpop.f32.mrb[0].mxu0
      %v1075 = vadd.f32 %v902, %v1074
      %v1076 = vpop.f32.mrb[0].mxu0
      %v1077 = vadd.f32 %v898, %v1076
      %v1078 = vpop.f32.mrb[0].mxu0
      %v1079 = vadd.f32 %v902, %v1078
      %1080 = vmatprep.mubr.bf16.mxu0 0
      %1081 = vmatmul.mubr.bf16.gmra.mrb[0].mxu0 %v860
      %v1082 = vpop.f32.mrb[0].mxu0
      %v1083 = vadd.f32 %v898, %v1082
      %v1084 = vpop.f32.mrb[0].mxu0
      %v1085 = vadd.f32 %v902, %v1084
      %v1086 = vpop.f32.mrb[0].mxu0
      %v1087 = vpop.f32.mrb[0].mxu0
      %1088 = vdwg.mxu0
      %1089 = vmatprep.subr.bf16.mxu0 0
      %1090 = vmatpush1.bf16.msra.mxu0 %v992
      %1091 = vmatprep.subr.bf16.mxu0 0
      %1092 = vmatpush1.bf16.msra.mxu0 %v995
      %1093 = vmatprep.subr.bf16.mxu0 0
      %1094 = vmatpush1.bf16.msra.mxu0 %v998
      %1095 = vmatprep.subr.bf16.mxu0 0
      %1096 = vmatpush1.bf16.msra.mxu0 %v1001
      %1097 = vmatprep.subr.bf16.mxu0 0
      %1098 = vmatpush1.bf16.msra.mxu0 %v1004
      %1099 = vmatprep.subr.bf16.mxu0 0
      %1100 = vmatpush1.bf16.msra.mxu0 %v1007
      %1101 = vmatprep.subr.bf16.mxu0 0
      %1102 = vmatpush1.bf16.msra.mxu0 %v1010
      %1103 = vmatprep.subr.bf16.mxu0 0
      %1104 = vmatpush1.bf16.msra.mxu0 %v1013
      %1105 = vmatprep.subr.bf16.mxu0 0
      %1106 = vmatpush1.bf16.msra.mxu0 0
      %1107 = vmatprep.subr.bf16.mxu0 0
      %1108 = vmatpush1.bf16.msra.mxu0 0
      %1109 = vmatprep.subr.bf16.mxu0 0
      %1110 = vmatpush1.bf16.msra.mxu0 0
      %1111 = vmatprep.subr.bf16.mxu0 0
      %1112 = vmatpush1.bf16.msra.mxu0 0
      %1113 = vmatprep.subr.bf16.mxu0 0
      %1114 = vmatpush1.bf16.msra.mxu0 0
      %1115 = vmatprep.subr.bf16.mxu0 0
      %1116 = vmatpush1.bf16.msra.mxu0 0
      %1117 = vmatprep.subr.bf16.mxu0 0
      %1118 = vmatpush1.bf16.msra.mxu0 0
      %1119 = vmatprep.subr.bf16.mxu0 0
      %1120 = vmatpush1.bf16.msra.mxu0 0
      %1121 = vmatprep.mubr.bf16.mxu0 0
      %1122 = vmatmul.mubr.bf16.gmra.mrb[0].mxu0 %v859
      %v1123 = vpop.f32.mrb[0].mxu0
      %v1124 = vadd.f32 %v906, %v1123
      %v1125 = vpop.f32.mrb[0].mxu0
      %v1126 = vpop.f32.mrb[0].mxu0
      %v1127 = vadd.f32 %v906, %v1126
      %v1128 = vpop.f32.mrb[0].mxu0
      %1129 = vmatprep.mubr.bf16.mxu0 0
      %1130 = vmatmul.mubr.bf16.gmra.mrb[0].mxu0 %v860
      %v1131 = vpop.f32.mrb[0].mxu0
      %v1132 = vadd.f32 %v906, %v1131
      %v1133 = vpop.f32.mrb[0].mxu0
      %v1134 = vpop.f32.mrb[0].mxu0
      %v1135 = vpop.f32.mrb[0].mxu0
      %1136 = vdwg.mxu0
      %v1137 = vpack.c.bf16 %v1077, %v1073
      %v1138 = vpack.c.bf16 %v1083, %v1083
      %v1139 = vpack.c.bf16 %v1079, %v1075
      %v1140 = vpack.c.bf16 %v1085, %v1085
      %vm1141 = vcmask 261120
      %v1143 = vsel %vm1141, %v1137, 0
      %v1146 = vsel %vm1141, %v1138, 0
      %v1149 = vsel %vm1141, %v1139, 0
      %v1152 = vsel %vm1141, %v1140, 0
      %1154 = vmatprep.subr.bf16.mxu0 0
      %1155 = vmatpush1.bf16.xpose.msra.mxu0 %v1149
      %1156 = vmatprep.subr.bf16.mxu0 0
      %1157 = vmatpush1.bf16.xpose.msra.mxu0 %v1152
      %1158 = vmatprep.subr.bf16.mxu0 0
      %1159 = vmatpush1.bf16.xpose.msra.mxu0 0
      %1160 = vmatprep.subr.bf16.mxu0 0
      %1161 = vmatpush1.bf16.xpose.msra.mxu0 0
      %1162 = vmatprep.subr.bf16.mxu0 0
      %1163 = vmatpush1.bf16.xpose.msra.mxu0 0
      %1164 = vmatprep.subr.bf16.mxu0 0
      %1165 = vmatpush1.bf16.xpose.msra.mxu0 0
      %1166 = vmatprep.subr.bf16.mxu0 0
      %1167 = vmatpush1.bf16.xpose.msra.mxu0 0
      %1168 = vmatprep.subr.bf16.mxu0 0
      %1169 = vmatpush1.bf16.xpose.msra.mxu0 0
      %1170 = vmatprep.subr.bf16.mxu0 0
      %1171 = vmatpush1.bf16.xpose.msra.mxu0 0
      %1172 = vmatprep.subr.bf16.mxu0 0
      %1173 = vmatpush1.bf16.xpose.msra.mxu0 0
      %1174 = vmatprep.subr.bf16.mxu0 0
      %1175 = vmatpush1.bf16.xpose.msra.mxu0 0
      %1176 = vmatprep.subr.bf16.mxu0 0
      %1177 = vmatpush1.bf16.xpose.msra.mxu0 0
      %1178 = vmatprep.subr.bf16.mxu0 0
      %1179 = vmatpush1.bf16.xpose.msra.mxu0 0
      %1180 = vmatprep.subr.bf16.mxu0 0
      %1181 = vmatpush1.bf16.xpose.msra.mxu0 0
      %1182 = vmatprep.subr.bf16.mxu0 0
      %1183 = vmatpush1.bf16.xpose.msra.mxu0 0
      %1184 = vmatprep.subr.bf16.mxu0 0
      %1185 = vmatpush1.bf16.xpose.msra.mxu0 0
      %1186 = vmatprep.mubr.bf16.mxu0 0
      %1187 = vmatmul.mubr.bf16.gmra.mrb[0].mxu0 %v1143
      %v1188 = vpop.f32.mrb[0].mxu0
      %v1189 = vadd.f32 %v804, %v1188
      %v1190 = vpop.f32.mrb[0].mxu0
      %v1191 = vpop.f32.mrb[0].mxu0
      %v1192 = vadd.f32 %v804, %v1191
      %v1193 = vpop.f32.mrb[0].mxu0
      %1194 = vmatprep.mubr.bf16.mxu0 0
      %1195 = vmatmul.mubr.bf16.gmra.mrb[0].mxu0 %v1146
      %v1196 = vpop.f32.mrb[0].mxu0
      %v1197 = vadd.f32 %v804, %v1196
      %v1198 = vpop.f32.mrb[0].mxu0
      %v1199 = vpop.f32.mrb[0].mxu0
      %v1200 = vpop.f32.mrb[0].mxu0
      %1201 = vdwg.mxu0
      %vm1202 = vcmask 195584
      %v1203 = vsel %vm1202, %v1189, -inf
      %1204 = vmax.xlane.f32.xlu0 %v1203
      %v1205 = vpop.xlane.xlu0 %1204
      %v1206 = vsel %vm1202, %v1192, -inf
      %1207 = vmax.xlane.f32.xlu0 %v1206
      %v1208 = vpop.xlane.xlu0 %1207
      %v1209 = vsel %vm1202, %v1197, -inf
      %1210 = vmax.xlane.f32.xlu0 %v1209
      %v1211 = vpop.xlane.xlu0 %1210
      %v1212 = vsub.f32 %v1189, %v1205
      %v1213 = vsub.f32 %v1192, %v1208
      %v1214 = vsub.f32 %v1197, %v1211
      %v1215 = vmul.f32 %v1212, 1.442695
      %v1216 = vpow.pop %v1215
      %v1217 = vmul.f32 %v1213, 1.442695
      %v1218 = vpow.pop %v1217
      %v1219 = vmul.f32 %v1214, 1.442695
      %v1220 = vpow.pop %v1219
      %v1221 = vsel %vm1202, %v1216, 0.0
      %1222 = vadd.xlane.f32.xlu0 %v1221
      %v1223 = vpop.xlane.xlu0 %1222
      %v1224 = vsel %vm1202, %v1218, 0.0
      %1225 = vadd.xlane.f32.xlu0 %v1224
      %v1226 = vpop.xlane.xlu0 %1225
      %v1227 = vsel %vm1202, %v1220, 0.0
      %1228 = vadd.xlane.f32.xlu0 %v1227
      %v1229 = vpop.xlane.xlu0 %1228
      %v1230 = vrcp.pop %v1223
      %v1231 = vmul.f32 %v1216, %v1230
      %v1232 = vrcp.pop %v1226
      %v1233 = vmul.f32 %v1218, %v1232
      %v1234 = vrcp.pop %v1229
      %v1235 = vmul.f32 %v1220, %v1234
      %v1236 = vpack.c.bf16 %v1233, %v1231
      %v1237 = vpack.c.bf16 %v1235, %v1235
      %v1238 = vpack.c.bf16 %v1127, %v1124
      %v1239 = vpack.c.bf16 %v1132, %v1132
      %v1241 = vsel %vm1202, %v1236, 0
      %v1244 = vsel %vm1202, %v1237, 0
      %vm1246 = vcmask 1043456
      %v1248 = vsel %vm1246, %v1239, 0
      %1250 = vmatprep.subr.bf16.mxu0 0
      %1251 = vmatpush1.bf16.msra.mxu0 %v1238
      %1252 = vmatprep.subr.bf16.mxu0 0
      %1253 = vmatpush1.bf16.msra.mxu0 %v1248
      %1254 = vmatprep.subr.bf16.mxu0 0
      %1255 = vmatpush1.bf16.msra.mxu0 0
      %1256 = vmatprep.subr.bf16.mxu0 0
      %1257 = vmatpush1.bf16.msra.mxu0 0
      %1258 = vmatprep.subr.bf16.mxu0 0
      %1259 = vmatpush1.bf16.msra.mxu0 0
      %1260 = vmatprep.subr.bf16.mxu0 0
      %1261 = vmatpush1.bf16.msra.mxu0 0
      %1262 = vmatprep.subr.bf16.mxu0 0
      %1263 = vmatpush1.bf16.msra.mxu0 0
      %1264 = vmatprep.subr.bf16.mxu0 0
      %1265 = vmatpush1.bf16.msra.mxu0 0
      %1266 = vmatprep.subr.bf16.mxu0 0
      %1267 = vmatpush1.bf16.msra.mxu0 0
      %1268 = vmatprep.subr.bf16.mxu0 0
      %1269 = vmatpush1.bf16.msra.mxu0 0
      %1270 = vmatprep.subr.bf16.mxu0 0
      %1271 = vmatpush1.bf16.msra.mxu0 0
      %1272 = vmatprep.subr.bf16.mxu0 0
      %1273 = vmatpush1.bf16.msra.mxu0 0
      %1274 = vmatprep.subr.bf16.mxu0 0
      %1275 = vmatpush1.bf16.msra.mxu0 0
      %1276 = vmatprep.subr.bf16.mxu0 0
      %1277 = vmatpush1.bf16.msra.mxu0 0
      %1278 = vmatprep.subr.bf16.mxu0 0
      %1279 = vmatpush1.bf16.msra.mxu0 0
      %1280 = vmatprep.subr.bf16.mxu0 0
      %1281 = vmatpush1.bf16.msra.mxu0 0
      %1282 = vmatprep.mubr.bf16.mxu0 0
      %1283 = vmatmul.mubr.bf16.gmra.mrb[0].mxu0 %v1241
      %v1284 = vpop.f32.mrb[0].mxu0
      %v1285 = vadd.f32 0.0, %v1284
      %v1286 = vpop.f32.mrb[0].mxu0
      %v1287 = vpop.f32.mrb[0].mxu0
      %v1288 = vadd.f32 0.0, %v1287
      %v1289 = vpop.f32.mrb[0].mxu0
      %1290 = vmatprep.mubr.bf16.mxu0 0
      %1291 = vmatmul.mubr.bf16.gmra.mrb[0].mxu0 %v1244
      %v1292 = vpop.f32.mrb[0].mxu0
      %v1293 = vadd.f32 0.0, %v1292
      %v1294 = vpop.f32.mrb[0].mxu0
      %v1295 = vpop.f32.mrb[0].mxu0
      %v1296 = vpop.f32.mrb[0].mxu0
      %1297 = vdwg.mxu0
      %1300 = vrot.lane.b32.xlu0 %v1137, 96
      %v1301 = vpop.permute.xlu0 %1300
      %1302 = vrot.lane.b32.xlu0 %v1138, 96
      %v1303 = vpop.permute.xlu0 %1302
      %1306 = vrot.lane.b32.xlu0 %v1139, 96
      %v1307 = vpop.permute.xlu0 %1306
      %1308 = vrot.lane.b32.xlu0 %v1140, 96
      %v1309 = vpop.permute.xlu0 %1308
      %v1311 = vsel %vm1141, %v1301, 0
      %v1314 = vsel %vm1141, %v1303, 0
      %v1317 = vsel %vm1141, %v1307, 0
      %v1320 = vsel %vm1141, %v1309, 0
      %1322 = vmatprep.subr.bf16.mxu0 0
      %1323 = vmatpush1.bf16.xpose.msra.mxu0 %v1317
      %1324 = vmatprep.subr.bf16.mxu0 0
      %1325 = vmatpush1.bf16.xpose.msra.mxu0 %v1320
      %1326 = vmatprep.subr.bf16.mxu0 0
      %1327 = vmatpush1.bf16.xpose.msra.mxu0 0
      %1328 = vmatprep.subr.bf16.mxu0 0
      %1329 = vmatpush1.bf16.xpose.msra.mxu0 0
      %1330 = vmatprep.subr.bf16.mxu0 0
      %1331 = vmatpush1.bf16.xpose.msra.mxu0 0
      %1332 = vmatprep.subr.bf16.mxu0 0
      %1333 = vmatpush1.bf16.xpose.msra.mxu0 0
      %1334 = vmatprep.subr.bf16.mxu0 0
      %1335 = vmatpush1.bf16.xpose.msra.mxu0 0
      %1336 = vmatprep.subr.bf16.mxu0 0
      %1337 = vmatpush1.bf16.xpose.msra.mxu0 0
      %1338 = vmatprep.subr.bf16.mxu0 0
      %1339 = vmatpush1.bf16.xpose.msra.mxu0 0
      %1340 = vmatprep.subr.bf16.mxu0 0
      %1341 = vmatpush1.bf16.xpose.msra.mxu0 0
      %1342 = vmatprep.subr.bf16.mxu0 0
      %1343 = vmatpush1.bf16.xpose.msra.mxu0 0
      %1344 = vmatprep.subr.bf16.mxu0 0
      %1345 = vmatpush1.bf16.xpose.msra.mxu0 0
      %1346 = vmatprep.subr.bf16.mxu0 0
      %1347 = vmatpush1.bf16.xpose.msra.mxu0 0
      %1348 = vmatprep.subr.bf16.mxu0 0
      %1349 = vmatpush1.bf16.xpose.msra.mxu0 0
      %1350 = vmatprep.subr.bf16.mxu0 0
      %1351 = vmatpush1.bf16.xpose.msra.mxu0 0
      %1352 = vmatprep.subr.bf16.mxu0 0
      %1353 = vmatpush1.bf16.xpose.msra.mxu0 0
      %1354 = vmatprep.mubr.bf16.mxu0 0
      %1355 = vmatmul.mubr.bf16.gmra.mrb[0].mxu0 %v1311
      %v1356 = vpop.f32.mrb[0].mxu0
      %v1357 = vadd.f32 %v804, %v1356
      %v1358 = vpop.f32.mrb[0].mxu0
      %v1359 = vpop.f32.mrb[0].mxu0
      %v1360 = vadd.f32 %v804, %v1359
      %v1361 = vpop.f32.mrb[0].mxu0
      %1362 = vmatprep.mubr.bf16.mxu0 0
      %1363 = vmatmul.mubr.bf16.gmra.mrb[0].mxu0 %v1314
      %v1364 = vpop.f32.mrb[0].mxu0
      %v1365 = vadd.f32 %v804, %v1364
      %v1366 = vpop.f32.mrb[0].mxu0
      %v1367 = vpop.f32.mrb[0].mxu0
      %v1368 = vpop.f32.mrb[0].mxu0
      %1369 = vdwg.mxu0
      %v1370 = vsel %vm1202, %v1357, -inf
      %1371 = vmax.xlane.f32.xlu0 %v1370
      %v1372 = vpop.xlane.xlu0 %1371
      %v1373 = vsel %vm1202, %v1360, -inf
      %1374 = vmax.xlane.f32.xlu0 %v1373
      %v1375 = vpop.xlane.xlu0 %1374
      %v1376 = vsel %vm1202, %v1365, -inf
      %1377 = vmax.xlane.f32.xlu0 %v1376
      %v1378 = vpop.xlane.xlu0 %1377
      %v1379 = vsub.f32 %v1357, %v1372
      %v1380 = vsub.f32 %v1360, %v1375
      %v1381 = vsub.f32 %v1365, %v1378
      %v1382 = vmul.f32 %v1379, 1.442695
      %v1383 = vpow.pop %v1382
      %v1384 = vmul.f32 %v1380, 1.442695
      %v1385 = vpow.pop %v1384
      %v1386 = vmul.f32 %v1381, 1.442695
      %v1387 = vpow.pop %v1386
      %v1388 = vsel %vm1202, %v1383, 0.0
      %1389 = vadd.xlane.f32.xlu0 %v1388
      %v1390 = vpop.xlane.xlu0 %1389
      %v1391 = vsel %vm1202, %v1385, 0.0
      %1392 = vadd.xlane.f32.xlu0 %v1391
      %v1393 = vpop.xlane.xlu0 %1392
      %v1394 = vsel %vm1202, %v1387, 0.0
      %1395 = vadd.xlane.f32.xlu0 %v1394
      %v1396 = vpop.xlane.xlu0 %1395
      %v1397 = vrcp.pop %v1390
      %v1398 = vmul.f32 %v1383, %v1397
      %v1399 = vrcp.pop %v1393
      %v1400 = vmul.f32 %v1385, %v1399
      %v1401 = vrcp.pop %v1396
      %v1402 = vmul.f32 %v1387, %v1401
      %v1403 = vpack.c.bf16 %v1400, %v1398
      %v1404 = vpack.c.bf16 %v1402, %v1402
      %1407 = vrot.lane.b32.xlu0 %v1238, 96
      %v1408 = vpop.permute.xlu0 %1407
      %1409 = vrot.lane.b32.xlu0 %v1239, 96
      %v1410 = vpop.permute.xlu0 %1409
      %v1413 = vsel %vm1202, %v1403, 0
      %v1416 = vsel %vm1202, %v1404, 0
      %v1419 = vsel %vm1246, %v1410, 0
      %1421 = vmatprep.subr.bf16.mxu0 0
      %1422 = vmatpush1.bf16.msra.mxu0 %v1408
      %1423 = vmatprep.subr.bf16.mxu0 0
      %1424 = vmatpush1.bf16.msra.mxu0 %v1419
      %1425 = vmatprep.subr.bf16.mxu0 0
      %1426 = vmatpush1.bf16.msra.mxu0 0
      %1427 = vmatprep.subr.bf16.mxu0 0
      %1428 = vmatpush1.bf16.msra.mxu0 0
      %1429 = vmatprep.subr.bf16.mxu0 0
      %1430 = vmatpush1.bf16.msra.mxu0 0
      %1431 = vmatprep.subr.bf16.mxu0 0
      %1432 = vmatpush1.bf16.msra.mxu0 0
      %1433 = vmatprep.subr.bf16.mxu0 0
      %1434 = vmatpush1.bf16.msra.mxu0 0
      %1435 = vmatprep.subr.bf16.mxu0 0
      %1436 = vmatpush1.bf16.msra.mxu0 0
      %1437 = vmatprep.subr.bf16.mxu0 0
      %1438 = vmatpush1.bf16.msra.mxu0 0
      %1439 = vmatprep.subr.bf16.mxu0 0
      %1440 = vmatpush1.bf16.msra.mxu0 0
      %1441 = vmatprep.subr.bf16.mxu0 0
      %1442 = vmatpush1.bf16.msra.mxu0 0
      %1443 = vmatprep.subr.bf16.mxu0 0
      %1444 = vmatpush1.bf16.msra.mxu0 0
      %1445 = vmatprep.subr.bf16.mxu0 0
      %1446 = vmatpush1.bf16.msra.mxu0 0
      %1447 = vmatprep.subr.bf16.mxu0 0
      %1448 = vmatpush1.bf16.msra.mxu0 0
      %1449 = vmatprep.subr.bf16.mxu0 0
      %1450 = vmatpush1.bf16.msra.mxu0 0
      %1451 = vmatprep.subr.bf16.mxu0 0
      %1452 = vmatpush1.bf16.msra.mxu0 0
      %1453 = vmatprep.mubr.bf16.mxu0 0
      %1454 = vmatmul.mubr.bf16.gmra.mrb[0].mxu0 %v1413
      %v1455 = vpop.f32.mrb[0].mxu0
      %v1456 = vadd.f32 0.0, %v1455
      %v1457 = vpop.f32.mrb[0].mxu0
      %v1458 = vpop.f32.mrb[0].mxu0
      %v1459 = vadd.f32 0.0, %v1458
      %v1460 = vpop.f32.mrb[0].mxu0
      %1461 = vmatprep.mubr.bf16.mxu0 0
      %1462 = vmatmul.mubr.bf16.gmra.mrb[0].mxu0 %v1416
      %v1463 = vpop.f32.mrb[0].mxu0
      %v1464 = vadd.f32 0.0, %v1463
      %v1465 = vpop.f32.mrb[0].mxu0
      %v1466 = vpop.f32.mrb[0].mxu0
      %v1467 = vpop.f32.mrb[0].mxu0
      %1468 = vdwg.mxu0
      %1469 = vrot.lane.b32.xlu0 %v1137, 64
      %v1470 = vpop.permute.xlu0 %1469
      %1471 = vrot.lane.b32.xlu0 %v1138, 64
      %v1472 = vpop.permute.xlu0 %1471
      %1473 = vrot.lane.b32.xlu0 %v1139, 64
      %v1474 = vpop.permute.xlu0 %1473
      %1475 = vrot.lane.b32.xlu0 %v1140, 64
      %v1476 = vpop.permute.xlu0 %1475
      %v1478 = vsel %vm1141, %v1470, 0
      %v1481 = vsel %vm1141, %v1472, 0
      %v1484 = vsel %vm1141, %v1474, 0
      %v1487 = vsel %vm1141, %v1476, 0
      %1489 = vmatprep.subr.bf16.mxu0 0
      %1490 = vmatpush1.bf16.xpose.msra.mxu0 %v1484
      %1491 = vmatprep.subr.bf16.mxu0 0
      %1492 = vmatpush1.bf16.xpose.msra.mxu0 %v1487
      %1493 = vmatprep.subr.bf16.mxu0 0
      %1494 = vmatpush1.bf16.xpose.msra.mxu0 0
      %1495 = vmatprep.subr.bf16.mxu0 0
      %1496 = vmatpush1.bf16.xpose.msra.mxu0 0
      %1497 = vmatprep.subr.bf16.mxu0 0
      %1498 = vmatpush1.bf16.xpose.msra.mxu0 0
      %1499 = vmatprep.subr.bf16.mxu0 0
      %1500 = vmatpush1.bf16.xpose.msra.mxu0 0
      %1501 = vmatprep.subr.bf16.mxu0 0
      %1502 = vmatpush1.bf16.xpose.msra.mxu0 0
      %1503 = vmatprep.subr.bf16.mxu0 0
      %1504 = vmatpush1.bf16.xpose.msra.mxu0 0
      %1505 = vmatprep.subr.bf16.mxu0 0
      %1506 = vmatpush1.bf16.xpose.msra.mxu0 0
      %1507 = vmatprep.subr.bf16.mxu0 0
      %1508 = vmatpush1.bf16.xpose.msra.mxu0 0
      %1509 = vmatprep.subr.bf16.mxu0 0
      %1510 = vmatpush1.bf16.xpose.msra.mxu0 0
      %1511 = vmatprep.subr.bf16.mxu0 0
      %1512 = vmatpush1.bf16.xpose.msra.mxu0 0
      %1513 = vmatprep.subr.bf16.mxu0 0
      %1514 = vmatpush1.bf16.xpose.msra.mxu0 0
      %1515 = vmatprep.subr.bf16.mxu0 0
      %1516 = vmatpush1.bf16.xpose.msra.mxu0 0
      %1517 = vmatprep.subr.bf16.mxu0 0
      %1518 = vmatpush1.bf16.xpose.msra.mxu0 0
      %1519 = vmatprep.subr.bf16.mxu0 0
      %1520 = vmatpush1.bf16.xpose.msra.mxu0 0
      %1521 = vmatprep.mubr.bf16.mxu0 0
      %1522 = vmatmul.mubr.bf16.gmra.mrb[0].mxu0 %v1478
      %v1523 = vpop.f32.mrb[0].mxu0
      %v1524 = vadd.f32 %v804, %v1523
      %v1525 = vpop.f32.mrb[0].mxu0
      %v1526 = vpop.f32.mrb[0].mxu0
      %v1527 = vadd.f32 %v804, %v1526
      %v1528 = vpop.f32.mrb[0].mxu0
      %1529 = vmatprep.mubr.bf16.mxu0 0
      %1530 = vmatmul.mubr.bf16.gmra.mrb[0].mxu0 %v1481
      %v1531 = vpop.f32.mrb[0].mxu0
      %v1532 = vadd.f32 %v804, %v1531
      %v1533 = vpop.f32.mrb[0].mxu0
      %v1534 = vpop.f32.mrb[0].mxu0
      %v1535 = vpop.f32.mrb[0].mxu0
      %1536 = vdwg.mxu0
      %v1537 = vsel %vm1202, %v1524, -inf
      %1538 = vmax.xlane.f32.xlu0 %v1537
      %v1539 = vpop.xlane.xlu0 %1538
      %v1540 = vsel %vm1202, %v1527, -inf
      %1541 = vmax.xlane.f32.xlu0 %v1540
      %v1542 = vpop.xlane.xlu0 %1541
      %v1543 = vsel %vm1202, %v1532, -inf
      %1544 = vmax.xlane.f32.xlu0 %v1543
      %v1545 = vpop.xlane.xlu0 %1544
      %v1546 = vsub.f32 %v1524, %v1539
      %v1547 = vsub.f32 %v1527, %v1542
      %v1548 = vsub.f32 %v1532, %v1545
      %v1549 = vmul.f32 %v1546, 1.442695
      %v1550 = vpow.pop %v1549
      %v1551 = vmul.f32 %v1547, 1.442695
      %v1552 = vpow.pop %v1551
      %v1553 = vmul.f32 %v1548, 1.442695
      %v1554 = vpow.pop %v1553
      %v1555 = vsel %vm1202, %v1550, 0.0
      %1556 = vadd.xlane.f32.xlu0 %v1555
      %v1557 = vpop.xlane.xlu0 %1556
      %v1558 = vsel %vm1202, %v1552, 0.0
      %1559 = vadd.xlane.f32.xlu0 %v1558
      %v1560 = vpop.xlane.xlu0 %1559
      %v1561 = vsel %vm1202, %v1554, 0.0
      %1562 = vadd.xlane.f32.xlu0 %v1561
      %v1563 = vpop.xlane.xlu0 %1562
      %v1564 = vrcp.pop %v1557
      %v1565 = vmul.f32 %v1550, %v1564
      %v1566 = vrcp.pop %v1560
      %v1567 = vmul.f32 %v1552, %v1566
      %v1568 = vrcp.pop %v1563
      %v1569 = vmul.f32 %v1554, %v1568
      %v1570 = vpack.c.bf16 %v1567, %v1565
      %v1571 = vpack.c.bf16 %v1569, %v1569
      %1572 = vrot.lane.b32.xlu0 %v1238, 64
      %v1573 = vpop.permute.xlu0 %1572
      %1574 = vrot.lane.b32.xlu0 %v1239, 64
      %v1575 = vpop.permute.xlu0 %1574
      %v1578 = vsel %vm1202, %v1570, 0
      %v1581 = vsel %vm1202, %v1571, 0
      %v1584 = vsel %vm1246, %v1575, 0
      %1586 = vmatprep.subr.bf16.mxu0 0
      %1587 = vmatpush1.bf16.msra.mxu0 %v1573
      %1588 = vmatprep.subr.bf16.mxu0 0
      %1589 = vmatpush1.bf16.msra.mxu0 %v1584
      %1590 = vmatprep.subr.bf16.mxu0 0
      %1591 = vmatpush1.bf16.msra.mxu0 0
      %1592 = vmatprep.subr.bf16.mxu0 0
      %1593 = vmatpush1.bf16.msra.mxu0 0
      %1594 = vmatprep.subr.bf16.mxu0 0
      %1595 = vmatpush1.bf16.msra.mxu0 0
      %1596 = vmatprep.subr.bf16.mxu0 0
      %1597 = vmatpush1.bf16.msra.mxu0 0
      %1598 = vmatprep.subr.bf16.mxu0 0
      %1599 = vmatpush1.bf16.msra.mxu0 0
      %1600 = vmatprep.subr.bf16.mxu0 0
      %1601 = vmatpush1.bf16.msra.mxu0 0
      %1602 = vmatprep.subr.bf16.mxu0 0
      %1603 = vmatpush1.bf16.msra.mxu0 0
      %1604 = vmatprep.subr.bf16.mxu0 0
      %1605 = vmatpush1.bf16.msra.mxu0 0
      %1606 = vmatprep.subr.bf16.mxu0 0
      %1607 = vmatpush1.bf16.msra.mxu0 0
      %1608 = vmatprep.subr.bf16.mxu0 0
      %1609 = vmatpush1.bf16.msra.mxu0 0
      %1610 = vmatprep.subr.bf16.mxu0 0
      %1611 = vmatpush1.bf16.msra.mxu0 0
      %1612 = vmatprep.subr.bf16.mxu0 0
      %1613 = vmatpush1.bf16.msra.mxu0 0
      %1614 = vmatprep.subr.bf16.mxu0 0
      %1615 = vmatpush1.bf16.msra.mxu0 0
      %1616 = vmatprep.subr.bf16.mxu0 0
      %1617 = vmatpush1.bf16.msra.mxu0 0
      %1618 = vmatprep.mubr.bf16.mxu0 0
      %1619 = vmatmul.mubr.bf16.gmra.mrb[0].mxu0 %v1578
      %v1620 = vpop.f32.mrb[0].mxu0
      %v1621 = vadd.f32 0.0, %v1620
      %v1622 = vpop.f32.mrb[0].mxu0
      %v1623 = vpop.f32.mrb[0].mxu0
      %v1624 = vadd.f32 0.0, %v1623
      %v1625 = vpop.f32.mrb[0].mxu0
      %1626 = vmatprep.mubr.bf16.mxu0 0
      %1627 = vmatmul.mubr.bf16.gmra.mrb[0].mxu0 %v1581
      %v1628 = vpop.f32.mrb[0].mxu0
      %v1629 = vadd.f32 0.0, %v1628
      %v1630 = vpop.f32.mrb[0].mxu0
      %v1631 = vpop.f32.mrb[0].mxu0
      %v1632 = vpop.f32.mrb[0].mxu0
      %1633 = vdwg.mxu0
      %1634 = vrot.lane.b32.xlu0 %v1137, 32
      %v1635 = vpop.permute.xlu0 %1634
      %1636 = vrot.lane.b32.xlu0 %v1138, 32
      %v1637 = vpop.permute.xlu0 %1636
      %1638 = vrot.lane.b32.xlu0 %v1139, 32
      %v1639 = vpop.permute.xlu0 %1638
      %1640 = vrot.lane.b32.xlu0 %v1140, 32
      %v1641 = vpop.permute.xlu0 %1640
      %v1643 = vsel %vm1141, %v1635, 0
      %v1646 = vsel %vm1141, %v1637, 0
      %v1649 = vsel %vm1141, %v1639, 0
      %v1652 = vsel %vm1141, %v1641, 0
      %1654 = vmatprep.subr.bf16.mxu0 0
      %1655 = vmatpush1.bf16.xpose.msra.mxu0 %v1649
      %1656 = vmatprep.subr.bf16.mxu0 0
      %1657 = vmatpush1.bf16.xpose.msra.mxu0 %v1652
      %1658 = vmatprep.subr.bf16.mxu0 0
      %1659 = vmatpush1.bf16.xpose.msra.mxu0 0
      %1660 = vmatprep.subr.bf16.mxu0 0
      %1661 = vmatpush1.bf16.xpose.msra.mxu0 0
      %1662 = vmatprep.subr.bf16.mxu0 0
      %1663 = vmatpush1.bf16.xpose.msra.mxu0 0
      %1664 = vmatprep.subr.bf16.mxu0 0
      %1665 = vmatpush1.bf16.xpose.msra.mxu0 0
      %1666 = vmatprep.subr.bf16.mxu0 0
      %1667 = vmatpush1.bf16.xpose.msra.mxu0 0
      %1668 = vmatprep.subr.bf16.mxu0 0
      %1669 = vmatpush1.bf16.xpose.msra.mxu0 0
      %1670 = vmatprep.subr.bf16.mxu0 0
      %1671 = vmatpush1.bf16.xpose.msra.mxu0 0
      %1672 = vmatprep.subr.bf16.mxu0 0
      %1673 = vmatpush1.bf16.xpose.msra.mxu0 0
      %1674 = vmatprep.subr.bf16.mxu0 0
      %1675 = vmatpush1.bf16.xpose.msra.mxu0 0
      %1676 = vmatprep.subr.bf16.mxu0 0
      %1677 = vmatpush1.bf16.xpose.msra.mxu0 0
      %1678 = vmatprep.subr.bf16.mxu0 0
      %1679 = vmatpush1.bf16.xpose.msra.mxu0 0
      %1680 = vmatprep.subr.bf16.mxu0 0
      %1681 = vmatpush1.bf16.xpose.msra.mxu0 0
      %1682 = vmatprep.subr.bf16.mxu0 0
      %1683 = vmatpush1.bf16.xpose.msra.mxu0 0
      %1684 = vmatprep.subr.bf16.mxu0 0
      %1685 = vmatpush1.bf16.xpose.msra.mxu0 0
      %1686 = vmatprep.mubr.bf16.mxu0 0
      %1687 = vmatmul.mubr.bf16.gmra.mrb[0].mxu0 %v1643
      %v1688 = vpop.f32.mrb[0].mxu0
      %v1689 = vadd.f32 %v804, %v1688
      %v1690 = vpop.f32.mrb[0].mxu0
      %v1691 = vpop.f32.mrb[0].mxu0
      %v1692 = vadd.f32 %v804, %v1691
      %v1693 = vpop.f32.mrb[0].mxu0
      %1694 = vmatprep.mubr.bf16.mxu0 0
      %1695 = vmatmul.mubr.bf16.gmra.mrb[0].mxu0 %v1646
      %v1696 = vpop.f32.mrb[0].mxu0
      %v1697 = vadd.f32 %v804, %v1696
      %v1698 = vpop.f32.mrb[0].mxu0
      %v1699 = vpop.f32.mrb[0].mxu0
      %v1700 = vpop.f32.mrb[0].mxu0
      %1701 = vdwg.mxu0
      %v1702 = vsel %vm1202, %v1689, -inf
      %1703 = vmax.xlane.f32.xlu0 %v1702
      %v1704 = vpop.xlane.xlu0 %1703
      %v1705 = vsel %vm1202, %v1692, -inf
      %1706 = vmax.xlane.f32.xlu0 %v1705
      %v1707 = vpop.xlane.xlu0 %1706
      %v1708 = vsel %vm1202, %v1697, -inf
      %1709 = vmax.xlane.f32.xlu0 %v1708
      %v1710 = vpop.xlane.xlu0 %1709
      %v1711 = vsub.f32 %v1689, %v1704
      %v1712 = vsub.f32 %v1692, %v1707
      %v1713 = vsub.f32 %v1697, %v1710
      %v1714 = vmul.f32 %v1711, 1.442695
      %v1715 = vpow.pop %v1714
      %v1716 = vmul.f32 %v1712, 1.442695
      %v1717 = vpow.pop %v1716
      %v1718 = vmul.f32 %v1713, 1.442695
      %v1719 = vpow.pop %v1718
      %v1720 = vsel %vm1202, %v1715, 0.0
      %1721 = vadd.xlane.f32.xlu0 %v1720
      %v1722 = vpop.xlane.xlu0 %1721
      %v1723 = vsel %vm1202, %v1717, 0.0
      %1724 = vadd.xlane.f32.xlu0 %v1723
      %v1725 = vpop.xlane.xlu0 %1724
      %v1726 = vsel %vm1202, %v1719, 0.0
      %1727 = vadd.xlane.f32.xlu0 %v1726
      %v1728 = vpop.xlane.xlu0 %1727
      %v1729 = vrcp.pop %v1722
      %v1730 = vmul.f32 %v1715, %v1729
      %v1731 = vrcp.pop %v1725
      %v1732 = vmul.f32 %v1717, %v1731
      %v1733 = vrcp.pop %v1728
      %v1734 = vmul.f32 %v1719, %v1733
      %v1735 = vpack.c.bf16 %v1732, %v1730
      %v1736 = vpack.c.bf16 %v1734, %v1734
      %1737 = vrot.lane.b32.xlu0 %v1238, 32
      %v1738 = vpop.permute.xlu0 %1737
      %1739 = vrot.lane.b32.xlu0 %v1239, 32
      %v1740 = vpop.permute.xlu0 %1739
      %v1743 = vsel %vm1202, %v1735, 0
      %v1746 = vsel %vm1202, %v1736, 0
      %v1749 = vsel %vm1246, %v1740, 0
      %1751 = vmatprep.subr.bf16.mxu0 0
      %1752 = vmatpush1.bf16.msra.mxu0 %v1738
      %1753 = vmatprep.subr.bf16.mxu0 0
      %1754 = vmatpush1.bf16.msra.mxu0 %v1749
      %1755 = vmatprep.subr.bf16.mxu0 0
      %1756 = vmatpush1.bf16.msra.mxu0 0
      %1757 = vmatprep.subr.bf16.mxu0 0
      %1758 = vmatpush1.bf16.msra.mxu0 0
      %1759 = vmatprep.subr.bf16.mxu0 0
      %1760 = vmatpush1.bf16.msra.mxu0 0
      %1761 = vmatprep.subr.bf16.mxu0 0
      %1762 = vmatpush1.bf16.msra.mxu0 0
      %1763 = vmatprep.subr.bf16.mxu0 0
      %1764 = vmatpush1.bf16.msra.mxu0 0
      %1765 = vmatprep.subr.bf16.mxu0 0
      %1766 = vmatpush1.bf16.msra.mxu0 0
      %1767 = vmatprep.subr.bf16.mxu0 0
      %1768 = vmatpush1.bf16.msra.mxu0 0
      %1769 = vmatprep.subr.bf16.mxu0 0
      %1770 = vmatpush1.bf16.msra.mxu0 0
      %1771 = vmatprep.subr.bf16.mxu0 0
      %1772 = vmatpush1.bf16.msra.mxu0 0
      %1773 = vmatprep.subr.bf16.mxu0 0
      %1774 = vmatpush1.bf16.msra.mxu0 0
      %1775 = vmatprep.subr.bf16.mxu0 0
      %1776 = vmatpush1.bf16.msra.mxu0 0
      %1777 = vmatprep.subr.bf16.mxu0 0
      %1778 = vmatpush1.bf16.msra.mxu0 0
      %1779 = vmatprep.subr.bf16.mxu0 0
      %1780 = vmatpush1.bf16.msra.mxu0 0
      %1781 = vmatprep.subr.bf16.mxu0 0
      %1782 = vmatpush1.bf16.msra.mxu0 0
      %1783 = vmatprep.mubr.bf16.mxu0 0
      %1784 = vmatmul.mubr.bf16.gmra.mrb[0].mxu0 %v1743
      %v1785 = vpop.f32.mrb[0].mxu0
      %v1786 = vadd.f32 0.0, %v1785
      %v1787 = vpop.f32.mrb[0].mxu0
      %v1788 = vpop.f32.mrb[0].mxu0
      %v1789 = vadd.f32 0.0, %v1788
      %v1790 = vpop.f32.mrb[0].mxu0
      %1791 = vmatprep.mubr.bf16.mxu0 0
      %1792 = vmatmul.mubr.bf16.gmra.mrb[0].mxu0 %v1746
      %v1793 = vpop.f32.mrb[0].mxu0
      %v1794 = vadd.f32 0.0, %v1793
      %v1795 = vpop.f32.mrb[0].mxu0
      %v1796 = vpop.f32.mrb[0].mxu0
      %v1797 = vpop.f32.mrb[0].mxu0
      %1798 = vdwg.mxu0
      %1802 = vrot.lane.b32.xlu0 %v1456, 32
      %v1803 = vpop.permute.xlu0 %1802
      %1804 = vrot.lane.b32.xlu0 %v1459, 32
      %v1805 = vpop.permute.xlu0 %1804
      %1806 = vrot.lane.b32.xlu0 %v1464, 32
      %v1807 = vpop.permute.xlu0 %1806
      %1814 = vrot.lane.b32.xlu0 %v1621, 64
      %v1815 = vpop.permute.xlu0 %1814
      %1816 = vrot.lane.b32.xlu0 %v1624, 64
      %v1817 = vpop.permute.xlu0 %1816
      %1818 = vrot.lane.b32.xlu0 %v1629, 64
      %v1819 = vpop.permute.xlu0 %1818
      %1826 = vrot.lane.b32.xlu0 %v1786, 96
      %v1827 = vpop.permute.xlu0 %1826
      %1828 = vrot.lane.b32.xlu0 %v1789, 96
      %v1829 = vpop.permute.xlu0 %1828
      %1830 = vrot.lane.b32.xlu0 %v1794, 96
      %v1831 = vpop.permute.xlu0 %1830
      %v1835 = vsel %vm1141, %v1285, %v1803
      %v1836 = vsel %vm1141, %v1288, %v1805
      %v1837 = vsel %vm1141, %v1293, %v1807
      %vm1838 = vcmask 523264
      %v1839 = vsel %vm1838, %v1835, %v1815
      %v1840 = vsel %vm1838, %v1836, %v1817
      %v1841 = vsel %vm1838, %v1837, %v1819
      %vm1842 = vcmask 785408
      %v1843 = vsel %vm1842, %v1839, %v1827
      %v1844 = vsel %vm1842, %v1840, %v1829
      %v1845 = vsel %vm1842, %v1841, %v1831
      %v1846 = vpack.c.bf16 %v1844, %v1843
      %v1847 = vpack.c.bf16 %v1845, %v1845
      %v1848 = vld [vmem:[%s7] sm:$0xf]
      %v1849 = vld [vmem:[%s7 + $0x4] sm:$0xf]
      %v1850 = vld [vmem:[%s7 + $0x8] sm:$0xf]
      %v1851 = vld [vmem:[%s7 + $0xc] sm:$0xf]
      %v1852 = vld [vmem:[%s7 + $0x10] sm:$0xf]
      %v1853 = vld [vmem:[%s7 + $0x14] sm:$0xf]
      %v1854 = vld [vmem:[%s7 + $0x18] sm:$0xf]
      %v1855 = vld [vmem:[%s7 + $0x1c] sm:$0xf]
      %v1856 = vld [vmem:[%s7 + $0x20] sm:$0xf]
      %v1857 = vld [vmem:[%s7 + $0x24] sm:$0xf]
      %v1858 = vld [vmem:[%s7 + $0x28] sm:$0xf]
      %v1859 = vld [vmem:[%s7 + $0x2c] sm:$0xf]
      %v1860 = vld [vmem:[%s7 + $0x30] sm:$0xf]
      %v1861 = vld [vmem:[%s7 + $0x34] sm:$0xf]
      %v1862 = vld [vmem:[%s7 + $0x38] sm:$0xf]
      %v1863 = vld [vmem:[%s7 + $0x3c] sm:$0xf]
      %v1880 = vunpack.c.l.b16 %v1848
      %v1881 = vunpack.c.l.b16 %v1849
      %v1882 = vunpack.c.l.b16 %v1850
      %v1883 = vunpack.c.l.b16 %v1851
      %v1884 = vunpack.c.l.b16 %v1852
      %v1885 = vunpack.c.l.b16 %v1853
      %v1886 = vunpack.c.l.b16 %v1854
      %v1887 = vunpack.c.l.b16 %v1855
      %v1888 = vunpack.c.l.b16 %v1856
      %v1889 = vunpack.c.l.b16 %v1857
      %v1890 = vunpack.c.l.b16 %v1858
      %v1891 = vunpack.c.l.b16 %v1859
      %v1892 = vunpack.c.l.b16 %v1860
      %v1893 = vunpack.c.l.b16 %v1861
      %v1894 = vunpack.c.l.b16 %v1862
      %v1895 = vunpack.c.l.b16 %v1863
      %v1896 = vpack.c.b16 %v1881, %v1880
      %v1897 = vpack.c.b16 %v1883, %v1882
      %v1898 = vpack.c.b16 %v1885, %v1884
      %v1899 = vpack.c.b16 %v1887, %v1886
      %v1900 = vpack.c.b16 %v1889, %v1888
      %v1901 = vpack.c.b16 %v1891, %v1890
      %v1902 = vpack.c.b16 %v1893, %v1892
      %v1903 = vpack.c.b16 %v1895, %v1894
      %1912 = vmatprep.subr.bf16.mxu0 0
      %1913 = vmatpush1.bf16.msra.mxu0 %v1896
      %1914 = vmatprep.subr.bf16.mxu0 0
      %1915 = vmatpush1.bf16.msra.mxu0 %v1897
      %1916 = vmatprep.subr.bf16.mxu0 0
      %1917 = vmatpush1.bf16.msra.mxu0 %v1898
      %1918 = vmatprep.subr.bf16.mxu0 0
      %1919 = vmatpush1.bf16.msra.mxu0 %v1899
      %1920 = vmatprep.subr.bf16.mxu0 0
      %1921 = vmatpush1.bf16.msra.mxu0 %v1900
      %1922 = vmatprep.subr.bf16.mxu0 0
      %1923 = vmatpush1.bf16.msra.mxu0 %v1901
      %1924 = vmatprep.subr.bf16.mxu0 0
      %1925 = vmatpush1.bf16.msra.mxu0 %v1902
      %1926 = vmatprep.subr.bf16.mxu0 0
      %1927 = vmatpush1.bf16.msra.mxu0 %v1903
      %1928 = vmatprep.subr.bf16.mxu0 0
      %1929 = vmatpush1.bf16.msra.mxu0 0
      %1930 = vmatprep.subr.bf16.mxu0 0
      %1931 = vmatpush1.bf16.msra.mxu0 0
      %1932 = vmatprep.subr.bf16.mxu0 0
      %1933 = vmatpush1.bf16.msra.mxu0 0
      %1934 = vmatprep.subr.bf16.mxu0 0
      %1935 = vmatpush1.bf16.msra.mxu0 0
      %1936 = vmatprep.subr.bf16.mxu0 0
      %1937 = vmatpush1.bf16.msra.mxu0 0
      %1938 = vmatprep.subr.bf16.mxu0 0
      %1939 = vmatpush1.bf16.msra.mxu0 0
      %1940 = vmatprep.subr.bf16.mxu0 0
      %1941 = vmatpush1.bf16.msra.mxu0 0
      %1942 = vmatprep.subr.bf16.mxu0 0
      %1943 = vmatpush1.bf16.msra.mxu0 0
      %1944 = vmatprep.mubr.bf16.mxu0 0
      %1945 = vmatmul.mubr.bf16.gmra.mrb[0].mxu0 %v1846
      %v1946 = vpop.f32.mrb[0].mxu0
      %v1947 = vadd.f32 0.0, %v1946
      %v1948 = vpop.f32.mrb[0].mxu0
      %v1949 = vpop.f32.mrb[0].mxu0
      %v1950 = vadd.f32 0.0, %v1949
      %v1951 = vpop.f32.mrb[0].mxu0
      %1952 = vmatprep.mubr.bf16.mxu0 0
      %1953 = vmatmul.mubr.bf16.gmra.mrb[0].mxu0 %v1847
      %v1954 = vpop.f32.mrb[0].mxu0
      %v1955 = vadd.f32 0.0, %v1954
      %v1956 = vpop.f32.mrb[0].mxu0
      %v1957 = vpop.f32.mrb[0].mxu0
      %v1958 = vpop.f32.mrb[0].mxu0
      %1959 = vdwg.mxu0
      %v1960 = vadd.f32 %v788, %v1947
      %v1961 = vadd.f32 %v791, %v1950
      %v1962 = vadd.f32 %v796, %v1955
      %v1963 = vld [vmem:[%s8] sm:$0x1]
      %v1965 = vlaneseq
      %v1966 = vshrl.u32 %v1965, 7
      %v1967 = vsub.s32 0, %v1966
      %v1968 = vrot.slane %v1963, %v1967
      %v1970 = vadd.f32 %v1960, %v1968
      %v1971 = vadd.f32 %v1961, %v1968
      %v1972 = vadd.f32 %v1962, %v1968
      %v1973 = vld [vmem:[%s9] sm:$0x1]
      %v1974 = vld [vmem:[%s10] sm:$0x1]
      %1975 = vadd.xlane.f32.xlu0 %v1970
      %v1976 = vpop.xlane.xlu0 %1975
      %1977 = vadd.xlane.f32.xlu0 %v1971
      %v1978 = vpop.xlane.xlu0 %1977
      %1979 = vadd.xlane.f32.xlu0 %v1972
      %v1980 = vpop.xlane.xlu0 %1979
      %v1981 = vmul.f32 %v1976, %v813
      %v1982 = vmul.f32 %v1978, %v813
      %v1983 = vmul.f32 %v1980, %v813
      %v1984 = vsub.f32 %v1970, %v1981
      %v1985 = vsub.f32 %v1971, %v1982
      %v1986 = vsub.f32 %v1972, %v1983
      %v1987 = vmul.f32 %v1984, %v1984
      %v1988 = vmul.f32 %v1985, %v1985
      %v1989 = vmul.f32 %v1986, %v1986
      %1990 = vadd.xlane.f32.xlu0 %v1987
      %v1991 = vpop.xlane.xlu0 %1990
      %1992 = vadd.xlane.f32.xlu0 %v1988
      %v1993 = vpop.xlane.xlu0 %1992
      %1994 = vadd.xlane.f32.xlu0 %v1989
      %v1995 = vpop.xlane.xlu0 %1994
      %v1996 = vmul.f32 %v1991, %v813
      %v1997 = vmul.f32 %v1993, %v813
      %v1998 = vmul.f32 %v1995, %v813
      %v1999 = vadd.f32 %v1996, 1e-06
      %v2000 = vadd.f32 %v1997, 1e-06
      %v2001 = vadd.f32 %v1998, 1e-06
      %v2002 = vrsqrt.pop %v1999
      %v2003 = vrsqrt.pop %v2000
      %v2004 = vrsqrt.pop %v2001
      %v2005 = vmul.f32 %v1984, %v2002
      %v2006 = vmul.f32 %v1985, %v2003
      %v2007 = vmul.f32 %v1986, %v2004
      %v2009 = vlaneseq
      %v2010 = vshrl.u32 %v2009, 7
      %v2011 = vsub.s32 0, %v2010
      %v2012 = vrot.slane %v1973, %v2011
      %v2014 = vmul.f32 %v2005, %v2012
      %v2015 = vmul.f32 %v2006, %v2012
      %v2016 = vmul.f32 %v2007, %v2012
      %v2018 = vlaneseq
      %v2019 = vshrl.u32 %v2018, 7
      %v2020 = vsub.s32 0, %v2019
      %v2021 = vrot.slane %v1974, %v2020
      %v2023 = vadd.f32 %v2014, %v2021
      %v2024 = vadd.f32 %v2015, %v2021
      %v2025 = vadd.f32 %v2016, %v2021
      %v2026 = vpack.c.bf16 %v2024, %v2023
      %v2027 = vpack.c.bf16 %v2025, %v2025
      %v2028 = vld [vmem:[%s11] sm:$0xff]
      %v2029 = vld [vmem:[%s11 + $0x8] sm:$0xff]
      %v2030 = vld [vmem:[%s11 + $0x10] sm:$0xff]
      %v2031 = vld [vmem:[%s11 + $0x18] sm:$0xff]
      %v2032 = vld [vmem:[%s11 + $0x20] sm:$0xff]
      %v2033 = vld [vmem:[%s11 + $0x28] sm:$0xff]
      %v2034 = vld [vmem:[%s11 + $0x30] sm:$0xff]
      %v2035 = vld [vmem:[%s11 + $0x38] sm:$0xff]
      %v2036 = vld [vmem:[%s11 + $0x40] sm:$0xff]
      %v2037 = vld [vmem:[%s11 + $0x48] sm:$0xff]
      %v2038 = vld [vmem:[%s11 + $0x50] sm:$0xff]
      %v2039 = vld [vmem:[%s11 + $0x58] sm:$0xff]
      %v2040 = vld [vmem:[%s11 + $0x60] sm:$0xff]
      %v2041 = vld [vmem:[%s11 + $0x68] sm:$0xff]
      %v2042 = vld [vmem:[%s11 + $0x70] sm:$0xff]
      %v2043 = vld [vmem:[%s11 + $0x78] sm:$0xff]
      %v2044 = vld [vmem:[%s12] sm:$0x3]
      %v2046 = vlaneseq
      %v2047 = vshrl.u32 %v2046, 7
      %v2048 = vsub.s32 0, %v2047
      %v2049 = vrot.slane %v2044, %v2048
      %v2050 = vlaneseq
      %v2051 = vshrl.u32 %v2050, 7
      %v2052 = vsub.s32 1, %v2051
      %v2053 = vrot.slane %v2044, %v2052
      %v2072 = vunpack.c.l.b16 %v2028
      %v2073 = vunpack.c.h.b16 %v2028
      %v2074 = vunpack.c.l.b16 %v2029
      %v2075 = vunpack.c.h.b16 %v2029
      %v2076 = vunpack.c.l.b16 %v2030
      %v2077 = vunpack.c.h.b16 %v2030
      %v2078 = vunpack.c.l.b16 %v2031
      %v2079 = vunpack.c.h.b16 %v2031
      %v2080 = vunpack.c.l.b16 %v2032
      %v2081 = vunpack.c.h.b16 %v2032
      %v2082 = vunpack.c.l.b16 %v2033
      %v2083 = vunpack.c.h.b16 %v2033
      %v2084 = vunpack.c.l.b16 %v2034
      %v2085 = vunpack.c.h.b16 %v2034
      %v2086 = vunpack.c.l.b16 %v2035
      %v2087 = vunpack.c.h.b16 %v2035
      %v2088 = vunpack.c.l.b16 %v2036
      %v2089 = vunpack.c.h.b16 %v2036
      %v2090 = vunpack.c.l.b16 %v2037
      %v2091 = vunpack.c.h.b16 %v2037
      %v2092 = vunpack.c.l.b16 %v2038
      %v2093 = vunpack.c.h.b16 %v2038
      %v2094 = vunpack.c.l.b16 %v2039
      %v2095 = vunpack.c.h.b16 %v2039
      %v2096 = vunpack.c.l.b16 %v2040
      %v2097 = vunpack.c.h.b16 %v2040
      %v2098 = vunpack.c.l.b16 %v2041
      %v2099 = vunpack.c.h.b16 %v2041
      %v2100 = vunpack.c.l.b16 %v2042
      %v2101 = vunpack.c.h.b16 %v2042
      %v2102 = vunpack.c.l.b16 %v2043
      %v2103 = vunpack.c.h.b16 %v2043
      %v2104 = vpack.c.b16 %v2074, %v2072
      %v2105 = vpack.c.b16 %v2075, %v2073
      %v2106 = vpack.c.b16 %v2078, %v2076
      %v2107 = vpack.c.b16 %v2079, %v2077
      %v2108 = vpack.c.b16 %v2082, %v2080
      %v2109 = vpack.c.b16 %v2083, %v2081
      %v2110 = vpack.c.b16 %v2086, %v2084
      %v2111 = vpack.c.b16 %v2087, %v2085
      %v2112 = vpack.c.b16 %v2090, %v2088
      %v2113 = vpack.c.b16 %v2091, %v2089
      %v2114 = vpack.c.b16 %v2094, %v2092
      %v2115 = vpack.c.b16 %v2095, %v2093
      %v2116 = vpack.c.b16 %v2098, %v2096
      %v2117 = vpack.c.b16 %v2099, %v2097
      %v2118 = vpack.c.b16 %v2102, %v2100
      %v2119 = vpack.c.b16 %v2103, %v2101
      %2136 = vmatprep.subr.bf16.mxu0 %v2105
      %2137 = vmatpush1.bf16.msra.mxu0 %v2104
      %2138 = vmatprep.subr.bf16.mxu0 %v2107
      %2139 = vmatpush1.bf16.msra.mxu0 %v2106
      %2140 = vmatprep.subr.bf16.mxu0 %v2109
      %2141 = vmatpush1.bf16.msra.mxu0 %v2108
      %2142 = vmatprep.subr.bf16.mxu0 %v2111
      %2143 = vmatpush1.bf16.msra.mxu0 %v2110
      %2144 = vmatprep.subr.bf16.mxu0 %v2113
      %2145 = vmatpush1.bf16.msra.mxu0 %v2112
      %2146 = vmatprep.subr.bf16.mxu0 %v2115
      %2147 = vmatpush1.bf16.msra.mxu0 %v2114
      %2148 = vmatprep.subr.bf16.mxu0 %v2117
      %2149 = vmatpush1.bf16.msra.mxu0 %v2116
      %2150 = vmatprep.subr.bf16.mxu0 %v2119
      %2151 = vmatpush1.bf16.msra.mxu0 %v2118
      %2152 = vmatprep.subr.bf16.mxu0 0
      %2153 = vmatpush1.bf16.msra.mxu0 0
      %2154 = vmatprep.subr.bf16.mxu0 0
      %2155 = vmatpush1.bf16.msra.mxu0 0
      %2156 = vmatprep.subr.bf16.mxu0 0
      %2157 = vmatpush1.bf16.msra.mxu0 0
      %2158 = vmatprep.subr.bf16.mxu0 0
      %2159 = vmatpush1.bf16.msra.mxu0 0
      %2160 = vmatprep.subr.bf16.mxu0 0
      %2161 = vmatpush1.bf16.msra.mxu0 0
      %2162 = vmatprep.subr.bf16.mxu0 0
      %2163 = vmatpush1.bf16.msra.mxu0 0
      %2164 = vmatprep.subr.bf16.mxu0 0
      %2165 = vmatpush1.bf16.msra.mxu0 0
      %2166 = vmatprep.subr.bf16.mxu0 0
      %2167 = vmatpush1.bf16.msra.mxu0 0
      %2168 = vmatprep.mubr.bf16.mxu0 0
      %2169 = vmatmul.mubr.bf16.gmra.mrb[0].mxu0 %v2026
      %v2170 = vpop.f32.mrb[0].mxu0
      %v2171 = vadd.f32 %v2049, %v2170
      %v2172 = vpop.f32.mrb[0].mxu0
      %v2173 = vadd.f32 %v2053, %v2172
      %v2174 = vpop.f32.mrb[0].mxu0
      %v2175 = vadd.f32 %v2049, %v2174
      %v2176 = vpop.f32.mrb[0].mxu0
      %v2177 = vadd.f32 %v2053, %v2176
      %2178 = vmatprep.mubr.bf16.mxu0 0
      %2179 = vmatmul.mubr.bf16.gmra.mrb[0].mxu0 %v2027
      %v2180 = vpop.f32.mrb[0].mxu0
      %v2181 = vadd.f32 %v2049, %v2180
      %v2182 = vpop.f32.mrb[0].mxu0
      %v2183 = vadd.f32 %v2053, %v2182
      %v2184 = vpop.f32.mrb[0].mxu0
      %v2185 = vpop.f32.mrb[0].mxu0
      %2186 = vdwg.mxu0
      %v2187 = vmul.f32 %v2171, %v2171
      %v2188 = vmul.f32 %v2173, %v2173
      %v2189 = vmul.f32 %v2175, %v2175
      %v2190 = vmul.f32 %v2177, %v2177
      %v2191 = vmul.f32 %v2181, %v2181
      %v2192 = vmul.f32 %v2183, %v2183
      %v2193 = vmul.f32 %v2171, %v2187
      %v2194 = vmul.f32 %v2173, %v2188
      %v2195 = vmul.f32 %v2175, %v2189
      %v2196 = vmul.f32 %v2177, %v2190
      %v2197 = vmul.f32 %v2181, %v2191
      %v2198 = vmul.f32 %v2183, %v2192
      %v2199 = vmul.f32 %v2193, 0.044715
      %v2200 = vmul.f32 %v2194, 0.044715
      %v2201 = vmul.f32 %v2195, 0.044715
      %v2202 = vmul.f32 %v2196, 0.044715
      %v2203 = vmul.f32 %v2197, 0.044715
      %v2204 = vmul.f32 %v2198, 0.044715
      %v2205 = vadd.f32 %v2171, %v2199
      %v2206 = vadd.f32 %v2173, %v2200
      %v2207 = vadd.f32 %v2175, %v2201
      %v2208 = vadd.f32 %v2177, %v2202
      %v2209 = vadd.f32 %v2181, %v2203
      %v2210 = vadd.f32 %v2183, %v2204
      %v2211 = vmul.f32 %v2205, 0.7978846
      %v2212 = vmul.f32 %v2206, 0.7978846
      %v2213 = vmul.f32 %v2207, 0.7978846
      %v2214 = vmul.f32 %v2208, 0.7978846
      %v2215 = vmul.f32 %v2209, 0.7978846
      %v2216 = vmul.f32 %v2210, 0.7978846
      %v2217 = vtanh.pop %v2211
      %v2218 = vtanh.pop %v2212
      %v2219 = vtanh.pop %v2213
      %v2220 = vtanh.pop %v2214
      %v2221 = vtanh.pop %v2215
      %v2222 = vtanh.pop %v2216
      %v2223 = vadd.f32 %v2217, 1.0
      %v2224 = vadd.f32 %v2218, 1.0
      %v2225 = vadd.f32 %v2219, 1.0
      %v2226 = vadd.f32 %v2220, 1.0
      %v2227 = vadd.f32 %v2221, 1.0
      %v2228 = vadd.f32 %v2222, 1.0
      %v2229 = vmul.f32 %v2223, 0.5
      %v2230 = vmul.f32 %v2224, 0.5
      %v2231 = vmul.f32 %v2225, 0.5
      %v2232 = vmul.f32 %v2226, 0.5
      %v2233 = vmul.f32 %v2227, 0.5
      %v2234 = vmul.f32 %v2228, 0.5
      %v2235 = vmul.f32 %v2171, %v2229
      %v2236 = vmul.f32 %v2173, %v2230
      %v2237 = vmul.f32 %v2175, %v2231
      %v2238 = vmul.f32 %v2177, %v2232
      %v2239 = vmul.f32 %v2181, %v2233
      %v2240 = vmul.f32 %v2183, %v2234
      %v2241 = vpack.c.bf16 %v2237, %v2235
      %v2242 = vpack.c.bf16 %v2238, %v2236
      %v2243 = vpack.c.bf16 %v2239, %v2239
      %v2244 = vpack.c.bf16 %v2240, %v2240
      %v2245 = vld [vmem:[%s13] sm:$0xf]
      %v2246 = vld [vmem:[%s13 + $0x4] sm:$0xf]
      %v2247 = vld [vmem:[%s13 + $0x8] sm:$0xf]
      %v2248 = vld [vmem:[%s13 + $0xc] sm:$0xf]
      %v2249 = vld [vmem:[%s13 + $0x10] sm:$0xf]
      %v2250 = vld [vmem:[%s13 + $0x14] sm:$0xf]
      %v2251 = vld [vmem:[%s13 + $0x18] sm:$0xf]
      %v2252 = vld [vmem:[%s13 + $0x1c] sm:$0xf]
      %v2253 = vld [vmem:[%s13 + $0x20] sm:$0xf]
      %v2254 = vld [vmem:[%s13 + $0x24] sm:$0xf]
      %v2255 = vld [vmem:[%s13 + $0x28] sm:$0xf]
      %v2256 = vld [vmem:[%s13 + $0x2c] sm:$0xf]
      %v2257 = vld [vmem:[%s13 + $0x30] sm:$0xf]
      %v2258 = vld [vmem:[%s13 + $0x34] sm:$0xf]
      %v2259 = vld [vmem:[%s13 + $0x38] sm:$0xf]
      %v2260 = vld [vmem:[%s13 + $0x3c] sm:$0xf]
      %v2261 = vld [vmem:[%s13 + $0x40] sm:$0xf]
      %v2262 = vld [vmem:[%s13 + $0x44] sm:$0xf]
      %v2263 = vld [vmem:[%s13 + $0x48] sm:$0xf]
      %v2264 = vld [vmem:[%s13 + $0x4c] sm:$0xf]
      %v2265 = vld [vmem:[%s13 + $0x50] sm:$0xf]
      %v2266 = vld [vmem:[%s13 + $0x54] sm:$0xf]
      %v2267 = vld [vmem:[%s13 + $0x58] sm:$0xf]
      %v2268 = vld [vmem:[%s13 + $0x5c] sm:$0xf]
      %v2269 = vld [vmem:[%s13 + $0x60] sm:$0xf]
      %v2270 = vld [vmem:[%s13 + $0x64] sm:$0xf]
      %v2271 = vld [vmem:[%s13 + $0x68] sm:$0xf]
      %v2272 = vld [vmem:[%s13 + $0x6c] sm:$0xf]
      %v2273 = vld [vmem:[%s13 + $0x70] sm:$0xf]
      %v2274 = vld [vmem:[%s13 + $0x74] sm:$0xf]
      %v2275 = vld [vmem:[%s13 + $0x78] sm:$0xf]
      %v2276 = vld [vmem:[%s13 + $0x7c] sm:$0xf]
      %v2309 = vunpack.c.l.b16 %v2245
      %v2310 = vunpack.c.l.b16 %v2246
      %v2311 = vunpack.c.l.b16 %v2247
      %v2312 = vunpack.c.l.b16 %v2248
      %v2313 = vunpack.c.l.b16 %v2249
      %v2314 = vunpack.c.l.b16 %v2250
      %v2315 = vunpack.c.l.b16 %v2251
      %v2316 = vunpack.c.l.b16 %v2252
      %v2317 = vunpack.c.l.b16 %v2253
      %v2318 = vunpack.c.l.b16 %v2254
      %v2319 = vunpack.c.l.b16 %v2255
      %v2320 = vunpack.c.l.b16 %v2256
      %v2321 = vunpack.c.l.b16 %v2257
      %v2322 = vunpack.c.l.b16 %v2258
      %v2323 = vunpack.c.l.b16 %v2259
      %v2324 = vunpack.c.l.b16 %v2260
      %v2325 = vunpack.c.l.b16 %v2261
      %v2326 = vunpack.c.l.b16 %v2262
      %v2327 = vunpack.c.l.b16 %v2263
      %v2328 = vunpack.c.l.b16 %v2264
      %v2329 = vunpack.c.l.b16 %v2265
      %v2330 = vunpack.c.l.b16 %v2266
      %v2331 = vunpack.c.l.b16 %v2267
      %v2332 = vunpack.c.l.b16 %v2268
      %v2333 = vunpack.c.l.b16 %v2269
      %v2334 = vunpack.c.l.b16 %v2270
      %v2335 = vunpack.c.l.b16 %v2271
      %v2336 = vunpack.c.l.b16 %v2272
      %v2337 = vunpack.c.l.b16 %v2273
      %v2338 = vunpack.c.l.b16 %v2274
      %v2339 = vunpack.c.l.b16 %v2275
      %v2340 = vunpack.c.l.b16 %v2276
      %v2341 = vpack.c.b16 %v2310, %v2309
      %v2342 = vpack.c.b16 %v2312, %v2311
      %v2343 = vpack.c.b16 %v2314, %v2313
      %v2344 = vpack.c.b16 %v2316, %v2315
      %v2345 = vpack.c.b16 %v2318, %v2317
      %v2346 = vpack.c.b16 %v2320, %v2319
      %v2347 = vpack.c.b16 %v2322, %v2321
      %v2348 = vpack.c.b16 %v2324, %v2323
      %v2349 = vpack.c.b16 %v2326, %v2325
      %v2350 = vpack.c.b16 %v2328, %v2327
      %v2351 = vpack.c.b16 %v2330, %v2329
      %v2352 = vpack.c.b16 %v2332, %v2331
      %v2353 = vpack.c.b16 %v2334, %v2333
      %v2354 = vpack.c.b16 %v2336, %v2335
      %v2355 = vpack.c.b16 %v2338, %v2337
      %v2356 = vpack.c.b16 %v2340, %v2339
      %2373 = vmatprep.subr.bf16.mxu0 0
      %2374 = vmatpush1.bf16.msra.mxu0 %v2341
      %2375 = vmatprep.subr.bf16.mxu0 0
      %2376 = vmatpush1.bf16.msra.mxu0 %v2342
      %2377 = vmatprep.subr.bf16.mxu0 0
      %2378 = vmatpush1.bf16.msra.mxu0 %v2343
      %2379 = vmatprep.subr.bf16.mxu0 0
      %2380 = vmatpush1.bf16.msra.mxu0 %v2344
      %2381 = vmatprep.subr.bf16.mxu0 0
      %2382 = vmatpush1.bf16.msra.mxu0 %v2345
      %2383 = vmatprep.subr.bf16.mxu0 0
      %2384 = vmatpush1.bf16.msra.mxu0 %v2346
      %2385 = vmatprep.subr.bf16.mxu0 0
      %2386 = vmatpush1.bf16.msra.mxu0 %v2347
      %2387 = vmatprep.subr.bf16.mxu0 0
      %2388 = vmatpush1.bf16.msra.mxu0 %v2348
      %2389 = vmatprep.subr.bf16.mxu0 0
      %2390 = vmatpush1.bf16.msra.mxu0 %v2349
      %2391 = vmatprep.subr.bf16.mxu0 0
      %2392 = vmatpush1.bf16.msra.mxu0 %v2350
      %2393 = vmatprep.subr.bf16.mxu0 0
      %2394 = vmatpush1.bf16.msra.mxu0 %v2351
      %2395 = vmatprep.subr.bf16.mxu0 0
      %2396 = vmatpush1.bf16.msra.mxu0 %v2352
      %2397 = vmatprep.subr.bf16.mxu0 0
      %2398 = vmatpush1.bf16.msra.mxu0 %v2353
      %2399 = vmatprep.subr.bf16.mxu0 0
      %2400 = vmatpush1.bf16.msra.mxu0 %v2354
      %2401 = vmatprep.subr.bf16.mxu0 0
      %2402 = vmatpush1.bf16.msra.mxu0 %v2355
      %2403 = vmatprep.subr.bf16.mxu0 0
      %2404 = vmatpush1.bf16.msra.mxu0 %v2356
      %2405 = vmatprep.mubr.bf16.mxu0 %v2242
      %2406 = vmatmul.mubr.bf16.gmra.mrb[0].mxu0 %v2241
      %v2407 = vpop.f32.mrb[0].mxu0
      %v2408 = vadd.f32 0.0, %v2407
      %v2409 = vpop.f32.mrb[0].mxu0
      %v2410 = vpop.f32.mrb[0].mxu0
      %v2411 = vadd.f32 0.0, %v2410
      %v2412 = vpop.f32.mrb[0].mxu0
      %2413 = vmatprep.mubr.bf16.mxu0 %v2244
      %2414 = vmatmul.mubr.bf16.gmra.mrb[0].mxu0 %v2243
      %v2415 = vpop.f32.mrb[0].mxu0
      %v2416 = vadd.f32 0.0, %v2415
      %v2417 = vpop.f32.mrb[0].mxu0
      %v2418 = vpop.f32.mrb[0].mxu0
      %v2419 = vpop.f32.mrb[0].mxu0
      %2420 = vdwg.mxu0
      %v2421 = vadd.f32 %v1970, %v2408
      %v2422 = vadd.f32 %v1971, %v2411
      %v2423 = vadd.f32 %v1972, %v2416
      %v2424 = vld [vmem:[%s14] sm:$0x1]
      %v2426 = vlaneseq
      %v2427 = vshrl.u32 %v2426, 7
      %v2428 = vsub.s32 0, %v2427
      %v2429 = vrot.slane %v2424, %v2428
      %v2431 = vadd.f32 %v2421, %v2429
      %v2432 = vadd.f32 %v2422, %v2429
      %v2433 = vadd.f32 %v2423, %v2429
      %s2434 = scalar_lea.vmem %s3, 1
      %v2435 = vld [vmem:[%s2434] sm:$0x1]
      %s2436 = scalar_lea.vmem %s4, 1
      %v2437 = vld [vmem:[%s2436] sm:$0x1]
      %2438 = vadd.xlane.f32.xlu0 %v2431
      %v2439 = vpop.xlane.xlu0 %2438
      %2440 = vadd.xlane.f32.xlu0 %v2432
      %v2441 = vpop.xlane.xlu0 %2440
      %2442 = vadd.xlane.f32.xlu0 %v2433
      %v2443 = vpop.xlane.xlu0 %2442
      %v2444 = vmul.f32 %v2439, %v813
      %v2445 = vmul.f32 %v2441, %v813
      %v2446 = vmul.f32 %v2443, %v813
      %v2447 = vsub.f32 %v2431, %v2444
      %v2448 = vsub.f32 %v2432, %v2445
      %v2449 = vsub.f32 %v2433, %v2446
      %v2450 = vmul.f32 %v2447, %v2447
      %v2451 = vmul.f32 %v2448, %v2448
      %v2452 = vmul.f32 %v2449, %v2449
      %2453 = vadd.xlane.f32.xlu0 %v2450
      %v2454 = vpop.xlane.xlu0 %2453
      %2455 = vadd.xlane.f32.xlu0 %v2451
      %v2456 = vpop.xlane.xlu0 %2455
      %2457 = vadd.xlane.f32.xlu0 %v2452
      %v2458 = vpop.xlane.xlu0 %2457
      %v2459 = vmul.f32 %v2454, %v813
      %v2460 = vmul.f32 %v2456, %v813
      %v2461 = vmul.f32 %v2458, %v813
      %v2462 = vadd.f32 %v2459, 1e-06
      %v2463 = vadd.f32 %v2460, 1e-06
      %v2464 = vadd.f32 %v2461, 1e-06
      %v2465 = vrsqrt.pop %v2462
      %v2466 = vrsqrt.pop %v2463
      %v2467 = vrsqrt.pop %v2464
      %v2468 = vmul.f32 %v2447, %v2465
      %v2469 = vmul.f32 %v2448, %v2466
      %v2470 = vmul.f32 %v2449, %v2467
      %v2472 = vlaneseq
      %v2473 = vshrl.u32 %v2472, 7
      %v2474 = vsub.s32 0, %v2473
      %v2475 = vrot.slane %v2435, %v2474
      %v2477 = vmul.f32 %v2468, %v2475
      %v2478 = vmul.f32 %v2469, %v2475
      %v2479 = vmul.f32 %v2470, %v2475
      %v2481 = vlaneseq
      %v2482 = vshrl.u32 %v2481, 7
      %v2483 = vsub.s32 0, %v2482
      %v2484 = vrot.slane %v2437, %v2483
      %v2486 = vadd.f32 %v2477, %v2484
      %v2487 = vadd.f32 %v2478, %v2484
      %v2488 = vadd.f32 %v2479, %v2484
      %v2489 = vpack.c.bf16 %v2487, %v2486
      %v2490 = vpack.c.bf16 %v2488, %v2488
      %s2491 = scalar_lea.vmem %s5, 192
      %v2492 = vld [vmem:[%s2491] sm:$0xff]
      %v2493 = vld [vmem:[%s2491 + $0x8] sm:$0xf]
      %v2494 = vld [vmem:[%s2491 + $0xc] sm:$0xff]
      %v2495 = vld [vmem:[%s2491 + $0x14] sm:$0xf]
      %v2496 = vld [vmem:[%s2491 + $0x18] sm:$0xff]
      %v2497 = vld [vmem:[%s2491 + $0x20] sm:$0xf]
      %v2498 = vld [vmem:[%s2491 + $0x24] sm:$0xff]
      %v2499 = vld [vmem:[%s2491 + $0x2c] sm:$0xf]
      %v2500 = vld [vmem:[%s2491 + $0x30] sm:$0xff]
      %v2501 = vld [vmem:[%s2491 + $0x38] sm:$0xf]
      %v2502 = vld [vmem:[%s2491 + $0x3c] sm:$0xff]
      %v2503 = vld [vmem:[%s2491 + $0x44] sm:$0xf]
      %v2504 = vld [vmem:[%s2491 + $0x48] sm:$0xff]
      %v2505 = vld [vmem:[%s2491 + $0x50] sm:$0xf]
      %v2506 = vld [vmem:[%s2491 + $0x54] sm:$0xff]
      %v2507 = vld [vmem:[%s2491 + $0x5c] sm:$0xf]
      %v2508 = vld [vmem:[%s2491 + $0x60] sm:$0xff]
      %v2509 = vld [vmem:[%s2491 + $0x68] sm:$0xf]
      %v2510 = vld [vmem:[%s2491 + $0x6c] sm:$0xff]
      %v2511 = vld [vmem:[%s2491 + $0x74] sm:$0xf]
      %v2512 = vld [vmem:[%s2491 + $0x78] sm:$0xff]
      %v2513 = vld [vmem:[%s2491 + $0x80] sm:$0xf]
      %v2514 = vld [vmem:[%s2491 + $0x84] sm:$0xff]
      %v2515 = vld [vmem:[%s2491 + $0x8c] sm:$0xf]
      %v2516 = vld [vmem:[%s2491 + $0x90] sm:$0xff]
      %v2517 = vld [vmem:[%s2491 + $0x98] sm:$0xf]
      %v2518 = vld [vmem:[%s2491 + $0x9c] sm:$0xff]
      %v2519 = vld [vmem:[%s2491 + $0xa4] sm:$0xf]
      %v2520 = vld [vmem:[%s2491 + $0xa8] sm:$0xff]
      %v2521 = vld [vmem:[%s2491 + $0xb0] sm:$0xf]
      %v2522 = vld [vmem:[%s2491 + $0xb4] sm:$0xff]
      %v2523 = vld [vmem:[%s2491 + $0xbc] sm:$0xf]
      %s2524 = scalar_lea.vmem %s6, 3
      %v2525 = vld [vmem:[%s2524] sm:$0x7]
      %v2527 = vlaneseq
      %v2528 = vshrl.u32 %v2527, 7
      %v2529 = vsub.s32 0, %v2528
      %v2530 = vrot.slane %v2525, %v2529
      %v2531 = vlaneseq
      %v2532 = vshrl.u32 %v2531, 7
      %v2533 = vsub.s32 1, %v2532
      %v2534 = vrot.slane %v2525, %v2533
      %v2535 = vlaneseq
      %v2536 = vshrl.u32 %v2535, 7
      %v2537 = vsub.s32 2, %v2536
      %v2538 = vrot.slane %v2525, %v2537
      %v2574 = vunpack.c.l.b16 %v2492
      %v2575 = vunpack.c.h.b16 %v2492
      %v2576 = vunpack.c.l.b16 %v2493
      %v2577 = vunpack.c.l.b16 %v2494
      %v2578 = vunpack.c.h.b16 %v2494
      %v2579 = vunpack.c.l.b16 %v2495
      %v2580 = vunpack.c.l.b16 %v2496
      %v2581 = vunpack.c.h.b16 %v2496
      %v2582 = vunpack.c.l.b16 %v2497
      %v2583 = vunpack.c.l.b16 %v2498
      %v2584 = vunpack.c.h.b16 %v2498
      %v2585 = vunpack.c.l.b16 %v2499
      %v2586 = vunpack.c.l.b16 %v2500
      %v2587 = vunpack.c.h.b16 %v2500
      %v2588 = vunpack.c.l.b16 %v2501
      %v2589 = vunpack.c.l.b16 %v2502
      %v2590 = vunpack.c.h.b16 %v2502
      %v2591 = vunpack.c.l.b16 %v2503
      %v2592 = vunpack.c.l.b16 %v2504
      %v2593 = vunpack.c.h.b16 %v2504
      %v2594 = vunpack.c.l.b16 %v2505
      %v2595 = vunpack.c.l.b16 %v2506
      %v2596 = vunpack.c.h.b16 %v2506
      %v2597 = vunpack.c.l.b16 %v2507
      %v2598 = vunpack.c.l.b16 %v2508
      %v2599 = vunpack.c.h.b16 %v2508
      %v2600 = vunpack.c.l.b16 %v2509
      %v2601 = vunpack.c.l.b16 %v2510
      %v2602 = vunpack.c.h.b16 %v2510
      %v2603 = vunpack.c.l.b16 %v2511
      %v2604 = vunpack.c.l.b16 %v2512
      %v2605 = vunpack.c.h.b16 %v2512
      %v2606 = vunpack.c.l.b16 %v2513
      %v2607 = vunpack.c.l.b16 %v2514
      %v2608 = vunpack.c.h.b16 %v2514
      %v2609 = vunpack.c.l.b16 %v2515
      %v2610 = vunpack.c.l.b16 %v2516
      %v2611 = vunpack.c.h.b16 %v2516
      %v2612 = vunpack.c.l.b16 %v2517
      %v2613 = vunpack.c.l.b16 %v2518
      %v2614 = vunpack.c.h.b16 %v2518
      %v2615 = vunpack.c.l.b16 %v2519
      %v2616 = vunpack.c.l.b16 %v2520
      %v2617 = vunpack.c.h.b16 %v2520
      %v2618 = vunpack.c.l.b16 %v2521
      %v2619 = vunpack.c.l.b16 %v2522
      %v2620 = vunpack.c.h.b16 %v2522
      %v2621 = vunpack.c.l.b16 %v2523
      %v2622 = vpack.c.b16 %v2577, %v2574
      %v2623 = vpack.c.b16 %v2578, %v2575
      %v2624 = vpack.c.b16 %v2579, %v2576
      %v2625 = vpack.c.b16 %v2583, %v2580
      %v2626 = vpack.c.b16 %v2584, %v2581
      %v2627 = vpack.c.b16 %v2585, %v2582
      %v2628 = vpack.c.b16 %v2589, %v2586
      %v2629 = vpack.c.b16 %v2590, %v2587
      %v2630 = vpack.c.b16 %v2591, %v2588
      %v2631 = vpack.c.b16 %v2595, %v2592
      %v2632 = vpack.c.b16 %v2596, %v2593
      %v2633 = vpack.c.b16 %v2597, %v2594
      %v2634 = vpack.c.b16 %v2601, %v2598
      %v2635 = vpack.c.b16 %v2602, %v2599
      %v2636 = vpack.c.b16 %v2603, %v2600
      %v2637 = vpack.c.b16 %v2607, %v2604
      %v2638 = vpack.c.b16 %v2608, %v2605
      %v2639 = vpack.c.b16 %v2609, %v2606
      %v2640 = vpack.c.b16 %v2613, %v2610
      %v2641 = vpack.c.b16 %v2614, %v2611
      %v2642 = vpack.c.b16 %v2615, %v2612
      %v2643 = vpack.c.b16 %v2619, %v2616
      %v2644 = vpack.c.b16 %v2620, %v2617
      %v2645 = vpack.c.b16 %v2621, %v2618
      %2670 = vmatprep.subr.bf16.mxu0 %v2623
      %2671 = vmatpush1.bf16.msra.mxu0 %v2622
      %2672 = vmatprep.subr.bf16.mxu0 %v2626
      %2673 = vmatpush1.bf16.msra.mxu0 %v2625
      %2674 = vmatprep.subr.bf16.mxu0 %v2629
      %2675 = vmatpush1.bf16.msra.mxu0 %v2628
      %2676 = vmatprep.subr.bf16.mxu0 %v2632
      %2677 = vmatpush1.bf16.msra.mxu0 %v2631
      %2678 = vmatprep.subr.bf16.mxu0 %v2635
      %2679 = vmatpush1.bf16.msra.mxu0 %v2634
      %2680 = vmatprep.subr.bf16.mxu0 %v2638
      %2681 = vmatpush1.bf16.msra.mxu0 %v2637
      %2682 = vmatprep.subr.bf16.mxu0 %v2641
      %2683 = vmatpush1.bf16.msra.mxu0 %v2640
      %2684 = vmatprep.subr.bf16.mxu0 %v2644
      %2685 = vmatpush1.bf16.msra.mxu0 %v2643
      %2686 = vmatprep.subr.bf16.mxu0 0
      %2687 = vmatpush1.bf16.msra.mxu0 0
      %2688 = vmatprep.subr.bf16.mxu0 0
      %2689 = vmatpush1.bf16.msra.mxu0 0
      %2690 = vmatprep.subr.bf16.mxu0 0
      %2691 = vmatpush1.bf16.msra.mxu0 0
      %2692 = vmatprep.subr.bf16.mxu0 0
      %2693 = vmatpush1.bf16.msra.mxu0 0
      %2694 = vmatprep.subr.bf16.mxu0 0
      %2695 = vmatpush1.bf16.msra.mxu0 0
      %2696 = vmatprep.subr.bf16.mxu0 0
      %2697 = vmatpush1.bf16.msra.mxu0 0
      %2698 = vmatprep.subr.bf16.mxu0 0
      %2699 = vmatpush1.bf16.msra.mxu0 0
      %2700 = vmatprep.subr.bf16.mxu0 0
      %2701 = vmatpush1.bf16.msra.mxu0 0
      %2702 = vmatprep.mubr.bf16.mxu0 0
      %2703 = vmatmul.mubr.bf16.gmra.mrb[0].mxu0 %v2489
      %v2704 = vpop.f32.mrb[0].mxu0
      %v2705 = vadd.f32 %v2530, %v2704
      %v2706 = vpop.f32.mrb[0].mxu0
      %v2707 = vadd.f32 %v2534, %v2706
      %v2708 = vpop.f32.mrb[0].mxu0
      %v2709 = vadd.f32 %v2530, %v2708
      %v2710 = vpop.f32.mrb[0].mxu0
      %v2711 = vadd.f32 %v2534, %v2710
      %2712 = vmatprep.mubr.bf16.mxu0 0
      %2713 = vmatmul.mubr.bf16.gmra.mrb[0].mxu0 %v2490
      %v2714 = vpop.f32.mrb[0].mxu0
      %v2715 = vadd.f32 %v2530, %v2714
      %v2716 = vpop.f32.mrb[0].mxu0
      %v2717 = vadd.f32 %v2534, %v2716
      %v2718 = vpop.f32.mrb[0].mxu0
      %v2719 = vpop.f32.mrb[0].mxu0
      %2720 = vdwg.mxu0
      %2721 = vmatprep.subr.bf16.mxu0 0
      %2722 = vmatpush1.bf16.msra.mxu0 %v2624
      %2723 = vmatprep.subr.bf16.mxu0 0
      %2724 = vmatpush1.bf16.msra.mxu0 %v2627
      %2725 = vmatprep.subr.bf16.mxu0 0
      %2726 = vmatpush1.bf16.msra.mxu0 %v2630
      %2727 = vmatprep.subr.bf16.mxu0 0
      %2728 = vmatpush1.bf16.msra.mxu0 %v2633
      %2729 = vmatprep.subr.bf16.mxu0 0
      %2730 = vmatpush1.bf16.msra.mxu0 %v2636
      %2731 = vmatprep.subr.bf16.mxu0 0
      %2732 = vmatpush1.bf16.msra.mxu0 %v2639
      %2733 = vmatprep.subr.bf16.mxu0 0
      %2734 = vmatpush1.bf16.msra.mxu0 %v2642
      %2735 = vmatprep.subr.bf16.mxu0 0
      %2736 = vmatpush1.bf16.msra.mxu0 %v2645
      %2737 = vmatprep.subr.bf16.mxu0 0
      %2738 = vmatpush1.bf16.msra.mxu0 0
      %2739 = vmatprep.subr.bf16.mxu0 0
      %2740 = vmatpush1.bf16.msra.mxu0 0
      %2741 = vmatprep.subr.bf16.mxu0 0
      %2742 = vmatpush1.bf16.msra.mxu0 0
      %2743 = vmatprep.subr.bf16.mxu0 0
      %2744 = vmatpush1.bf16.msra.mxu0 0
      %2745 = vmatprep.subr.bf16.mxu0 0
      %2746 = vmatpush1.bf16.msra.mxu0 0
      %2747 = vmatprep.subr.bf16.mxu0 0
      %2748 = vmatpush1.bf16.msra.mxu0 0
      %2749 = vmatprep.subr.bf16.mxu0 0
      %2750 = vmatpush1.bf16.msra.mxu0 0
      %2751 = vmatprep.subr.bf16.mxu0 0
      %2752 = vmatpush1.bf16.msra.mxu0 0
      %2753 = vmatprep.mubr.bf16.mxu0 0
      %2754 = vmatmul.mubr.bf16.gmra.mrb[0].mxu0 %v2489
      %v2755 = vpop.f32.mrb[0].mxu0
      %v2756 = vadd.f32 %v2538, %v2755
      %v2757 = vpop.f32.mrb[0].mxu0
      %v2758 = vpop.f32.mrb[0].mxu0
      %v2759 = vadd.f32 %v2538, %v2758
      %v2760 = vpop.f32.mrb[0].mxu0
      %2761 = vmatprep.mubr.bf16.mxu0 0
      %2762 = vmatmul.mubr.bf16.gmra.mrb[0].mxu0 %v2490
      %v2763 = vpop.f32.mrb[0].mxu0
      %v2764 = vadd.f32 %v2538, %v2763
      %v2765 = vpop.f32.mrb[0].mxu0
      %v2766 = vpop.f32.mrb[0].mxu0
      %v2767 = vpop.f32.mrb[0].mxu0
      %2768 = vdwg.mxu0
      %v2769 = vpack.c.bf16 %v2709, %v2705
      %v2770 = vpack.c.bf16 %v2715, %v2715
      %v2771 = vpack.c.bf16 %v2711, %v2707
      %v2772 = vpack.c.bf16 %v2717, %v2717
      %v2774 = vsel %vm1141, %v2769, 0
      %v2777 = vsel %vm1141, %v2770, 0
      %v2780 = vsel %vm1141, %v2771, 0
      %v2783 = vsel %vm1141, %v2772, 0
      %2785 = vmatprep.subr.bf16.mxu0 0
      %2786 = vmatpush1.bf16.xpose.msra.mxu0 %v2780
      %2787 = vmatprep.subr.bf16.mxu0 0
      %2788 = vmatpush1.bf16.xpose.msra.mxu0 %v2783
      %2789 = vmatprep.subr.bf16.mxu0 0
      %2790 = vmatpush1.bf16.xpose.msra.mxu0 0
      %2791 = vmatprep.subr.bf16.mxu0 0
      %2792 = vmatpush1.bf16.xpose.msra.mxu0 0
      %2793 = vmatprep.subr.bf16.mxu0 0
      %2794 = vmatpush1.bf16.xpose.msra.mxu0 0
      %2795 = vmatprep.subr.bf16.mxu0 0
      %2796 = vmatpush1.bf16.xpose.msra.mxu0 0
      %2797 = vmatprep.subr.bf16.mxu0 0
      %2798 = vmatpush1.bf16.xpose.msra.mxu0 0
      %2799 = vmatprep.subr.bf16.mxu0 0
      %2800 = vmatpush1.bf16.xpose.msra.mxu0 0
      %2801 = vmatprep.subr.bf16.mxu0 0
      %2802 = vmatpush1.bf16.xpose.msra.mxu0 0
      %2803 = vmatprep.subr.bf16.mxu0 0
      %2804 = vmatpush1.bf16.xpose.msra.mxu0 0
      %2805 = vmatprep.subr.bf16.mxu0 0
      %2806 = vmatpush1.bf16.xpose.msra.mxu0 0
      %2807 = vmatprep.subr.bf16.mxu0 0
      %2808 = vmatpush1.bf16.xpose.msra.mxu0 0
      %2809 = vmatprep.subr.bf16.mxu0 0
      %2810 = vmatpush1.bf16.xpose.msra.mxu0 0
      %2811 = vmatprep.subr.bf16.mxu0 0
      %2812 = vmatpush1.bf16.xpose.msra.mxu0 0
      %2813 = vmatprep.subr.bf16.mxu0 0
      %2814 = vmatpush1.bf16.xpose.msra.mxu0 0
      %2815 = vmatprep.subr.bf16.mxu0 0
      %2816 = vmatpush1.bf16.xpose.msra.mxu0 0
      %2817 = vmatprep.mubr.bf16.mxu0 0
      %2818 = vmatmul.mubr.bf16.gmra.mrb[0].mxu0 %v2774
      %v2819 = vpop.f32.mrb[0].mxu0
      %v2820 = vadd.f32 %v804, %v2819
      %v2821 = vpop.f32.mrb[0].mxu0
      %v2822 = vpop.f32.mrb[0].mxu0
      %v2823 = vadd.f32 %v804, %v2822
      %v2824 = vpop.f32.mrb[0].mxu0
      %2825 = vmatprep.mubr.bf16.mxu0 0
      %2826 = vmatmul.mubr.bf16.gmra.mrb[0].mxu0 %v2777
      %v2827 = vpop.f32.mrb[0].mxu0
      %v2828 = vadd.f32 %v804, %v2827
      %v2829 = vpop.f32.mrb[0].mxu0
      %v2830 = vpop.f32.mrb[0].mxu0
      %v2831 = vpop.f32.mrb[0].mxu0
      %2832 = vdwg.mxu0
      %v2833 = vsel %vm1202, %v2820, -inf
      %2834 = vmax.xlane.f32.xlu0 %v2833
      %v2835 = vpop.xlane.xlu0 %2834
      %v2836 = vsel %vm1202, %v2823, -inf
      %2837 = vmax.xlane.f32.xlu0 %v2836
      %v2838 = vpop.xlane.xlu0 %2837
      %v2839 = vsel %vm1202, %v2828, -inf
      %2840 = vmax.xlane.f32.xlu0 %v2839
      %v2841 = vpop.xlane.xlu0 %2840
      %v2842 = vsub.f32 %v2820, %v2835
      %v2843 = vsub.f32 %v2823, %v2838
      %v2844 = vsub.f32 %v2828, %v2841
      %v2845 = vmul.f32 %v2842, 1.442695
      %v2846 = vpow.pop %v2845
      %v2847 = vmul.f32 %v2843, 1.442695
      %v2848 = vpow.pop %v2847
      %v2849 = vmul.f32 %v2844, 1.442695
      %v2850 = vpow.pop %v2849
      %v2851 = vsel %vm1202, %v2846, 0.0
      %2852 = vadd.xlane.f32.xlu0 %v2851
      %v2853 = vpop.xlane.xlu0 %2852
      %v2854 = vsel %vm1202, %v2848, 0.0
      %2855 = vadd.xlane.f32.xlu0 %v2854
      %v2856 = vpop.xlane.xlu0 %2855
      %v2857 = vsel %vm1202, %v2850, 0.0
      %2858 = vadd.xlane.f32.xlu0 %v2857
      %v2859 = vpop.xlane.xlu0 %2858
      %v2860 = vrcp.pop %v2853
      %v2861 = vmul.f32 %v2846, %v2860
      %v2862 = vrcp.pop %v2856
      %v2863 = vmul.f32 %v2848, %v2862
      %v2864 = vrcp.pop %v2859
      %v2865 = vmul.f32 %v2850, %v2864
      %v2866 = vpack.c.bf16 %v2863, %v2861
      %v2867 = vpack.c.bf16 %v2865, %v2865
      %v2868 = vpack.c.bf16 %v2759, %v2756
      %v2869 = vpack.c.bf16 %v2764, %v2764
      %v2871 = vsel %vm1202, %v2866, 0
      %v2874 = vsel %vm1202, %v2867, 0
      %v2877 = vsel %vm1246, %v2869, 0
      %2879 = vmatprep.subr.bf16.mxu0 0
      %2880 = vmatpush1.bf16.msra.mxu0 %v2868
      %2881 = vmatprep.subr.bf16.mxu0 0
      %2882 = vmatpush1.bf16.msra.mxu0 %v2877
      %2883 = vmatprep.subr.bf16.mxu0 0
      %2884 = vmatpush1.bf16.msra.mxu0 0
      %2885 = vmatprep.subr.bf16.mxu0 0
      %2886 = vmatpush1.bf16.msra.mxu0 0
      %2887 = vmatprep.subr.bf16.mxu0 0
      %2888 = vmatpush1.bf16.msra.mxu0 0
      %2889 = vmatprep.subr.bf16.mxu0 0
      %2890 = vmatpush1.bf16.msra.mxu0 0
      %2891 = vmatprep.subr.bf16.mxu0 0
      %2892 = vmatpush1.bf16.msra.mxu0 0
      %2893 = vmatprep.subr.bf16.mxu0 0
      %2894 = vmatpush1.bf16.msra.mxu0 0
      %2895 = vmatprep.subr.bf16.mxu0 0
      %2896 = vmatpush1.bf16.msra.mxu0 0
      %2897 = vmatprep.subr.bf16.mxu0 0
      %2898 = vmatpush1.bf16.msra.mxu0 0
      %2899 = vmatprep.subr.bf16.mxu0 0
      %2900 = vmatpush1.bf16.msra.mxu0 0
      %2901 = vmatprep.subr.bf16.mxu0 0
      %2902 = vmatpush1.bf16.msra.mxu0 0
      %2903 = vmatprep.subr.bf16.mxu0 0
      %2904 = vmatpush1.bf16.msra.mxu0 0
      %2905 = vmatprep.subr.bf16.mxu0 0
      %2906 = vmatpush1.bf16.msra.mxu0 0
      %2907 = vmatprep.subr.bf16.mxu0 0
      %2908 = vmatpush1.bf16.msra.mxu0 0
      %2909 = vmatprep.subr.bf16.mxu0 0
      %2910 = vmatpush1.bf16.msra.mxu0 0
      %2911 = vmatprep.mubr.bf16.mxu0 0
      %2912 = vmatmul.mubr.bf16.gmra.mrb[0].mxu0 %v2871
      %v2913 = vpop.f32.mrb[0].mxu0
      %v2914 = vadd.f32 0.0, %v2913
      %v2915 = vpop.f32.mrb[0].mxu0
      %v2916 = vpop.f32.mrb[0].mxu0
      %v2917 = vadd.f32 0.0, %v2916
      %v2918 = vpop.f32.mrb[0].mxu0
      %2919 = vmatprep.mubr.bf16.mxu0 0
      %2920 = vmatmul.mubr.bf16.gmra.mrb[0].mxu0 %v2874
      %v2921 = vpop.f32.mrb[0].mxu0
      %v2922 = vadd.f32 0.0, %v2921
      %v2923 = vpop.f32.mrb[0].mxu0
      %v2924 = vpop.f32.mrb[0].mxu0
      %v2925 = vpop.f32.mrb[0].mxu0
      %2926 = vdwg.mxu0
      %2929 = vrot.lane.b32.xlu0 %v2769, 96
      %v2930 = vpop.permute.xlu0 %2929
      %2931 = vrot.lane.b32.xlu0 %v2770, 96
      %v2932 = vpop.permute.xlu0 %2931
      %2935 = vrot.lane.b32.xlu0 %v2771, 96
      %v2936 = vpop.permute.xlu0 %2935
      %2937 = vrot.lane.b32.xlu0 %v2772, 96
      %v2938 = vpop.permute.xlu0 %2937
      %v2940 = vsel %vm1141, %v2930, 0
      %v2943 = vsel %vm1141, %v2932, 0
      %v2946 = vsel %vm1141, %v2936, 0
      %v2949 = vsel %vm1141, %v2938, 0
      %2951 = vmatprep.subr.bf16.mxu0 0
      %2952 = vmatpush1.bf16.xpose.msra.mxu0 %v2946
      %2953 = vmatprep.subr.bf16.mxu0 0
      %2954 = vmatpush1.bf16.xpose.msra.mxu0 %v2949
      %2955 = vmatprep.subr.bf16.mxu0 0
      %2956 = vmatpush1.bf16.xpose.msra.mxu0 0
      %2957 = vmatprep.subr.bf16.mxu0 0
      %2958 = vmatpush1.bf16.xpose.msra.mxu0 0
      %2959 = vmatprep.subr.bf16.mxu0 0
      %2960 = vmatpush1.bf16.xpose.msra.mxu0 0
      %2961 = vmatprep.subr.bf16.mxu0 0
      %2962 = vmatpush1.bf16.xpose.msra.mxu0 0
      %2963 = vmatprep.subr.bf16.mxu0 0
      %2964 = vmatpush1.bf16.xpose.msra.mxu0 0
      %2965 = vmatprep.subr.bf16.mxu0 0
      %2966 = vmatpush1.bf16.xpose.msra.mxu0 0
      %2967 = vmatprep.subr.bf16.mxu0 0
      %2968 = vmatpush1.bf16.xpose.msra.mxu0 0
      %2969 = vmatprep.subr.bf16.mxu0 0
      %2970 = vmatpush1.bf16.xpose.msra.mxu0 0
      %2971 = vmatprep.subr.bf16.mxu0 0
      %2972 = vmatpush1.bf16.xpose.msra.mxu0 0
      %2973 = vmatprep.subr.bf16.mxu0 0
      %2974 = vmatpush1.bf16.xpose.msra.mxu0 0
      %2975 = vmatprep.subr.bf16.mxu0 0
      %2976 = vmatpush1.bf16.xpose.msra.mxu0 0
      %2977 = vmatprep.subr.bf16.mxu0 0
      %2978 = vmatpush1.bf16.xpose.msra.mxu0 0
      %2979 = vmatprep.subr.bf16.mxu0 0
      %2980 = vmatpush1.bf16.xpose.msra.mxu0 0
      %2981 = vmatprep.subr.bf16.mxu0 0
      %2982 = vmatpush1.bf16.xpose.msra.mxu0 0
      %2983 = vmatprep.mubr.bf16.mxu0 0
      %2984 = vmatmul.mubr.bf16.gmra.mrb[0].mxu0 %v2940
      %v2985 = vpop.f32.mrb[0].mxu0
      %v2986 = vadd.f32 %v804, %v2985
      %v2987 = vpop.f32.mrb[0].mxu0
      %v2988 = vpop.f32.mrb[0].mxu0
      %v2989 = vadd.f32 %v804, %v2988
      %v2990 = vpop.f32.mrb[0].mxu0
      %2991 = vmatprep.mubr.bf16.mxu0 0
      %2992 = vmatmul.mubr.bf16.gmra.mrb[0].mxu0 %v2943
      %v2993 = vpop.f32.mrb[0].mxu0
      %v2994 = vadd.f32 %v804, %v2993
      %v2995 = vpop.f32.mrb[0].mxu0
      %v2996 = vpop.f32.mrb[0].mxu0
      %v2997 = vpop.f32.mrb[0].mxu0
      %2998 = vdwg.mxu0
      %v2999 = vsel %vm1202, %v2986, -inf
      %3000 = vmax.xlane.f32.xlu0 %v2999
      %v3001 = vpop.xlane.xlu0 %3000
      %v3002 = vsel %vm1202, %v2989, -inf
      %3003 = vmax.xlane.f32.xlu0 %v3002
      %v3004 = vpop.xlane.xlu0 %3003
      %v3005 = vsel %vm1202, %v2994, -inf
      %3006 = vmax.xlane.f32.xlu0 %v3005
      %v3007 = vpop.xlane.xlu0 %3006
      %v3008 = vsub.f32 %v2986, %v3001
      %v3009 = vsub.f32 %v2989, %v3004
      %v3010 = vsub.f32 %v2994, %v3007
      %v3011 = vmul.f32 %v3008, 1.442695
      %v3012 = vpow.pop %v3011
      %v3013 = vmul.f32 %v3009, 1.442695
      %v3014 = vpow.pop %v3013
      %v3015 = vmul.f32 %v3010, 1.442695
      %v3016 = vpow.pop %v3015
      %v3017 = vsel %vm1202, %v3012, 0.0
      %3018 = vadd.xlane.f32.xlu0 %v3017
      %v3019 = vpop.xlane.xlu0 %3018
      %v3020 = vsel %vm1202, %v3014, 0.0
      %3021 = vadd.xlane.f32.xlu0 %v3020
      %v3022 = vpop.xlane.xlu0 %3021
      %v3023 = vsel %vm1202, %v3016, 0.0
      %3024 = vadd.xlane.f32.xlu0 %v3023
      %v3025 = vpop.xlane.xlu0 %3024
      %v3026 = vrcp.pop %v3019
      %v3027 = vmul.f32 %v3012, %v3026
      %v3028 = vrcp.pop %v3022
      %v3029 = vmul.f32 %v3014, %v3028
      %v3030 = vrcp.pop %v3025
      %v3031 = vmul.f32 %v3016, %v3030
      %v3032 = vpack.c.bf16 %v3029, %v3027
      %v3033 = vpack.c.bf16 %v3031, %v3031
      %3036 = vrot.lane.b32.xlu0 %v2868, 96
      %v3037 = vpop.permute.xlu0 %3036
      %3038 = vrot.lane.b32.xlu0 %v2869, 96
      %v3039 = vpop.permute.xlu0 %3038
      %v3042 = vsel %vm1202, %v3032, 0
      %v3045 = vsel %vm1202, %v3033, 0
      %v3048 = vsel %vm1246, %v3039, 0
      %3050 = vmatprep.subr.bf16.mxu0 0
      %3051 = vmatpush1.bf16.msra.mxu0 %v3037
      %3052 = vmatprep.subr.bf16.mxu0 0
      %3053 = vmatpush1.bf16.msra.mxu0 %v3048
      %3054 = vmatprep.subr.bf16.mxu0 0
      %3055 = vmatpush1.bf16.msra.mxu0 0
      %3056 = vmatprep.subr.bf16.mxu0 0
      %3057 = vmatpush1.bf16.msra.mxu0 0
      %3058 = vmatprep.subr.bf16.mxu0 0
      %3059 = vmatpush1.bf16.msra.mxu0 0
      %3060 = vmatprep.subr.bf16.mxu0 0
      %3061 = vmatpush1.bf16.msra.mxu0 0
      %3062 = vmatprep.subr.bf16.mxu0 0
      %3063 = vmatpush1.bf16.msra.mxu0 0
      %3064 = vmatprep.subr.bf16.mxu0 0
      %3065 = vmatpush1.bf16.msra.mxu0 0
      %3066 = vmatprep.subr.bf16.mxu0 0
      %3067 = vmatpush1.bf16.msra.mxu0 0
      %3068 = vmatprep.subr.bf16.mxu0 0
      %3069 = vmatpush1.bf16.msra.mxu0 0
      %3070 = vmatprep.subr.bf16.mxu0 0
      %3071 = vmatpush1.bf16.msra.mxu0 0
      %3072 = vmatprep.subr.bf16.mxu0 0
      %3073 = vmatpush1.bf16.msra.mxu0 0
      %3074 = vmatprep.subr.bf16.mxu0 0
      %3075 = vmatpush1.bf16.msra.mxu0 0
      %3076 = vmatprep.subr.bf16.mxu0 0
      %3077 = vmatpush1.bf16.msra.mxu0 0
      %3078 = vmatprep.subr.bf16.mxu0 0
      %3079 = vmatpush1.bf16.msra.mxu0 0
      %3080 = vmatprep.subr.bf16.mxu0 0
      %3081 = vmatpush1.bf16.msra.mxu0 0
      %3082 = vmatprep.mubr.bf16.mxu0 0
      %3083 = vmatmul.mubr.bf16.gmra.mrb[0].mxu0 %v3042
      %v3084 = vpop.f32.mrb[0].mxu0
      %v3085 = vadd.f32 0.0, %v3084
      %v3086 = vpop.f32.mrb[0].mxu0
      %v3087 = vpop.f32.mrb[0].mxu0
      %v3088 = vadd.f32 0.0, %v3087
      %v3089 = vpop.f32.mrb[0].mxu0
      %3090 = vmatprep.mubr.bf16.mxu0 0
      %3091 = vmatmul.mubr.bf16.gmra.mrb[0].mxu0 %v3045
      %v3092 = vpop.f32.mrb[0].mxu0
      %v3093 = vadd.f32 0.0, %v3092
      %v3094 = vpop.f32.mrb[0].mxu0
      %v3095 = vpop.f32.mrb[0].mxu0
      %v3096 = vpop.f32.mrb[0].mxu0
      %3097 = vdwg.mxu0
      %3098 = vrot.lane.b32.xlu0 %v2769, 64
      %v3099 = vpop.permute.xlu0 %3098
      %3100 = vrot.lane.b32.xlu0 %v2770, 64
      %v3101 = vpop.permute.xlu0 %3100
      %3102 = vrot.lane.b32.xlu0 %v2771, 64
      %v3103 = vpop.permute.xlu0 %3102
      %3104 = vrot.lane.b32.xlu0 %v2772, 64
      %v3105 = vpop.permute.xlu0 %3104
      %v3107 = vsel %vm1141, %v3099, 0
      %v3110 = vsel %vm1141, %v3101, 0
      %v3113 = vsel %vm1141, %v3103, 0
      %v3116 = vsel %vm1141, %v3105, 0
      %3118 = vmatprep.subr.bf16.mxu0 0
      %3119 = vmatpush1.bf16.xpose.msra.mxu0 %v3113
      %3120 = vmatprep.subr.bf16.mxu0 0
      %3121 = vmatpush1.bf16.xpose.msra.mxu0 %v3116
      %3122 = vmatprep.subr.bf16.mxu0 0
      %3123 = vmatpush1.bf16.xpose.msra.mxu0 0
      %3124 = vmatprep.subr.bf16.mxu0 0
      %3125 = vmatpush1.bf16.xpose.msra.mxu0 0
      %3126 = vmatprep.subr.bf16.mxu0 0
      %3127 = vmatpush1.bf16.xpose.msra.mxu0 0
      %3128 = vmatprep.subr.bf16.mxu0 0
      %3129 = vmatpush1.bf16.xpose.msra.mxu0 0
      %3130 = vmatprep.subr.bf16.mxu0 0
      %3131 = vmatpush1.bf16.xpose.msra.mxu0 0
      %3132 = vmatprep.subr.bf16.mxu0 0
      %3133 = vmatpush1.bf16.xpose.msra.mxu0 0
      %3134 = vmatprep.subr.bf16.mxu0 0
      %3135 = vmatpush1.bf16.xpose.msra.mxu0 0
      %3136 = vmatprep.subr.bf16.mxu0 0
      %3137 = vmatpush1.bf16.xpose.msra.mxu0 0
      %3138 = vmatprep.subr.bf16.mxu0 0
      %3139 = vmatpush1.bf16.xpose.msra.mxu0 0
      %3140 = vmatprep.subr.bf16.mxu0 0
      %3141 = vmatpush1.bf16.xpose.msra.mxu0 0
      %3142 = vmatprep.subr.bf16.mxu0 0
      %3143 = vmatpush1.bf16.xpose.msra.mxu0 0
      %3144 = vmatprep.subr.bf16.mxu0 0
      %3145 = vmatpush1.bf16.xpose.msra.mxu0 0
      %3146 = vmatprep.subr.bf16.mxu0 0
      %3147 = vmatpush1.bf16.xpose.msra.mxu0 0
      %3148 = vmatprep.subr.bf16.mxu0 0
      %3149 = vmatpush1.bf16.xpose.msra.mxu0 0
      %3150 = vmatprep.mubr.bf16.mxu0 0
      %3151 = vmatmul.mubr.bf16.gmra.mrb[0].mxu0 %v3107
      %v3152 = vpop.f32.mrb[0].mxu0
      %v3153 = vadd.f32 %v804, %v3152
      %v3154 = vpop.f32.mrb[0].mxu0
      %v3155 = vpop.f32.mrb[0].mxu0
      %v3156 = vadd.f32 %v804, %v3155
      %v3157 = vpop.f32.mrb[0].mxu0
      %3158 = vmatprep.mubr.bf16.mxu0 0
      %3159 = vmatmul.mubr.bf16.gmra.mrb[0].mxu0 %v3110
      %v3160 = vpop.f32.mrb[0].mxu0
      %v3161 = vadd.f32 %v804, %v3160
      %v3162 = vpop.f32.mrb[0].mxu0
      %v3163 = vpop.f32.mrb[0].mxu0
      %v3164 = vpop.f32.mrb[0].mxu0
      %3165 = vdwg.mxu0
      %v3166 = vsel %vm1202, %v3153, -inf
      %3167 = vmax.xlane.f32.xlu0 %v3166
      %v3168 = vpop.xlane.xlu0 %3167
      %v3169 = vsel %vm1202, %v3156, -inf
      %3170 = vmax.xlane.f32.xlu0 %v3169
      %v3171 = vpop.xlane.xlu0 %3170
      %v3172 = vsel %vm1202, %v3161, -inf
      %3173 = vmax.xlane.f32.xlu0 %v3172
      %v3174 = vpop.xlane.xlu0 %3173
      %v3175 = vsub.f32 %v3153, %v3168
      %v3176 = vsub.f32 %v3156, %v3171
      %v3177 = vsub.f32 %v3161, %v3174
      %v3178 = vmul.f32 %v3175, 1.442695
      %v3179 = vpow.pop %v3178
      %v3180 = vmul.f32 %v3176, 1.442695
      %v3181 = vpow.pop %v3180
      %v3182 = vmul.f32 %v3177, 1.442695
      %v3183 = vpow.pop %v3182
      %v3184 = vsel %vm1202, %v3179, 0.0
      %3185 = vadd.xlane.f32.xlu0 %v3184
      %v3186 = vpop.xlane.xlu0 %3185
      %v3187 = vsel %vm1202, %v3181, 0.0
      %3188 = vadd.xlane.f32.xlu0 %v3187
      %v3189 = vpop.xlane.xlu0 %3188
      %v3190 = vsel %vm1202, %v3183, 0.0
      %3191 = vadd.xlane.f32.xlu0 %v3190
      %v3192 = vpop.xlane.xlu0 %3191
      %v3193 = vrcp.pop %v3186
      %v3194 = vmul.f32 %v3179, %v3193
      %v3195 = vrcp.pop %v3189
      %v3196 = vmul.f32 %v3181, %v3195
      %v3197 = vrcp.pop %v3192
      %v3198 = vmul.f32 %v3183, %v3197
      %v3199 = vpack.c.bf16 %v3196, %v3194
      %v3200 = vpack.c.bf16 %v3198, %v3198
      %3201 = vrot.lane.b32.xlu0 %v2868, 64
      %v3202 = vpop.permute.xlu0 %3201
      %3203 = vrot.lane.b32.xlu0 %v2869, 64
      %v3204 = vpop.permute.xlu0 %3203
      %v3207 = vsel %vm1202, %v3199, 0
      %v3210 = vsel %vm1202, %v3200, 0
      %v3213 = vsel %vm1246, %v3204, 0
      %3215 = vmatprep.subr.bf16.mxu0 0
      %3216 = vmatpush1.bf16.msra.mxu0 %v3202
      %3217 = vmatprep.subr.bf16.mxu0 0
      %3218 = vmatpush1.bf16.msra.mxu0 %v3213
      %3219 = vmatprep.subr.bf16.mxu0 0
      %3220 = vmatpush1.bf16.msra.mxu0 0
      %3221 = vmatprep.subr.bf16.mxu0 0
      %3222 = vmatpush1.bf16.msra.mxu0 0
      %3223 = vmatprep.subr.bf16.mxu0 0
      %3224 = vmatpush1.bf16.msra.mxu0 0
      %3225 = vmatprep.subr.bf16.mxu0 0
      %3226 = vmatpush1.bf16.msra.mxu0 0
      %3227 = vmatprep.subr.bf16.mxu0 0
      %3228 = vmatpush1.bf16.msra.mxu0 0
      %3229 = vmatprep.subr.bf16.mxu0 0
      %3230 = vmatpush1.bf16.msra.mxu0 0
      %3231 = vmatprep.subr.bf16.mxu0 0
      %3232 = vmatpush1.bf16.msra.mxu0 0
      %3233 = vmatprep.subr.bf16.mxu0 0
      %3234 = vmatpush1.bf16.msra.mxu0 0
      %3235 = vmatprep.subr.bf16.mxu0 0
      %3236 = vmatpush1.bf16.msra.mxu0 0
      %3237 = vmatprep.subr.bf16.mxu0 0
      %3238 = vmatpush1.bf16.msra.mxu0 0
      %3239 = vmatprep.subr.bf16.mxu0 0
      %3240 = vmatpush1.bf16.msra.mxu0 0
      %3241 = vmatprep.subr.bf16.mxu0 0
      %3242 = vmatpush1.bf16.msra.mxu0 0
      %3243 = vmatprep.subr.bf16.mxu0 0
      %3244 = vmatpush1.bf16.msra.mxu0 0
      %3245 = vmatprep.subr.bf16.mxu0 0
      %3246 = vmatpush1.bf16.msra.mxu0 0
      %3247 = vmatprep.mubr.bf16.mxu0 0
      %3248 = vmatmul.mubr.bf16.gmra.mrb[0].mxu0 %v3207
      %v3249 = vpop.f32.mrb[0].mxu0
      %v3250 = vadd.f32 0.0, %v3249
      %v3251 = vpop.f32.mrb[0].mxu0
      %v3252 = vpop.f32.mrb[0].mxu0
      %v3253 = vadd.f32 0.0, %v3252
      %v3254 = vpop.f32.mrb[0].mxu0
      %3255 = vmatprep.mubr.bf16.mxu0 0
      %3256 = vmatmul.mubr.bf16.gmra.mrb[0].mxu0 %v3210
      %v3257 = vpop.f32.mrb[0].mxu0
      %v3258 = vadd.f32 0.0, %v3257
      %v3259 = vpop.f32.mrb[0].mxu0
      %v3260 = vpop.f32.mrb[0].mxu0
      %v3261 = vpop.f32.mrb[0].mxu0
      %3262 = vdwg.mxu0
      %3263 = vrot.lane.b32.xlu0 %v2769, 32
      %v3264 = vpop.permute.xlu0 %3263
      %3265 = vrot.lane.b32.xlu0 %v2770, 32
      %v3266 = vpop.permute.xlu0 %3265
      %3267 = vrot.lane.b32.xlu0 %v2771, 32
      %v3268 = vpop.permute.xlu0 %3267
      %3269 = vrot.lane.b32.xlu0 %v2772, 32
      %v3270 = vpop.permute.xlu0 %3269
      %v3272 = vsel %vm1141, %v3264, 0
      %v3275 = vsel %vm1141, %v3266, 0
      %v3278 = vsel %vm1141, %v3268, 0
      %v3281 = vsel %vm1141, %v3270, 0
      %3283 = vmatprep.subr.bf16.mxu0 0
      %3284 = vmatpush1.bf16.xpose.msra.mxu0 %v3278
      %3285 = vmatprep.subr.bf16.mxu0 0
      %3286 = vmatpush1.bf16.xpose.msra.mxu0 %v3281
      %3287 = vmatprep.subr.bf16.mxu0 0
      %3288 = vmatpush1.bf16.xpose.msra.mxu0 0
      %3289 = vmatprep.subr.bf16.mxu0 0
      %3290 = vmatpush1.bf16.xpose.msra.mxu0 0
      %3291 = vmatprep.subr.bf16.mxu0 0
      %3292 = vmatpush1.bf16.xpose.msra.mxu0 0
      %3293 = vmatprep.subr.bf16.mxu0 0
      %3294 = vmatpush1.bf16.xpose.msra.mxu0 0
      %3295 = vmatprep.subr.bf16.mxu0 0
      %3296 = vmatpush1.bf16.xpose.msra.mxu0 0
      %3297 = vmatprep.subr.bf16.mxu0 0
      %3298 = vmatpush1.bf16.xpose.msra.mxu0 0
      %3299 = vmatprep.subr.bf16.mxu0 0
      %3300 = vmatpush1.bf16.xpose.msra.mxu0 0
      %3301 = vmatprep.subr.bf16.mxu0 0
      %3302 = vmatpush1.bf16.xpose.msra.mxu0 0
      %3303 = vmatprep.subr.bf16.mxu0 0
      %3304 = vmatpush1.bf16.xpose.msra.mxu0 0
      %3305 = vmatprep.subr.bf16.mxu0 0
      %3306 = vmatpush1.bf16.xpose.msra.mxu0 0
      %3307 = vmatprep.subr.bf16.mxu0 0
      %3308 = vmatpush1.bf16.xpose.msra.mxu0 0
      %3309 = vmatprep.subr.bf16.mxu0 0
      %3310 = vmatpush1.bf16.xpose.msra.mxu0 0
      %3311 = vmatprep.subr.bf16.mxu0 0
      %3312 = vmatpush1.bf16.xpose.msra.mxu0 0
      %3313 = vmatprep.subr.bf16.mxu0 0
      %3314 = vmatpush1.bf16.xpose.msra.mxu0 0
      %3315 = vmatprep.mubr.bf16.mxu0 0
      %3316 = vmatmul.mubr.bf16.gmra.mrb[0].mxu0 %v3272
      %v3317 = vpop.f32.mrb[0].mxu0
      %v3318 = vadd.f32 %v804, %v3317
      %v3319 = vpop.f32.mrb[0].mxu0
      %v3320 = vpop.f32.mrb[0].mxu0
      %v3321 = vadd.f32 %v804, %v3320
      %v3322 = vpop.f32.mrb[0].mxu0
      %3323 = vmatprep.mubr.bf16.mxu0 0
      %3324 = vmatmul.mubr.bf16.gmra.mrb[0].mxu0 %v3275
      %v3325 = vpop.f32.mrb[0].mxu0
      %v3326 = vadd.f32 %v804, %v3325
      %v3327 = vpop.f32.mrb[0].mxu0
      %v3328 = vpop.f32.mrb[0].mxu0
      %v3329 = vpop.f32.mrb[0].mxu0
      %3330 = vdwg.mxu0
      %v3331 = vsel %vm1202, %v3318, -inf
      %3332 = vmax.xlane.f32.xlu0 %v3331
      %v3333 = vpop.xlane.xlu0 %3332
      %v3334 = vsel %vm1202, %v3321, -inf
      %3335 = vmax.xlane.f32.xlu0 %v3334
      %v3336 = vpop.xlane.xlu0 %3335
      %v3337 = vsel %vm1202, %v3326, -inf
      %3338 = vmax.xlane.f32.xlu0 %v3337
      %v3339 = vpop.xlane.xlu0 %3338
      %v3340 = vsub.f32 %v3318, %v3333
      %v3341 = vsub.f32 %v3321, %v3336
      %v3342 = vsub.f32 %v3326, %v3339
      %v3343 = vmul.f32 %v3340, 1.442695
      %v3344 = vpow.pop %v3343
      %v3345 = vmul.f32 %v3341, 1.442695
      %v3346 = vpow.pop %v3345
      %v3347 = vmul.f32 %v3342, 1.442695
      %v3348 = vpow.pop %v3347
      %v3349 = vsel %vm1202, %v3344, 0.0
      %3350 = vadd.xlane.f32.xlu0 %v3349
      %v3351 = vpop.xlane.xlu0 %3350
      %v3352 = vsel %vm1202, %v3346, 0.0
      %3353 = vadd.xlane.f32.xlu0 %v3352
      %v3354 = vpop.xlane.xlu0 %3353
      %v3355 = vsel %vm1202, %v3348, 0.0
      %3356 = vadd.xlane.f32.xlu0 %v3355
      %v3357 = vpop.xlane.xlu0 %3356
      %v3358 = vrcp.pop %v3351
      %v3359 = vmul.f32 %v3344, %v3358
      %v3360 = vrcp.pop %v3354
      %v3361 = vmul.f32 %v3346, %v3360
      %v3362 = vrcp.pop %v3357
      %v3363 = vmul.f32 %v3348, %v3362
      %v3364 = vpack.c.bf16 %v3361, %v3359
      %v3365 = vpack.c.bf16 %v3363, %v3363
      %3366 = vrot.lane.b32.xlu0 %v2868, 32
      %v3367 = vpop.permute.xlu0 %3366
      %3368 = vrot.lane.b32.xlu0 %v2869, 32
      %v3369 = vpop.permute.xlu0 %3368
      %v3372 = vsel %vm1202, %v3364, 0
      %v3375 = vsel %vm1202, %v3365, 0
      %v3378 = vsel %vm1246, %v3369, 0
      %3380 = vmatprep.subr.bf16.mxu0 0
      %3381 = vmatpush1.bf16.msra.mxu0 %v3367
      %3382 = vmatprep.subr.bf16.mxu0 0
      %3383 = vmatpush1.bf16.msra.mxu0 %v3378
      %3384 = vmatprep.subr.bf16.mxu0 0
      %3385 = vmatpush1.bf16.msra.mxu0 0
      %3386 = vmatprep.subr.bf16.mxu0 0
      %3387 = vmatpush1.bf16.msra.mxu0 0
      %3388 = vmatprep.subr.bf16.mxu0 0
      %3389 = vmatpush1.bf16.msra.mxu0 0
      %3390 = vmatprep.subr.bf16.mxu0 0
      %3391 = vmatpush1.bf16.msra.mxu0 0
      %3392 = vmatprep.subr.bf16.mxu0 0
      %3393 = vmatpush1.bf16.msra.mxu0 0
      %3394 = vmatprep.subr.bf16.mxu0 0
      %3395 = vmatpush1.bf16.msra.mxu0 0
      %3396 = vmatprep.subr.bf16.mxu0 0
      %3397 = vmatpush1.bf16.msra.mxu0 0
      %3398 = vmatprep.subr.bf16.mxu0 0
      %3399 = vmatpush1.bf16.msra.mxu0 0
      %3400 = vmatprep.subr.bf16.mxu0 0
      %3401 = vmatpush1.bf16.msra.mxu0 0
      %3402 = vmatprep.subr.bf16.mxu0 0
      %3403 = vmatpush1.bf16.msra.mxu0 0
      %3404 = vmatprep.subr.bf16.mxu0 0
      %3405 = vmatpush1.bf16.msra.mxu0 0
      %3406 = vmatprep.subr.bf16.mxu0 0
      %3407 = vmatpush1.bf16.msra.mxu0 0
      %3408 = vmatprep.subr.bf16.mxu0 0
      %3409 = vmatpush1.bf16.msra.mxu0 0
      %3410 = vmatprep.subr.bf16.mxu0 0
      %3411 = vmatpush1.bf16.msra.mxu0 0
      %3412 = vmatprep.mubr.bf16.mxu0 0
      %3413 = vmatmul.mubr.bf16.gmra.mrb[0].mxu0 %v3372
      %v3414 = vpop.f32.mrb[0].mxu0
      %v3415 = vadd.f32 0.0, %v3414
      %v3416 = vpop.f32.mrb[0].mxu0
      %v3417 = vpop.f32.mrb[0].mxu0
      %v3418 = vadd.f32 0.0, %v3417
      %v3419 = vpop.f32.mrb[0].mxu0
      %3420 = vmatprep.mubr.bf16.mxu0 0
      %3421 = vmatmul.mubr.bf16.gmra.mrb[0].mxu0 %v3375
      %v3422 = vpop.f32.mrb[0].mxu0
      %v3423 = vadd.f32 0.0, %v3422
      %v3424 = vpop.f32.mrb[0].mxu0
      %v3425 = vpop.f32.mrb[0].mxu0
      %v3426 = vpop.f32.mrb[0].mxu0
      %3427 = vdwg.mxu0
      %3431 = vrot.lane.b32.xlu0 %v3085, 32
      %v3432 = vpop.permute.xlu0 %3431
      %3433 = vrot.lane.b32.xlu0 %v3088, 32
      %v3434 = vpop.permute.xlu0 %3433
      %3435 = vrot.lane.b32.xlu0 %v3093, 32
      %v3436 = vpop.permute.xlu0 %3435
      %3443 = vrot.lane.b32.xlu0 %v3250, 64
      %v3444 = vpop.permute.xlu0 %3443
      %3445 = vrot.lane.b32.xlu0 %v3253, 64
      %v3446 = vpop.permute.xlu0 %3445
      %3447 = vrot.lane.b32.xlu0 %v3258, 64
      %v3448 = vpop.permute.xlu0 %3447
      %3455 = vrot.lane.b32.xlu0 %v3415, 96
      %v3456 = vpop.permute.xlu0 %3455
      %3457 = vrot.lane.b32.xlu0 %v3418, 96
      %v3458 = vpop.permute.xlu0 %3457
      %3459 = vrot.lane.b32.xlu0 %v3423, 96
      %v3460 = vpop.permute.xlu0 %3459
      %v3464 = vsel %vm1141, %v2914, %v3432
      %v3465 = vsel %vm1141, %v2917, %v3434
      %v3466 = vsel %vm1141, %v2922, %v3436
      %v3467 = vsel %vm1838, %v3464, %v3444
      %v3468 = vsel %vm1838, %v3465, %v3446
      %v3469 = vsel %vm1838, %v3466, %v3448
      %v3470 = vsel %vm1842, %v3467, %v3456
      %v3471 = vsel %vm1842, %v3468, %v3458
      %v3472 = vsel %vm1842, %v3469, %v3460
      %v3473 = vpack.c.bf16 %v3471, %v3470
      %v3474 = vpack.c.bf16 %v3472, %v3472
      %s3475 = scalar_lea.vmem %s7, 64
      %v3476 = vld [vmem:[%s3475] sm:$0xf]
      %v3477 = vld [vmem:[%s3475 + $0x4] sm:$0xf]
      %v3478 = vld [vmem:[%s3475 + $0x8] sm:$0xf]
      %v3479 = vld [vmem:[%s3475 + $0xc] sm:$0xf]
      %v3480 = vld [vmem:[%s3475 + $0x10] sm:$0xf]
      %v3481 = vld [vmem:[%s3475 + $0x14] sm:$0xf]
      %v3482 = vld [vmem:[%s3475 + $0x18] sm:$0xf]
      %v3483 = vld [vmem:[%s3475 + $0x1c] sm:$0xf]
      %v3484 = vld [vmem:[%s3475 + $0x20] sm:$0xf]
      %v3485 = vld [vmem:[%s3475 + $0x24] sm:$0xf]
      %v3486 = vld [vmem:[%s3475 + $0x28] sm:$0xf]
      %v3487 = vld [vmem:[%s3475 + $0x2c] sm:$0xf]
      %v3488 = vld [vmem:[%s3475 + $0x30] sm:$0xf]
      %v3489 = vld [vmem:[%s3475 + $0x34] sm:$0xf]
      %v3490 = vld [vmem:[%s3475 + $0x38] sm:$0xf]
      %v3491 = vld [vmem:[%s3475 + $0x3c] sm:$0xf]
      %v3508 = vunpack.c.l.b16 %v3476
      %v3509 = vunpack.c.l.b16 %v3477
      %v3510 = vunpack.c.l.b16 %v3478
      %v3511 = vunpack.c.l.b16 %v3479
      %v3512 = vunpack.c.l.b16 %v3480
      %v3513 = vunpack.c.l.b16 %v3481
      %v3514 = vunpack.c.l.b16 %v3482
      %v3515 = vunpack.c.l.b16 %v3483
      %v3516 = vunpack.c.l.b16 %v3484
      %v3517 = vunpack.c.l.b16 %v3485
      %v3518 = vunpack.c.l.b16 %v3486
      %v3519 = vunpack.c.l.b16 %v3487
      %v3520 = vunpack.c.l.b16 %v3488
      %v3521 = vunpack.c.l.b16 %v3489
      %v3522 = vunpack.c.l.b16 %v3490
      %v3523 = vunpack.c.l.b16 %v3491
      %v3524 = vpack.c.b16 %v3509, %v3508
      %v3525 = vpack.c.b16 %v3511, %v3510
      %v3526 = vpack.c.b16 %v3513, %v3512
      %v3527 = vpack.c.b16 %v3515, %v3514
      %v3528 = vpack.c.b16 %v3517, %v3516
      %v3529 = vpack.c.b16 %v3519, %v3518
      %v3530 = vpack.c.b16 %v3521, %v3520
      %v3531 = vpack.c.b16 %v3523, %v3522
      %3540 = vmatprep.subr.bf16.mxu0 0
      %3541 = vmatpush1.bf16.msra.mxu0 %v3524
      %3542 = vmatprep.subr.bf16.mxu0 0
      %3543 = vmatpush1.bf16.msra.mxu0 %v3525
      %3544 = vmatprep.subr.bf16.mxu0 0
      %3545 = vmatpush1.bf16.msra.mxu0 %v3526
      %3546 = vmatprep.subr.bf16.mxu0 0
      %3547 = vmatpush1.bf16.msra.mxu0 %v3527
      %3548 = vmatprep.subr.bf16.mxu0 0
      %3549 = vmatpush1.bf16.msra.mxu0 %v3528
      %3550 = vmatprep.subr.bf16.mxu0 0
      %3551 = vmatpush1.bf16.msra.mxu0 %v3529
      %3552 = vmatprep.subr.bf16.mxu0 0
      %3553 = vmatpush1.bf16.msra.mxu0 %v3530
      %3554 = vmatprep.subr.bf16.mxu0 0
      %3555 = vmatpush1.bf16.msra.mxu0 %v3531
      %3556 = vmatprep.subr.bf16.mxu0 0
      %3557 = vmatpush1.bf16.msra.mxu0 0
      %3558 = vmatprep.subr.bf16.mxu0 0
      %3559 = vmatpush1.bf16.msra.mxu0 0
      %3560 = vmatprep.subr.bf16.mxu0 0
      %3561 = vmatpush1.bf16.msra.mxu0 0
      %3562 = vmatprep.subr.bf16.mxu0 0
      %3563 = vmatpush1.bf16.msra.mxu0 0
      %3564 = vmatprep.subr.bf16.mxu0 0
      %3565 = vmatpush1.bf16.msra.mxu0 0
      %3566 = vmatprep.subr.bf16.mxu0 0
      %3567 = vmatpush1.bf16.msra.mxu0 0
      %3568 = vmatprep.subr.bf16.mxu0 0
      %3569 = vmatpush1.bf16.msra.mxu0 0
      %3570 = vmatprep.subr.bf16.mxu0 0
      %3571 = vmatpush1.bf16.msra.mxu0 0
      %3572 = vmatprep.mubr.bf16.mxu0 0
      %3573 = vmatmul.mubr.bf16.gmra.mrb[0].mxu0 %v3473
      %v3574 = vpop.f32.mrb[0].mxu0
      %v3575 = vadd.f32 0.0, %v3574
      %v3576 = vpop.f32.mrb[0].mxu0
      %v3577 = vpop.f32.mrb[0].mxu0
      %v3578 = vadd.f32 0.0, %v3577
      %v3579 = vpop.f32.mrb[0].mxu0
      %3580 = vmatprep.mubr.bf16.mxu0 0
      %3581 = vmatmul.mubr.bf16.gmra.mrb[0].mxu0 %v3474
      %v3582 = vpop.f32.mrb[0].mxu0
      %v3583 = vadd.f32 0.0, %v3582
      %v3584 = vpop.f32.mrb[0].mxu0
      %v3585 = vpop.f32.mrb[0].mxu0
      %v3586 = vpop.f32.mrb[0].mxu0
      %3587 = vdwg.mxu0
      %v3588 = vadd.f32 %v2431, %v3575
      %v3589 = vadd.f32 %v2432, %v3578
      %v3590 = vadd.f32 %v2433, %v3583
      %s3591 = scalar_lea.vmem %s8, 1
      %v3592 = vld [vmem:[%s3591] sm:$0x1]
      %v3594 = vlaneseq
      %v3595 = vshrl.u32 %v3594, 7
      %v3596 = vsub.s32 0, %v3595
      %v3597 = vrot.slane %v3592, %v3596
      %v3599 = vadd.f32 %v3588, %v3597
      %v3600 = vadd.f32 %v3589, %v3597
      %v3601 = vadd.f32 %v3590, %v3597
      %s3602 = scalar_lea.vmem %s9, 1
      %v3603 = vld [vmem:[%s3602] sm:$0x1]
      %s3604 = scalar_lea.vmem %s10, 1
      %v3605 = vld [vmem:[%s3604] sm:$0x1]
      %3606 = vadd.xlane.f32.xlu0 %v3599
      %v3607 = vpop.xlane.xlu0 %3606
      %3608 = vadd.xlane.f32.xlu0 %v3600
      %v3609 = vpop.xlane.xlu0 %3608
      %3610 = vadd.xlane.f32.xlu0 %v3601
      %v3611 = vpop.xlane.xlu0 %3610
      %v3612 = vmul.f32 %v3607, %v813
      %v3613 = vmul.f32 %v3609, %v813
      %v3614 = vmul.f32 %v3611, %v813
      %v3615 = vsub.f32 %v3599, %v3612
      %v3616 = vsub.f32 %v3600, %v3613
      %v3617 = vsub.f32 %v3601, %v3614
      %v3618 = vmul.f32 %v3615, %v3615
      %v3619 = vmul.f32 %v3616, %v3616
      %v3620 = vmul.f32 %v3617, %v3617
      %3621 = vadd.xlane.f32.xlu0 %v3618
      %v3622 = vpop.xlane.xlu0 %3621
      %3623 = vadd.xlane.f32.xlu0 %v3619
      %v3624 = vpop.xlane.xlu0 %3623
      %3625 = vadd.xlane.f32.xlu0 %v3620
      %v3626 = vpop.xlane.xlu0 %3625
      %v3627 = vmul.f32 %v3622, %v813
      %v3628 = vmul.f32 %v3624, %v813
      %v3629 = vmul.f32 %v3626, %v813
      %v3630 = vadd.f32 %v3627, 1e-06
      %v3631 = vadd.f32 %v3628, 1e-06
      %v3632 = vadd.f32 %v3629, 1e-06
      %v3633 = vrsqrt.pop %v3630
      %v3634 = vrsqrt.pop %v3631
      %v3635 = vrsqrt.pop %v3632
      %v3636 = vmul.f32 %v3615, %v3633
      %v3637 = vmul.f32 %v3616, %v3634
      %v3638 = vmul.f32 %v3617, %v3635
      %v3640 = vlaneseq
      %v3641 = vshrl.u32 %v3640, 7
      %v3642 = vsub.s32 0, %v3641
      %v3643 = vrot.slane %v3603, %v3642
      %v3645 = vmul.f32 %v3636, %v3643
      %v3646 = vmul.f32 %v3637, %v3643
      %v3647 = vmul.f32 %v3638, %v3643
      %v3649 = vlaneseq
      %v3650 = vshrl.u32 %v3649, 7
      %v3651 = vsub.s32 0, %v3650
      %v3652 = vrot.slane %v3605, %v3651
      %v3654 = vadd.f32 %v3645, %v3652
      %v3655 = vadd.f32 %v3646, %v3652
      %v3656 = vadd.f32 %v3647, %v3652
      %v3657 = vpack.c.bf16 %v3655, %v3654
      %v3658 = vpack.c.bf16 %v3656, %v3656
      %s3659 = scalar_lea.vmem %s11, 128
      %v3660 = vld [vmem:[%s3659] sm:$0xff]
      %v3661 = vld [vmem:[%s3659 + $0x8] sm:$0xff]
      %v3662 = vld [vmem:[%s3659 + $0x10] sm:$0xff]
      %v3663 = vld [vmem:[%s3659 + $0x18] sm:$0xff]
      %v3664 = vld [vmem:[%s3659 + $0x20] sm:$0xff]
      %v3665 = vld [vmem:[%s3659 + $0x28] sm:$0xff]
      %v3666 = vld [vmem:[%s3659 + $0x30] sm:$0xff]
      %v3667 = vld [vmem:[%s3659 + $0x38] sm:$0xff]
      %v3668 = vld [vmem:[%s3659 + $0x40] sm:$0xff]
      %v3669 = vld [vmem:[%s3659 + $0x48] sm:$0xff]
      %v3670 = vld [vmem:[%s3659 + $0x50] sm:$0xff]
      %v3671 = vld [vmem:[%s3659 + $0x58] sm:$0xff]
      %v3672 = vld [vmem:[%s3659 + $0x60] sm:$0xff]
      %v3673 = vld [vmem:[%s3659 + $0x68] sm:$0xff]
      %v3674 = vld [vmem:[%s3659 + $0x70] sm:$0xff]
      %v3675 = vld [vmem:[%s3659 + $0x78] sm:$0xff]
      %s3676 = scalar_lea.vmem %s12, 2
      %v3677 = vld [vmem:[%s3676] sm:$0x3]
      %v3679 = vlaneseq
      %v3680 = vshrl.u32 %v3679, 7
      %v3681 = vsub.s32 0, %v3680
      %v3682 = vrot.slane %v3677, %v3681
      %v3683 = vlaneseq
      %v3684 = vshrl.u32 %v3683, 7
      %v3685 = vsub.s32 1, %v3684
      %v3686 = vrot.slane %v3677, %v3685
      %v3705 = vunpack.c.l.b16 %v3660
      %v3706 = vunpack.c.h.b16 %v3660
      %v3707 = vunpack.c.l.b16 %v3661
      %v3708 = vunpack.c.h.b16 %v3661
      %v3709 = vunpack.c.l.b16 %v3662
      %v3710 = vunpack.c.h.b16 %v3662
      %v3711 = vunpack.c.l.b16 %v3663
      %v3712 = vunpack.c.h.b16 %v3663
      %v3713 = vunpack.c.l.b16 %v3664
      %v3714 = vunpack.c.h.b16 %v3664
      %v3715 = vunpack.c.l.b16 %v3665
      %v3716 = vunpack.c.h.b16 %v3665
      %v3717 = vunpack.c.l.b16 %v3666
      %v3718 = vunpack.c.h.b16 %v3666
      %v3719 = vunpack.c.l.b16 %v3667
      %v3720 = vunpack.c.h.b16 %v3667
      %v3721 = vunpack.c.l.b16 %v3668
      %v3722 = vunpack.c.h.b16 %v3668
      %v3723 = vunpack.c.l.b16 %v3669
      %v3724 = vunpack.c.h.b16 %v3669
      %v3725 = vunpack.c.l.b16 %v3670
      %v3726 = vunpack.c.h.b16 %v3670
      %v3727 = vunpack.c.l.b16 %v3671
      %v3728 = vunpack.c.h.b16 %v3671
      %v3729 = vunpack.c.l.b16 %v3672
      %v3730 = vunpack.c.h.b16 %v3672
      %v3731 = vunpack.c.l.b16 %v3673
      %v3732 = vunpack.c.h.b16 %v3673
      %v3733 = vunpack.c.l.b16 %v3674
      %v3734 = vunpack.c.h.b16 %v3674
      %v3735 = vunpack.c.l.b16 %v3675
      %v3736 = vunpack.c.h.b16 %v3675
      %v3737 = vpack.c.b16 %v3707, %v3705
      %v3738 = vpack.c.b16 %v3708, %v3706
      %v3739 = vpack.c.b16 %v3711, %v3709
      %v3740 = vpack.c.b16 %v3712, %v3710
      %v3741 = vpack.c.b16 %v3715, %v3713
      %v3742 = vpack.c.b16 %v3716, %v3714
      %v3743 = vpack.c.b16 %v3719, %v3717
      %v3744 = vpack.c.b16 %v3720, %v3718
      %v3745 = vpack.c.b16 %v3723, %v3721
      %v3746 = vpack.c.b16 %v3724, %v3722
      %v3747 = vpack.c.b16 %v3727, %v3725
      %v3748 = vpack.c.b16 %v3728, %v3726
      %v3749 = vpack.c.b16 %v3731, %v3729
      %v3750 = vpack.c.b16 %v3732, %v3730
      %v3751 = vpack.c.b16 %v3735, %v3733
      %v3752 = vpack.c.b16 %v3736, %v3734
      %3769 = vmatprep.subr.bf16.mxu0 %v3738
      %3770 = vmatpush1.bf16.msra.mxu0 %v3737
      %3771 = vmatprep.subr.bf16.mxu0 %v3740
      %3772 = vmatpush1.bf16.msra.mxu0 %v3739
      %3773 = vmatprep.subr.bf16.mxu0 %v3742
      %3774 = vmatpush1.bf16.msra.mxu0 %v3741
      %3775 = vmatprep.subr.bf16.mxu0 %v3744
      %3776 = vmatpush1.bf16.msra.mxu0 %v3743
      %3777 = vmatprep.subr.bf16.mxu0 %v3746
      %3778 = vmatpush1.bf16.msra.mxu0 %v3745
      %3779 = vmatprep.subr.bf16.mxu0 %v3748
      %3780 = vmatpush1.bf16.msra.mxu0 %v3747
      %3781 = vmatprep.subr.bf16.mxu0 %v3750
      %3782 = vmatpush1.bf16.msra.mxu0 %v3749
      %3783 = vmatprep.subr.bf16.mxu0 %v3752
      %3784 = vmatpush1.bf16.msra.mxu0 %v3751
      %3785 = vmatprep.subr.bf16.mxu0 0
      %3786 = vmatpush1.bf16.msra.mxu0 0
      %3787 = vmatprep.subr.bf16.mxu0 0
      %3788 = vmatpush1.bf16.msra.mxu0 0
      %3789 = vmatprep.subr.bf16.mxu0 0
      %3790 = vmatpush1.bf16.msra.mxu0 0
      %3791 = vmatprep.subr.bf16.mxu0 0
      %3792 = vmatpush1.bf16.msra.mxu0 0
      %3793 = vmatprep.subr.bf16.mxu0 0
      %3794 = vmatpush1.bf16.msra.mxu0 0
      %3795 = vmatprep.subr.bf16.mxu0 0
      %3796 = vmatpush1.bf16.msra.mxu0 0
      %3797 = vmatprep.subr.bf16.mxu0 0
      %3798 = vmatpush1.bf16.msra.mxu0 0
      %3799 = vmatprep.subr.bf16.mxu0 0
      %3800 = vmatpush1.bf16.msra.mxu0 0
      %3801 = vmatprep.mubr.bf16.mxu0 0
      %3802 = vmatmul.mubr.bf16.gmra.mrb[0].mxu0 %v3657
      %v3803 = vpop.f32.mrb[0].mxu0
      %v3804 = vadd.f32 %v3682, %v3803
      %v3805 = vpop.f32.mrb[0].mxu0
      %v3806 = vadd.f32 %v3686, %v3805
      %v3807 = vpop.f32.mrb[0].mxu0
      %v3808 = vadd.f32 %v3682, %v3807
      %v3809 = vpop.f32.mrb[0].mxu0
      %v3810 = vadd.f32 %v3686, %v3809
      %3811 = vmatprep.mubr.bf16.mxu0 0
      %3812 = vmatmul.mubr.bf16.gmra.mrb[0].mxu0 %v3658
      %v3813 = vpop.f32.mrb[0].mxu0
      %v3814 = vadd.f32 %v3682, %v3813
      %v3815 = vpop.f32.mrb[0].mxu0
      %v3816 = vadd.f32 %v3686, %v3815
      %v3817 = vpop.f32.mrb[0].mxu0
      %v3818 = vpop.f32.mrb[0].mxu0
      %3819 = vdwg.mxu0
      %v3820 = vmul.f32 %v3804, %v3804
      %v3821 = vmul.f32 %v3806, %v3806
      %v3822 = vmul.f32 %v3808, %v3808
      %v3823 = vmul.f32 %v3810, %v3810
      %v3824 = vmul.f32 %v3814, %v3814
      %v3825 = vmul.f32 %v3816, %v3816
      %v3826 = vmul.f32 %v3804, %v3820
      %v3827 = vmul.f32 %v3806, %v3821
      %v3828 = vmul.f32 %v3808, %v3822
      %v3829 = vmul.f32 %v3810, %v3823
      %v3830 = vmul.f32 %v3814, %v3824
      %v3831 = vmul.f32 %v3816, %v3825
      %v3832 = vmul.f32 %v3826, 0.044715
      %v3833 = vmul.f32 %v3827, 0.044715
      %v3834 = vmul.f32 %v3828, 0.044715
      %v3835 = vmul.f32 %v3829, 0.044715
      %v3836 = vmul.f32 %v3830, 0.044715
      %v3837 = vmul.f32 %v3831, 0.044715
      %v3838 = vadd.f32 %v3804, %v3832
      %v3839 = vadd.f32 %v3806, %v3833
      %v3840 = vadd.f32 %v3808, %v3834
      %v3841 = vadd.f32 %v3810, %v3835
      %v3842 = vadd.f32 %v3814, %v3836
      %v3843 = vadd.f32 %v3816, %v3837
      %v3844 = vmul.f32 %v3838, 0.7978846
      %v3845 = vmul.f32 %v3839, 0.7978846
      %v3846 = vmul.f32 %v3840, 0.7978846
      %v3847 = vmul.f32 %v3841, 0.7978846
      %v3848 = vmul.f32 %v3842, 0.7978846
      %v3849 = vmul.f32 %v3843, 0.7978846
      %v3850 = vtanh.pop %v3844
      %v3851 = vtanh.pop %v3845
      %v3852 = vtanh.pop %v3846
      %v3853 = vtanh.pop %v3847
      %v3854 = vtanh.pop %v3848
      %v3855 = vtanh.pop %v3849
      %v3856 = vadd.f32 %v3850, 1.0
      %v3857 = vadd.f32 %v3851, 1.0
      %v3858 = vadd.f32 %v3852, 1.0
      %v3859 = vadd.f32 %v3853, 1.0
      %v3860 = vadd.f32 %v3854, 1.0
      %v3861 = vadd.f32 %v3855, 1.0
      %v3862 = vmul.f32 %v3856, 0.5
      %v3863 = vmul.f32 %v3857, 0.5
      %v3864 = vmul.f32 %v3858, 0.5
      %v3865 = vmul.f32 %v3859, 0.5
      %v3866 = vmul.f32 %v3860, 0.5
      %v3867 = vmul.f32 %v3861, 0.5
      %v3868 = vmul.f32 %v3804, %v3862
      %v3869 = vmul.f32 %v3806, %v3863
      %v3870 = vmul.f32 %v3808, %v3864
      %v3871 = vmul.f32 %v3810, %v3865
      %v3872 = vmul.f32 %v3814, %v3866
      %v3873 = vmul.f32 %v3816, %v3867
      %v3874 = vpack.c.bf16 %v3870, %v3868
      %v3875 = vpack.c.bf16 %v3871, %v3869
      %v3876 = vpack.c.bf16 %v3872, %v3872
      %v3877 = vpack.c.bf16 %v3873, %v3873
      %s3878 = scalar_lea.vmem %s13, 128
      %v3879 = vld [vmem:[%s3878] sm:$0xf]
      %v3880 = vld [vmem:[%s3878 + $0x4] sm:$0xf]
      %v3881 = vld [vmem:[%s3878 + $0x8] sm:$0xf]
      %v3882 = vld [vmem:[%s3878 + $0xc] sm:$0xf]
      %v3883 = vld [vmem:[%s3878 + $0x10] sm:$0xf]
      %v3884 = vld [vmem:[%s3878 + $0x14] sm:$0xf]
      %v3885 = vld [vmem:[%s3878 + $0x18] sm:$0xf]
      %v3886 = vld [vmem:[%s3878 + $0x1c] sm:$0xf]
      %v3887 = vld [vmem:[%s3878 + $0x20] sm:$0xf]
      %v3888 = vld [vmem:[%s3878 + $0x24] sm:$0xf]
      %v3889 = vld [vmem:[%s3878 + $0x28] sm:$0xf]
      %v3890 = vld [vmem:[%s3878 + $0x2c] sm:$0xf]
      %v3891 = vld [vmem:[%s3878 + $0x30] sm:$0xf]
      %v3892 = vld [vmem:[%s3878 + $0x34] sm:$0xf]
      %v3893 = vld [vmem:[%s3878 + $0x38] sm:$0xf]
      %v3894 = vld [vmem:[%s3878 + $0x3c] sm:$0xf]
      %v3895 = vld [vmem:[%s3878 + $0x40] sm:$0xf]
      %v3896 = vld [vmem:[%s3878 + $0x44] sm:$0xf]
      %v3897 = vld [vmem:[%s3878 + $0x48] sm:$0xf]
      %v3898 = vld [vmem:[%s3878 + $0x4c] sm:$0xf]
      %v3899 = vld [vmem:[%s3878 + $0x50] sm:$0xf]
      %v3900 = vld [vmem:[%s3878 + $0x54] sm:$0xf]
      %v3901 = vld [vmem:[%s3878 + $0x58] sm:$0xf]
      %v3902 = vld [vmem:[%s3878 + $0x5c] sm:$0xf]
      %v3903 = vld [vmem:[%s3878 + $0x60] sm:$0xf]
      %v3904 = vld [vmem:[%s3878 + $0x64] sm:$0xf]
      %v3905 = vld [vmem:[%s3878 + $0x68] sm:$0xf]
      %v3906 = vld [vmem:[%s3878 + $0x6c] sm:$0xf]
      %v3907 = vld [vmem:[%s3878 + $0x70] sm:$0xf]
      %v3908 = vld [vmem:[%s3878 + $0x74] sm:$0xf]
      %v3909 = vld [vmem:[%s3878 + $0x78] sm:$0xf]
      %v3910 = vld [vmem:[%s3878 + $0x7c] sm:$0xf]
      %v3943 = vunpack.c.l.b16 %v3879
      %v3944 = vunpack.c.l.b16 %v3880
      %v3945 = vunpack.c.l.b16 %v3881
      %v3946 = vunpack.c.l.b16 %v3882
      %v3947 = vunpack.c.l.b16 %v3883
      %v3948 = vunpack.c.l.b16 %v3884
      %v3949 = vunpack.c.l.b16 %v3885
      %v3950 = vunpack.c.l.b16 %v3886
      %v3951 = vunpack.c.l.b16 %v3887
      %v3952 = vunpack.c.l.b16 %v3888
      %v3953 = vunpack.c.l.b16 %v3889
      %v3954 = vunpack.c.l.b16 %v3890
      %v3955 = vunpack.c.l.b16 %v3891
      %v3956 = vunpack.c.l.b16 %v3892
      %v3957 = vunpack.c.l.b16 %v3893
      %v3958 = vunpack.c.l.b16 %v3894
      %v3959 = vunpack.c.l.b16 %v3895
      %v3960 = vunpack.c.l.b16 %v3896
      %v3961 = vunpack.c.l.b16 %v3897
      %v3962 = vunpack.c.l.b16 %v3898
      %v3963 = vunpack.c.l.b16 %v3899
      %v3964 = vunpack.c.l.b16 %v3900
      %v3965 = vunpack.c.l.b16 %v3901
      %v3966 = vunpack.c.l.b16 %v3902
      %v3967 = vunpack.c.l.b16 %v3903
      %v3968 = vunpack.c.l.b16 %v3904
      %v3969 = vunpack.c.l.b16 %v3905
      %v3970 = vunpack.c.l.b16 %v3906
      %v3971 = vunpack.c.l.b16 %v3907
      %v3972 = vunpack.c.l.b16 %v3908
      %v3973 = vunpack.c.l.b16 %v3909
      %v3974 = vunpack.c.l.b16 %v3910
      %v3975 = vpack.c.b16 %v3944, %v3943
      %v3976 = vpack.c.b16 %v3946, %v3945
      %v3977 = vpack.c.b16 %v3948, %v3947
      %v3978 = vpack.c.b16 %v3950, %v3949
      %v3979 = vpack.c.b16 %v3952, %v3951
      %v3980 = vpack.c.b16 %v3954, %v3953
      %v3981 = vpack.c.b16 %v3956, %v3955
      %v3982 = vpack.c.b16 %v3958, %v3957
      %v3983 = vpack.c.b16 %v3960, %v3959
      %v3984 = vpack.c.b16 %v3962, %v3961
      %v3985 = vpack.c.b16 %v3964, %v3963
      %v3986 = vpack.c.b16 %v3966, %v3965
      %v3987 = vpack.c.b16 %v3968, %v3967
      %v3988 = vpack.c.b16 %v3970, %v3969
      %v3989 = vpack.c.b16 %v3972, %v3971
      %v3990 = vpack.c.b16 %v3974, %v3973
      %4007 = vmatprep.subr.bf16.mxu0 0
      %4008 = vmatpush1.bf16.msra.mxu0 %v3975
      %4009 = vmatprep.subr.bf16.mxu0 0
      %4010 = vmatpush1.bf16.msra.mxu0 %v3976
      %4011 = vmatprep.subr.bf16.mxu0 0
      %4012 = vmatpush1.bf16.msra.mxu0 %v3977
      %4013 = vmatprep.subr.bf16.mxu0 0
      %4014 = vmatpush1.bf16.msra.mxu0 %v3978
      %4015 = vmatprep.subr.bf16.mxu0 0
      %4016 = vmatpush1.bf16.msra.mxu0 %v3979
      %4017 = vmatprep.subr.bf16.mxu0 0
      %4018 = vmatpush1.bf16.msra.mxu0 %v3980
      %4019 = vmatprep.subr.bf16.mxu0 0
      %4020 = vmatpush1.bf16.msra.mxu0 %v3981
      %4021 = vmatprep.subr.bf16.mxu0 0
      %4022 = vmatpush1.bf16.msra.mxu0 %v3982
      %4023 = vmatprep.subr.bf16.mxu0 0
      %4024 = vmatpush1.bf16.msra.mxu0 %v3983
      %4025 = vmatprep.subr.bf16.mxu0 0
      %4026 = vmatpush1.bf16.msra.mxu0 %v3984
      %4027 = vmatprep.subr.bf16.mxu0 0
      %4028 = vmatpush1.bf16.msra.mxu0 %v3985
      %4029 = vmatprep.subr.bf16.mxu0 0
      %4030 = vmatpush1.bf16.msra.mxu0 %v3986
      %4031 = vmatprep.subr.bf16.mxu0 0
      %4032 = vmatpush1.bf16.msra.mxu0 %v3987
      %4033 = vmatprep.subr.bf16.mxu0 0
      %4034 = vmatpush1.bf16.msra.mxu0 %v3988
      %4035 = vmatprep.subr.bf16.mxu0 0
      %4036 = vmatpush1.bf16.msra.mxu0 %v3989
      %4037 = vmatprep.subr.bf16.mxu0 0
      %4038 = vmatpush1.bf16.msra.mxu0 %v3990
      %4039 = vmatprep.mubr.bf16.mxu0 %v3875
      %4040 = vmatmul.mubr.bf16.gmra.mrb[0].mxu0 %v3874
      %v4041 = vpop.f32.mrb[0].mxu0
      %v4042 = vadd.f32 0.0, %v4041
      %v4043 = vpop.f32.mrb[0].mxu0
      %v4044 = vpop.f32.mrb[0].mxu0
      %v4045 = vpop.f32.mrb[0].mxu0
      %4046 = vmatprep.mubr.bf16.mxu0 %v3877
      %4047 = vmatmul.mubr.bf16.gmra.mrb[0].mxu0 %v3876
      %v4048 = vpop.f32.mrb[0].mxu0
      %v4049 = vpop.f32.mrb[0].mxu0
      %v4050 = vpop.f32.mrb[0].mxu0
      %v4051 = vpop.f32.mrb[0].mxu0
      %4052 = vdwg.mxu0
      %v4053 = vadd.f32 %v3599, %v4042
      %s4054 = scalar_lea.vmem %s14, 1
      %v4055 = vld [vmem:[%s4054] sm:$0x1]
      %v4057 = vlaneseq
      %v4058 = vshrl.u32 %v4057, 7
      %v4059 = vsub.s32 0, %v4058
      %v4060 = vrot.slane %v4055, %v4059
      %v4062 = vadd.f32 %v4053, %v4060
      %v4063 = vld [vmem:[%s15] sm:$0x1]
      %v4064 = vld [vmem:[%s16] sm:$0x1]
      %4065 = vadd.xlane.f32.xlu0 %v4062
      %v4066 = vpop.xlane.xlu0 %4065
      %v4067 = vmul.f32 %v4066, %v813
      %v4068 = vsub.f32 %v4062, %v4067
      %v4069 = vmul.f32 %v4068, %v4068
      %4070 = vadd.xlane.f32.xlu0 %v4069
      %v4071 = vpop.xlane.xlu0 %4070
      %v4072 = vmul.f32 %v4071, %v813
      %v4073 = vadd.f32 %v4072, 1e-06
      %v4074 = vrsqrt.pop %v4073
      %v4075 = vmul.f32 %v4068, %v4074
      %v4077 = vlaneseq
      %v4078 = vshrl.u32 %v4077, 7
      %v4079 = vsub.s32 0, %v4078
      %v4080 = vrot.slane %v4063, %v4079
      %v4082 = vmul.f32 %v4075, %v4080
      %v4084 = vlaneseq
      %v4085 = vshrl.u32 %v4084, 7
      %v4086 = vsub.s32 0, %v4085
      %v4087 = vrot.slane %v4064, %v4086
      %v4089 = vadd.f32 %v4082, %v4087
      %v4090 = vpack.c.bf16 %v4089, %v4089
      %v4091 = vld [vmem:[%s17] sm:$0xf]
      %v4092 = vld [vmem:[%s17 + $0x4] sm:$0xf]
      %v4093 = vld [vmem:[%s17 + $0x8] sm:$0xf]
      %v4094 = vld [vmem:[%s17 + $0xc] sm:$0xf]
      %v4095 = vld [vmem:[%s17 + $0x10] sm:$0xf]
      %v4096 = vld [vmem:[%s17 + $0x14] sm:$0xf]
      %v4097 = vld [vmem:[%s17 + $0x18] sm:$0xf]
      %v4098 = vld [vmem:[%s17 + $0x1c] sm:$0xf]
      %v4099 = vld [vmem:[%s17 + $0x20] sm:$0xf]
      %v4100 = vld [vmem:[%s17 + $0x24] sm:$0xf]
      %v4101 = vld [vmem:[%s17 + $0x28] sm:$0xf]
      %v4102 = vld [vmem:[%s17 + $0x2c] sm:$0xf]
      %v4103 = vld [vmem:[%s17 + $0x30] sm:$0xf]
      %v4104 = vld [vmem:[%s17 + $0x34] sm:$0xf]
      %v4105 = vld [vmem:[%s17 + $0x38] sm:$0xf]
      %v4106 = vld [vmem:[%s17 + $0x3c] sm:$0xf]
      %v4107 = vld [vmem:[%s18] sm:$0x1]
      %v4109 = vlaneseq
      %v4110 = vshrl.u32 %v4109, 7
      %v4111 = vsub.s32 0, %v4110
      %v4112 = vrot.slane %v4107, %v4111
      %v4130 = vunpack.c.l.b16 %v4091
      %v4131 = vunpack.c.l.b16 %v4092
      %v4132 = vunpack.c.l.b16 %v4093
      %v4133 = vunpack.c.l.b16 %v4094
      %v4134 = vunpack.c.l.b16 %v4095
      %v4135 = vunpack.c.l.b16 %v4096
      %v4136 = vunpack.c.l.b16 %v4097
      %v4137 = vunpack.c.l.b16 %v4098
      %v4138 = vunpack.c.l.b16 %v4099
      %v4139 = vunpack.c.l.b16 %v4100
      %v4140 = vunpack.c.l.b16 %v4101
      %v4141 = vunpack.c.l.b16 %v4102
      %v4142 = vunpack.c.l.b16 %v4103
      %v4143 = vunpack.c.l.b16 %v4104
      %v4144 = vunpack.c.l.b16 %v4105
      %v4145 = vunpack.c.l.b16 %v4106
      %v4146 = vpack.c.b16 %v4131, %v4130
      %v4147 = vpack.c.b16 %v4133, %v4132
      %v4148 = vpack.c.b16 %v4135, %v4134
      %v4149 = vpack.c.b16 %v4137, %v4136
      %v4150 = vpack.c.b16 %v4139, %v4138
      %v4151 = vpack.c.b16 %v4141, %v4140
      %v4152 = vpack.c.b16 %v4143, %v4142
      %v4153 = vpack.c.b16 %v4145, %v4144
      %4162 = vmatprep.subr.bf16.mxu0 0
      %4163 = vmatpush1.bf16.msra.mxu0 %v4146
      %4164 = vmatprep.subr.bf16.mxu0 0
      %4165 = vmatpush1.bf16.msra.mxu0 %v4147
      %4166 = vmatprep.subr.bf16.mxu0 0
      %4167 = vmatpush1.bf16.msra.mxu0 %v4148
      %4168 = vmatprep.subr.bf16.mxu0 0
      %4169 = vmatpush1.bf16.msra.mxu0 %v4149
      %4170 = vmatprep.subr.bf16.mxu0 0
      %4171 = vmatpush1.bf16.msra.mxu0 %v4150
      %4172 = vmatprep.subr.bf16.mxu0 0
      %4173 = vmatpush1.bf16.msra.mxu0 %v4151
      %4174 = vmatprep.subr.bf16.mxu0 0
      %4175 = vmatpush1.bf16.msra.mxu0 %v4152
      %4176 = vmatprep.subr.bf16.mxu0 0
      %4177 = vmatpush1.bf16.msra.mxu0 %v4153
      %4178 = vmatprep.subr.bf16.mxu0 0
      %4179 = vmatpush1.bf16.msra.mxu0 0
      %4180 = vmatprep.subr.bf16.mxu0 0
      %4181 = vmatpush1.bf16.msra.mxu0 0
      %4182 = vmatprep.subr.bf16.mxu0 0
      %4183 = vmatpush1.bf16.msra.mxu0 0
      %4184 = vmatprep.subr.bf16.mxu0 0
      %4185 = vmatpush1.bf16.msra.mxu0 0
      %4186 = vmatprep.subr.bf16.mxu0 0
      %4187 = vmatpush1.bf16.msra.mxu0 0
      %4188 = vmatprep.subr.bf16.mxu0 0
      %4189 = vmatpush1.bf16.msra.mxu0 0
      %4190 = vmatprep.subr.bf16.mxu0 0
      %4191 = vmatpush1.bf16.msra.mxu0 0
      %4192 = vmatprep.subr.bf16.mxu0 0
      %4193 = vmatpush1.bf16.msra.mxu0 0
      %4194 = vmatprep.mubr.bf16.mxu0 0
      %4195 = vmatmul.mubr.bf16.gmra.mrb[0].mxu0 %v4090
      %v4196 = vpop.f32.mrb[0].mxu0
      %v4197 = vadd.f32 %v4112, %v4196
      %v4198 = vpop.f32.mrb[0].mxu0
      %v4199 = vpop.f32.mrb[0].mxu0
      %v4200 = vpop.f32.mrb[0].mxu0
      %4201 = vdwg.mxu0
      %4202 = vst [vmem:[%s600] sm:$0xff] %v4197
      %p4203 = scmp.lt.s32.totalorder %s30, 1
      %s4204 = scalar_select %p4203, %s30, 1
      %s4205 = smul.addr %s4204, 8
      %s4206 = scalar_lea.vmem %s19, %s4205
      // Predicated region
      $region97: #{forward.1} parent=95 // pred_check
        %p4207 = pneg %p452
      $region98: #{forward.1} parent=95 // pred_check_branch
        %4209 = sbr.rel (%p4207) target = $region100
      $region99: #{forward.1} parent=95 // pred_region
        _
      $region100: #{forward.1} parent=95 // pred_fallthru
        _
    $region96: #{forward.1} parent=5 // pred_fallthru
      _
    %p4210 = scmp.le.s32.totalorder 2, %s25
    // Predicated region
    $region101: #{forward.1} parent=5 // pred_check
      %p4211 = pneg %p4210
    $region102: #{forward.1} parent=5 // pred_check_branch
      %4213 = sbr.rel (%p4211) target = $region104
    $region103: #{forward.1} parent=5 // pred_region
      %s4214 = ssub.s32 %s25, 2
      // Predicated region
      $region105: #{forward.1} parent=103 // pred_check
        %p4215 = pneg %p458
      $region106: #{forward.1} parent=103 // pred_check_branch
        %4217 = sbr.rel (%p4215) target = $region108
      $region107: #{forward.1} parent=103 // pred_region
        %p4218 = scmp.lt.s32.totalorder %s31, 1
        %s4219 = scalar_select %p4218, %s31, 1
        %s4220 = smul.addr %s4219, 8
        %s4221 = scalar_lea.vmem %s19, %s4220
      $region108: #{forward.1} parent=103 // pred_fallthru
        _
    $region104: #{forward.1} parent=5 // pred_fallthru
      _
  $region6: #{forward.1} parent=0 // loop_footer
    %s29 = sadd.s32 1, %s25
  $region7: #{forward.1} parent=0 // loop_footer_branch
    %24 = sbr.rel target = $region3
  $region8: #{forward.1} parent=0 // loop_exit
    _

</llo_original>
